<compile_context>
chip_gen: v7x
topology: tpu7x:2x2x1
jax: 0.10.0
libtpu: 0.0.40
codegen_flags: <defaults>
</compile_context>

<pallas_src>
import math
from functools import partial

import jax
import jax.numpy as jnp
from jax.experimental import pallas as pl
from jax.experimental.pallas import tpu as pltpu


# ----------------------------- Pallas kernel -------------------------------

def _make_encoder_kernel(B, S, D, h, t):
    """Full Encoder forward (t fused iterations), batch fused into one step."""
    d_k = D // h
    scale = 1.0 / math.sqrt(d_k)

    def layer_norm(v, a, b, eps=1e-6):
        # Matches reference LayerNorm: unbiased std (N-1), eps added to std.
        mean = jnp.mean(v, axis=-1, keepdims=True)
        diff = v - mean
        var = jnp.sum(diff * diff, axis=-1, keepdims=True) * (1.0 / (v.shape[-1] - 1))
        return a * diff / (jnp.sqrt(var) + eps) + b

    def kernel(x_ref,
               wqkv_ref, bqkv_ref, wo_ref, bo_ref,
               wt_ref, bt_ref, a1_ref, b1_ref,
               wr_ref, br_ref, a2_ref, b2_ref,
               o_ref):

        def step(x):                       # x: (B*S, D) residual stream
            # ---- fused QKV projection: one MXU matmul with N = 3*D lanes ----
            qkv = jnp.dot(x, wqkv_ref[...],
                          preferred_element_type=jnp.float32) + bqkv_ref[...]

            # ---- multi-head attention: value-level head slices, no scratch --
            head_out = []
            for i in range(h):
                lo = i * d_k
                qi = qkv[:, lo:lo + d_k].reshape(B, S, d_k)
                ki = qkv[:, D + lo:D + lo + d_k].reshape(B, S, d_k)
                vi = qkv[:, 2 * D + lo:2 * D + lo + d_k].reshape(B, S, d_k)
                s = jnp.einsum('bqe,bke->bqk', qi, ki,
                               preferred_element_type=jnp.float32) * scale
                s = s - jnp.max(s, axis=-1, keepdims=True)
                p = jnp.exp(s)
                p = p / jnp.sum(p, axis=-1, keepdims=True)       # exact softmax
                oi = jnp.einsum('bqk,bke->bqe', p, vi,
                                preferred_element_type=jnp.float32)
                head_out.append(oi.reshape(B * S, d_k))
            attn = jnp.concatenate(head_out, axis=-1)            # (B*S, D)

            mh = jnp.dot(attn, wo_ref[...],
                         preferred_element_type=jnp.float32) + bo_ref[...]

            # ---- residual / norms / transition / reshape --------------------
            x1 = x + mh
            norm = layer_norm(x1, a1_ref[...], b1_ref[...])
            tran = jnp.dot(norm, wt_ref[...],
                           preferred_element_type=jnp.float32) + bt_ref[...]
            tran = tran + norm
            x2 = layer_norm(tran, a1_ref[...], b1_ref[...])      # reference reuses layer_norm1
            x3 = jnp.dot(x2, wr_ref[...],
                         preferred_element_type=jnp.float32) + br_ref[...]
            return layer_norm(x3, a2_ref[...], b2_ref[...])

        x = x_ref[...]
        if t == 1:
            y = step(x)
        else:
            # For t > 1 the reference is only shape-consistent when
            # out_channels == d_model, so the carry shape is invariant.
            y = jax.lax.fori_loop(0, t, lambda _, xx: step(xx), x, unroll=True)
        o_ref[...] = y

    return kernel


# ------------------------------ JAX wrappers --------------------------------

def positional_encoding_row(pos, d_model):
    # Reproduces the reference: it indexes pe[:, x.size(1)] (a SINGLE row at
    # index S), broadcast-added to every position.
    div_term = jnp.exp(jnp.arange(0, d_model, 2, dtype=jnp.float32)
                       * -(math.log(10000.0) / d_model))
    row = jnp.zeros((d_model,), jnp.float32)
    row = row.at[0::2].set(jnp.sin(pos * div_term))
    row = row.at[1::2].set(jnp.cos(pos * div_term))
    return row


@partial(jax.jit, static_argnames=("t", "h"))
def encoder_forward(x, params, *, t, h):
    B, S, D = x.shape
    Dout = params["wr"].shape[0]
    assert D % h == 0
    if t > 1:
        assert Dout == D  # carry shape invariance (matches reference constraint)

    # PositionalEncoding (dropout p=0 -> identity).
    x = x + positional_encoding_row(S, D)[None, None, :]
    x2d = x.reshape(B * S, D)

    # One-time layout ops (hoisted / traced once under jit):
    #   nn.Linear weight (out,in) -> (in,out); 1-D params -> (1, dim);
    #   q/k/v weights + biases fused into a single (D, 3D) projection.
    wqkv = jnp.concatenate([params["wq"].T, params["wk"].T, params["wv"].T], axis=1)
    bqkv = jnp.concatenate([params["bq"], params["bk"], params["bv"]])[None, :]
    ops = (
        x2d,
        wqkv, bqkv,
        params["wo"].T, params["bo"][None, :],
        params["wt"].T, params["bt"][None, :],
        params["a1"][None, :], params["b1"][None, :],
        params["wr"].T, params["br"][None, :],
        params["a2"][None, :], params["b2"][None, :],
    )

    # No grid: the whole problem is a few KiB -- one step avoids per-grid-step
    # fixed cost and buffer churn.  Everything lives in VMEM for the call.
    vmem_spec = pl.BlockSpec(memory_space=pltpu.MemorySpace.VMEM)
    out2d = pl.pallas_call(
        _make_encoder_kernel(B, S, D, h, t),
        out_shape=jax.ShapeDtypeStruct((B * S, Dout), jnp.float32),
        in_specs=[vmem_spec] * len(ops),
        out_specs=vmem_spec,
        compiler_params=pltpu.CompilerParams(
            # Safe on v7x's 64 MiB physical VMEM as well.
            vmem_limit_bytes=32 * 1024 * 1024,
        ),
    )(*ops)
    return out2d.reshape(B, S, Dout)


# --------------------------- parameter construction -------------------------

def init_linear(key, out_dim, in_dim):
    # initialize_parameters: normal(0,1), rows L2-normalized, bias = 0.
    w = jax.random.normal(key, (out_dim, in_dim), dtype=jnp.float32)
    w = w / jnp.sqrt(jnp.sum(w ** 2, axis=1, keepdims=True))
    b = jnp.zeros((out_dim,), jnp.float32)
    return w, b


def init_encoder_params(key, d_model, in_channels, imm_channels, out_channels):
    keys = jax.random.split(key, 6)
    wq, bq = init_linear(keys[0], d_model, d_model)
    wk, bk = init_linear(keys[1], d_model, d_model)
    wv, bv = init_linear(keys[2], d_model, d_model)
    wo, bo = init_linear(keys[3], d_model, d_model)
    wt, bt = init_linear(keys[4], imm_channels, in_channels)
    wr, br = init_linear(keys[5], out_channels, imm_channels)
    return dict(
        wq=wq, bq=bq, wk=wk, bk=bk, wv=wv, bv=bv, wo=wo, bo=bo,
        wt=wt, bt=bt,
        a1=jnp.ones((d_model,), jnp.float32), b1=jnp.zeros((d_model,), jnp.float32),
        wr=wr, br=br,
        a2=jnp.ones((out_channels,), jnp.float32), b2=jnp.zeros((out_channels,), jnp.float32),
    )


# ---------------------------------- main ------------------------------------

if __name__ == "__main__":
    # The reference forward is only shape-consistent when
    # in_channels == imm_channels == d_model and (for t > 1) out_channels == d_model.
    B, S, d_model, h, t = 2, 8, 32, 4, 2
    in_channels = imm_channels = out_channels = d_model

    key = jax.random.PRNGKey(0)
    k_x, k_p = jax.random.split(key)
    x = jax.random.normal(k_x, (B, S, d_model), dtype=jnp.float32)
    params = init_encoder_params(k_p, d_model, in_channels, imm_channels, out_channels)

    out = encoder_forward(x, params, t=t, h=h)
    jax.block_until_ready(out)
    assert out.shape == (B, S, out_channels)
    print("KERNEL_OK")
</pallas_src>

<mosaic_0001>
module attributes {stable_mosaic.version = 11 : i64} {
  func.func @kernel(%arg0: memref<16x32xf32, #tpu.memory_space<vmem>>, %arg1: memref<32x96xf32, #tpu.memory_space<vmem>>, %arg2: memref<1x96xf32, #tpu.memory_space<vmem>>, %arg3: memref<32x32xf32, #tpu.memory_space<vmem>>, %arg4: memref<1x32xf32, #tpu.memory_space<vmem>>, %arg5: memref<32x32xf32, #tpu.memory_space<vmem>>, %arg6: memref<1x32xf32, #tpu.memory_space<vmem>>, %arg7: memref<1x32xf32, #tpu.memory_space<vmem>>, %arg8: memref<1x32xf32, #tpu.memory_space<vmem>>, %arg9: memref<32x32xf32, #tpu.memory_space<vmem>>, %arg10: memref<1x32xf32, #tpu.memory_space<vmem>>, %arg11: memref<1x32xf32, #tpu.memory_space<vmem>>, %arg12: memref<1x32xf32, #tpu.memory_space<vmem>>, %arg13: memref<16x32xf32, #tpu.memory_space<vmem>>) attributes {dimension_semantics = [], scalar_prefetch = 0 : i64, scratch_operands = 0 : i64, tpu.core_type = #tpu.core_type<tc>} {
    %c0 = arith.constant 0 : index
    %c0_0 = arith.constant 0 : index
    %0 = vector.load %arg0[%c0, %c0_0] : memref<16x32xf32, #tpu.memory_space<vmem>>, vector<16x32xf32>
    %c0_i32 = arith.constant 0 : i32
    %c0_1 = arith.constant 0 : index
    %c0_2 = arith.constant 0 : index
    %1 = vector.load %arg1[%c0_1, %c0_2] : memref<32x96xf32, #tpu.memory_space<vmem>>, vector<32x96xf32>
    %cst = arith.constant dense<0.000000e+00> : vector<16x96xf32>
    %2 = tpu.matmul %0, %1, %cst {dimension_numbers = #tpu.dot_dimension_numbers<[1], [0], [0], [1], [0, 0, 1, 1], [], []>} : vector<16x32xf32>, vector<32x96xf32>, vector<16x96xf32> -> vector<16x96xf32>
    %c0_3 = arith.constant 0 : index
    %c0_4 = arith.constant 0 : index
    %3 = vector.load %arg2[%c0_3, %c0_4] : memref<1x96xf32, #tpu.memory_space<vmem>>, vector<1x96xf32>
    %4 = vector.broadcast %3 : vector<1x96xf32> to vector<16x96xf32>
    %5 = arith.addf %2, %4 : vector<16x96xf32>
    %6 = vector.extract_strided_slice %5 {offsets = [0, 0], sizes = [16, 8], strides = [1, 1]} : vector<16x96xf32> to vector<16x8xf32>
    %7 = vector.shape_cast %6 : vector<16x8xf32> to vector<2x8x8xf32>
    %8 = vector.extract_strided_slice %5 {offsets = [0, 32], sizes = [16, 8], strides = [1, 1]} : vector<16x96xf32> to vector<16x8xf32>
    %9 = vector.shape_cast %8 : vector<16x8xf32> to vector<2x8x8xf32>
    %10 = vector.extract_strided_slice %5 {offsets = [0, 64], sizes = [16, 8], strides = [1, 1]} : vector<16x96xf32> to vector<16x8xf32>
    %11 = vector.shape_cast %10 : vector<16x8xf32> to vector<2x8x8xf32>
    "tpu.trace_start"() <{level = 10 : i32, message = "bqe,bke->bqk"}> : () -> ()
    %cst_5 = arith.constant dense<0.000000e+00> : vector<2x8x8xf32>
    %12 = tpu.matmul %7, %9, %cst_5 {dimension_numbers = #tpu.dot_dimension_numbers<[2], [2], [1], [1], [0, 0, 0, 1, 1, 1], [0], [0]>} : vector<2x8x8xf32>, vector<2x8x8xf32>, vector<2x8x8xf32> -> vector<2x8x8xf32>
    "tpu.trace_stop"() : () -> ()
    %cst_6 = arith.constant 0.353553385 : f32
    %13 = vector.broadcast %cst_6 : f32 to vector<2x8x8xf32>
    %14 = arith.mulf %12, %13 : vector<2x8x8xf32>
    %cst_7 = arith.constant dense<0xFF800000> : vector<2x8xf32>
    %15 = vector.multi_reduction <maximumf>, %14, %cst_7 [2] : vector<2x8x8xf32> to vector<2x8xf32>
    %16 = vector.shape_cast %15 : vector<2x8xf32> to vector<2x8x1xf32>
    %17 = vector.broadcast %16 : vector<2x8x1xf32> to vector<2x8x8xf32>
    %18 = arith.subf %14, %17 : vector<2x8x8xf32>
    %19 = math.exp %18 : vector<2x8x8xf32>
    %cst_8 = arith.constant dense<0.000000e+00> : vector<2x8xf32>
    %20 = vector.multi_reduction <add>, %19, %cst_8 [2] : vector<2x8x8xf32> to vector<2x8xf32>
    %21 = vector.shape_cast %20 : vector<2x8xf32> to vector<2x8x1xf32>
    %22 = vector.broadcast %21 : vector<2x8x1xf32> to vector<2x8x8xf32>
    %23 = arith.divf %19, %22 : vector<2x8x8xf32>
    "tpu.trace_start"() <{level = 10 : i32, message = "bqk,bke->bqe"}> : () -> ()
    %cst_9 = arith.constant dense<0.000000e+00> : vector<2x8x8xf32>
    %24 = tpu.matmul %23, %11, %cst_9 {dimension_numbers = #tpu.dot_dimension_numbers<[2], [1], [1], [2], [0, 0, 0, 1, 1, 2], [0], [0]>} : vector<2x8x8xf32>, vector<2x8x8xf32>, vector<2x8x8xf32> -> vector<2x8x8xf32>
    "tpu.trace_stop"() : () -> ()
    %25 = vector.shape_cast %24 : vector<2x8x8xf32> to vector<16x8xf32>
    %26 = vector.extract_strided_slice %5 {offsets = [0, 8], sizes = [16, 8], strides = [1, 1]} : vector<16x96xf32> to vector<16x8xf32>
    %27 = vector.shape_cast %26 : vector<16x8xf32> to vector<2x8x8xf32>
    %28 = vector.extract_strided_slice %5 {offsets = [0, 40], sizes = [16, 8], strides = [1, 1]} : vector<16x96xf32> to vector<16x8xf32>
    %29 = vector.shape_cast %28 : vector<16x8xf32> to vector<2x8x8xf32>
    %30 = vector.extract_strided_slice %5 {offsets = [0, 72], sizes = [16, 8], strides = [1, 1]} : vector<16x96xf32> to vector<16x8xf32>
    %31 = vector.shape_cast %30 : vector<16x8xf32> to vector<2x8x8xf32>
    "tpu.trace_start"() <{level = 10 : i32, message = "bqe,bke->bqk"}> : () -> ()
    %cst_10 = arith.constant dense<0.000000e+00> : vector<2x8x8xf32>
    %32 = tpu.matmul %27, %29, %cst_10 {dimension_numbers = #tpu.dot_dimension_numbers<[2], [2], [1], [1], [0, 0, 0, 1, 1, 1], [0], [0]>} : vector<2x8x8xf32>, vector<2x8x8xf32>, vector<2x8x8xf32> -> vector<2x8x8xf32>
    "tpu.trace_stop"() : () -> ()
    %cst_11 = arith.constant 0.353553385 : f32
    %33 = vector.broadcast %cst_11 : f32 to vector<2x8x8xf32>
    %34 = arith.mulf %32, %33 : vector<2x8x8xf32>
    %cst_12 = arith.constant dense<0xFF800000> : vector<2x8xf32>
    %35 = vector.multi_reduction <maximumf>, %34, %cst_12 [2] : vector<2x8x8xf32> to vector<2x8xf32>
    %36 = vector.shape_cast %35 : vector<2x8xf32> to vector<2x8x1xf32>
    %37 = vector.broadcast %36 : vector<2x8x1xf32> to vector<2x8x8xf32>
    %38 = arith.subf %34, %37 : vector<2x8x8xf32>
    %39 = math.exp %38 : vector<2x8x8xf32>
    %cst_13 = arith.constant dense<0.000000e+00> : vector<2x8xf32>
    %40 = vector.multi_reduction <add>, %39, %cst_13 [2] : vector<2x8x8xf32> to vector<2x8xf32>
    %41 = vector.shape_cast %40 : vector<2x8xf32> to vector<2x8x1xf32>
    %42 = vector.broadcast %41 : vector<2x8x1xf32> to vector<2x8x8xf32>
    %43 = arith.divf %39, %42 : vector<2x8x8xf32>
    "tpu.trace_start"() <{level = 10 : i32, message = "bqk,bke->bqe"}> : () -> ()
    %cst_14 = arith.constant dense<0.000000e+00> : vector<2x8x8xf32>
    %44 = tpu.matmul %43, %31, %cst_14 {dimension_numbers = #tpu.dot_dimension_numbers<[2], [1], [1], [2], [0, 0, 0, 1, 1, 2], [0], [0]>} : vector<2x8x8xf32>, vector<2x8x8xf32>, vector<2x8x8xf32> -> vector<2x8x8xf32>
    "tpu.trace_stop"() : () -> ()
    %45 = vector.shape_cast %44 : vector<2x8x8xf32> to vector<16x8xf32>
    %46 = vector.extract_strided_slice %5 {offsets = [0, 16], sizes = [16, 8], strides = [1, 1]} : vector<16x96xf32> to vector<16x8xf32>
    %47 = vector.shape_cast %46 : vector<16x8xf32> to vector<2x8x8xf32>
    %48 = vector.extract_strided_slice %5 {offsets = [0, 48], sizes = [16, 8], strides = [1, 1]} : vector<16x96xf32> to vector<16x8xf32>
    %49 = vector.shape_cast %48 : vector<16x8xf32> to vector<2x8x8xf32>
    %50 = vector.extract_strided_slice %5 {offsets = [0, 80], sizes = [16, 8], strides = [1, 1]} : vector<16x96xf32> to vector<16x8xf32>
    %51 = vector.shape_cast %50 : vector<16x8xf32> to vector<2x8x8xf32>
    "tpu.trace_start"() <{level = 10 : i32, message = "bqe,bke->bqk"}> : () -> ()
    %cst_15 = arith.constant dense<0.000000e+00> : vector<2x8x8xf32>
    %52 = tpu.matmul %47, %49, %cst_15 {dimension_numbers = #tpu.dot_dimension_numbers<[2], [2], [1], [1], [0, 0, 0, 1, 1, 1], [0], [0]>} : vector<2x8x8xf32>, vector<2x8x8xf32>, vector<2x8x8xf32> -> vector<2x8x8xf32>
    "tpu.trace_stop"() : () -> ()
    %cst_16 = arith.constant 0.353553385 : f32
    %53 = vector.broadcast %cst_16 : f32 to vector<2x8x8xf32>
    %54 = arith.mulf %52, %53 : vector<2x8x8xf32>
    %cst_17 = arith.constant dense<0xFF800000> : vector<2x8xf32>
    %55 = vector.multi_reduction <maximumf>, %54, %cst_17 [2] : vector<2x8x8xf32> to vector<2x8xf32>
    %56 = vector.shape_cast %55 : vector<2x8xf32> to vector<2x8x1xf32>
    %57 = vector.broadcast %56 : vector<2x8x1xf32> to vector<2x8x8xf32>
    %58 = arith.subf %54, %57 : vector<2x8x8xf32>
    %59 = math.exp %58 : vector<2x8x8xf32>
    %cst_18 = arith.constant dense<0.000000e+00> : vector<2x8xf32>
    %60 = vector.multi_reduction <add>, %59, %cst_18 [2] : vector<2x8x8xf32> to vector<2x8xf32>
    %61 = vector.shape_cast %60 : vector<2x8xf32> to vector<2x8x1xf32>
    %62 = vector.broadcast %61 : vector<2x8x1xf32> to vector<2x8x8xf32>
    %63 = arith.divf %59, %62 : vector<2x8x8xf32>
    "tpu.trace_start"() <{level = 10 : i32, message = "bqk,bke->bqe"}> : () -> ()
    %cst_19 = arith.constant dense<0.000000e+00> : vector<2x8x8xf32>
    %64 = tpu.matmul %63, %51, %cst_19 {dimension_numbers = #tpu.dot_dimension_numbers<[2], [1], [1], [2], [0, 0, 0, 1, 1, 2], [0], [0]>} : vector<2x8x8xf32>, vector<2x8x8xf32>, vector<2x8x8xf32> -> vector<2x8x8xf32>
    "tpu.trace_stop"() : () -> ()
    %65 = vector.shape_cast %64 : vector<2x8x8xf32> to vector<16x8xf32>
    %66 = vector.extract_strided_slice %5 {offsets = [0, 24], sizes = [16, 8], strides = [1, 1]} : vector<16x96xf32> to vector<16x8xf32>
    %67 = vector.shape_cast %66 : vector<16x8xf32> to vector<2x8x8xf32>
    %68 = vector.extract_strided_slice %5 {offsets = [0, 56], sizes = [16, 8], strides = [1, 1]} : vector<16x96xf32> to vector<16x8xf32>
    %69 = vector.shape_cast %68 : vector<16x8xf32> to vector<2x8x8xf32>
    %70 = vector.extract_strided_slice %5 {offsets = [0, 88], sizes = [16, 8], strides = [1, 1]} : vector<16x96xf32> to vector<16x8xf32>
    %71 = vector.shape_cast %70 : vector<16x8xf32> to vector<2x8x8xf32>
    "tpu.trace_start"() <{level = 10 : i32, message = "bqe,bke->bqk"}> : () -> ()
    %cst_20 = arith.constant dense<0.000000e+00> : vector<2x8x8xf32>
    %72 = tpu.matmul %67, %69, %cst_20 {dimension_numbers = #tpu.dot_dimension_numbers<[2], [2], [1], [1], [0, 0, 0, 1, 1, 1], [0], [0]>} : vector<2x8x8xf32>, vector<2x8x8xf32>, vector<2x8x8xf32> -> vector<2x8x8xf32>
    "tpu.trace_stop"() : () -> ()
    %cst_21 = arith.constant 0.353553385 : f32
    %73 = vector.broadcast %cst_21 : f32 to vector<2x8x8xf32>
    %74 = arith.mulf %72, %73 : vector<2x8x8xf32>
    %cst_22 = arith.constant dense<0xFF800000> : vector<2x8xf32>
    %75 = vector.multi_reduction <maximumf>, %74, %cst_22 [2] : vector<2x8x8xf32> to vector<2x8xf32>
    %76 = vector.shape_cast %75 : vector<2x8xf32> to vector<2x8x1xf32>
    %77 = vector.broadcast %76 : vector<2x8x1xf32> to vector<2x8x8xf32>
    %78 = arith.subf %74, %77 : vector<2x8x8xf32>
    %79 = math.exp %78 : vector<2x8x8xf32>
    %cst_23 = arith.constant dense<0.000000e+00> : vector<2x8xf32>
    %80 = vector.multi_reduction <add>, %79, %cst_23 [2] : vector<2x8x8xf32> to vector<2x8xf32>
    %81 = vector.shape_cast %80 : vector<2x8xf32> to vector<2x8x1xf32>
    %82 = vector.broadcast %81 : vector<2x8x1xf32> to vector<2x8x8xf32>
    %83 = arith.divf %79, %82 : vector<2x8x8xf32>
    "tpu.trace_start"() <{level = 10 : i32, message = "bqk,bke->bqe"}> : () -> ()
    %cst_24 = arith.constant dense<0.000000e+00> : vector<2x8x8xf32>
    %84 = tpu.matmul %83, %71, %cst_24 {dimension_numbers = #tpu.dot_dimension_numbers<[2], [1], [1], [2], [0, 0, 0, 1, 1, 2], [0], [0]>} : vector<2x8x8xf32>, vector<2x8x8xf32>, vector<2x8x8xf32> -> vector<2x8x8xf32>
    "tpu.trace_stop"() : () -> ()
    %85 = vector.shape_cast %84 : vector<2x8x8xf32> to vector<16x8xf32>
    %86 = tpu.concatenate %25, %45, %65, %85 in 1 : vector<16x8xf32>, vector<16x8xf32>, vector<16x8xf32>, vector<16x8xf32> -> vector<16x32xf32>
    %c0_25 = arith.constant 0 : index
    %c0_26 = arith.constant 0 : index
    %87 = vector.load %arg3[%c0_25, %c0_26] : memref<32x32xf32, #tpu.memory_space<vmem>>, vector<32x32xf32>
    %cst_27 = arith.constant dense<0.000000e+00> : vector<16x32xf32>
    %88 = tpu.matmul %86, %87, %cst_27 {dimension_numbers = #tpu.dot_dimension_numbers<[1], [0], [0], [1], [0, 0, 1, 1], [], []>} : vector<16x32xf32>, vector<32x32xf32>, vector<16x32xf32> -> vector<16x32xf32>
    %c0_28 = arith.constant 0 : index
    %c0_29 = arith.constant 0 : index
    %89 = vector.load %arg4[%c0_28, %c0_29] : memref<1x32xf32, #tpu.memory_space<vmem>>, vector<1x32xf32>
    %90 = vector.broadcast %89 : vector<1x32xf32> to vector<16x32xf32>
    %91 = arith.addf %88, %90 : vector<16x32xf32>
    %92 = arith.addf %0, %91 : vector<16x32xf32>
    %c0_30 = arith.constant 0 : index
    %c0_31 = arith.constant 0 : index
    %93 = vector.load %arg7[%c0_30, %c0_31] : memref<1x32xf32, #tpu.memory_space<vmem>>, vector<1x32xf32>
    %c0_32 = arith.constant 0 : index
    %c0_33 = arith.constant 0 : index
    %94 = vector.load %arg8[%c0_32, %c0_33] : memref<1x32xf32, #tpu.memory_space<vmem>>, vector<1x32xf32>
    %cst_34 = arith.constant dense<0.000000e+00> : vector<16xf32>
    %95 = vector.multi_reduction <add>, %92, %cst_34 [1] : vector<16x32xf32> to vector<16xf32>
    %96 = vector.shape_cast %95 : vector<16xf32> to vector<16x1xf32>
    %cst_35 = arith.constant 3.200000e+01 : f32
    %97 = vector.broadcast %cst_35 : f32 to vector<16x1xf32>
    %98 = arith.divf %96, %97 : vector<16x1xf32>
    %99 = vector.broadcast %98 : vector<16x1xf32> to vector<16x32xf32>
    %100 = arith.subf %92, %99 : vector<16x32xf32>
    %101 = arith.mulf %100, %100 : vector<16x32xf32>
    %cst_36 = arith.constant dense<0.000000e+00> : vector<16xf32>
    %102 = vector.multi_reduction <add>, %101, %cst_36 [1] : vector<16x32xf32> to vector<16xf32>
    %103 = vector.shape_cast %102 : vector<16xf32> to vector<16x1xf32>
    %cst_37 = arith.constant 0.0322580636 : f32
    %104 = vector.broadcast %cst_37 : f32 to vector<16x1xf32>
    %105 = arith.mulf %103, %104 : vector<16x1xf32>
    %106 = vector.broadcast %93 : vector<1x32xf32> to vector<16x32xf32>
    %107 = arith.mulf %106, %100 : vector<16x32xf32>
    %108 = math.sqrt %105 : vector<16x1xf32>
    %cst_38 = arith.constant 9.99999997E-7 : f32
    %109 = vector.broadcast %cst_38 : f32 to vector<16x1xf32>
    %110 = arith.addf %108, %109 : vector<16x1xf32>
    %111 = vector.broadcast %110 : vector<16x1xf32> to vector<16x32xf32>
    %112 = arith.divf %107, %111 : vector<16x32xf32>
    %113 = vector.broadcast %94 : vector<1x32xf32> to vector<16x32xf32>
    %114 = arith.addf %112, %113 : vector<16x32xf32>
    %c0_39 = arith.constant 0 : index
    %c0_40 = arith.constant 0 : index
    %115 = vector.load %arg5[%c0_39, %c0_40] : memref<32x32xf32, #tpu.memory_space<vmem>>, vector<32x32xf32>
    %cst_41 = arith.constant dense<0.000000e+00> : vector<16x32xf32>
    %116 = tpu.matmul %114, %115, %cst_41 {dimension_numbers = #tpu.dot_dimension_numbers<[1], [0], [0], [1], [0, 0, 1, 1], [], []>} : vector<16x32xf32>, vector<32x32xf32>, vector<16x32xf32> -> vector<16x32xf32>
    %c0_42 = arith.constant 0 : index
    %c0_43 = arith.constant 0 : index
    %117 = vector.load %arg6[%c0_42, %c0_43] : memref<1x32xf32, #tpu.memory_space<vmem>>, vector<1x32xf32>
    %118 = vector.broadcast %117 : vector<1x32xf32> to vector<16x32xf32>
    %119 = arith.addf %116, %118 : vector<16x32xf32>
    %120 = arith.addf %119, %114 : vector<16x32xf32>
    %c0_44 = arith.constant 0 : index
    %c0_45 = arith.constant 0 : index
    %121 = vector.load %arg7[%c0_44, %c0_45] : memref<1x32xf32, #tpu.memory_space<vmem>>, vector<1x32xf32>
    %c0_46 = arith.constant 0 : index
    %c0_47 = arith.constant 0 : index
    %122 = vector.load %arg8[%c0_46, %c0_47] : memref<1x32xf32, #tpu.memory_space<vmem>>, vector<1x32xf32>
    %cst_48 = arith.constant dense<0.000000e+00> : vector<16xf32>
    %123 = vector.multi_reduction <add>, %120, %cst_48 [1] : vector<16x32xf32> to vector<16xf32>
    %124 = vector.shape_cast %123 : vector<16xf32> to vector<16x1xf32>
    %cst_49 = arith.constant 3.200000e+01 : f32
    %125 = vector.broadcast %cst_49 : f32 to vector<16x1xf32>
    %126 = arith.divf %124, %125 : vector<16x1xf32>
    %127 = vector.broadcast %126 : vector<16x1xf32> to vector<16x32xf32>
    %128 = arith.subf %120, %127 : vector<16x32xf32>
    %129 = arith.mulf %128, %128 : vector<16x32xf32>
    %cst_50 = arith.constant dense<0.000000e+00> : vector<16xf32>
    %130 = vector.multi_reduction <add>, %129, %cst_50 [1] : vector<16x32xf32> to vector<16xf32>
    %131 = vector.shape_cast %130 : vector<16xf32> to vector<16x1xf32>
    %cst_51 = arith.constant 0.0322580636 : f32
    %132 = vector.broadcast %cst_51 : f32 to vector<16x1xf32>
    %133 = arith.mulf %131, %132 : vector<16x1xf32>
    %134 = vector.broadcast %121 : vector<1x32xf32> to vector<16x32xf32>
    %135 = arith.mulf %134, %128 : vector<16x32xf32>
    %136 = math.sqrt %133 : vector<16x1xf32>
    %cst_52 = arith.constant 9.99999997E-7 : f32
    %137 = vector.broadcast %cst_52 : f32 to vector<16x1xf32>
    %138 = arith.addf %136, %137 : vector<16x1xf32>
    %139 = vector.broadcast %138 : vector<16x1xf32> to vector<16x32xf32>
    %140 = arith.divf %135, %139 : vector<16x32xf32>
    %141 = vector.broadcast %122 : vector<1x32xf32> to vector<16x32xf32>
    %142 = arith.addf %140, %141 : vector<16x32xf32>
    %c0_53 = arith.constant 0 : index
    %c0_54 = arith.constant 0 : index
    %143 = vector.load %arg9[%c0_53, %c0_54] : memref<32x32xf32, #tpu.memory_space<vmem>>, vector<32x32xf32>
    %cst_55 = arith.constant dense<0.000000e+00> : vector<16x32xf32>
    %144 = tpu.matmul %142, %143, %cst_55 {dimension_numbers = #tpu.dot_dimension_numbers<[1], [0], [0], [1], [0, 0, 1, 1], [], []>} : vector<16x32xf32>, vector<32x32xf32>, vector<16x32xf32> -> vector<16x32xf32>
    %c0_56 = arith.constant 0 : index
    %c0_57 = arith.constant 0 : index
    %145 = vector.load %arg10[%c0_56, %c0_57] : memref<1x32xf32, #tpu.memory_space<vmem>>, vector<1x32xf32>
    %146 = vector.broadcast %145 : vector<1x32xf32> to vector<16x32xf32>
    %147 = arith.addf %144, %146 : vector<16x32xf32>
    %c0_58 = arith.constant 0 : index
    %c0_59 = arith.constant 0 : index
    %148 = vector.load %arg11[%c0_58, %c0_59] : memref<1x32xf32, #tpu.memory_space<vmem>>, vector<1x32xf32>
    %c0_60 = arith.constant 0 : index
    %c0_61 = arith.constant 0 : index
    %149 = vector.load %arg12[%c0_60, %c0_61] : memref<1x32xf32, #tpu.memory_space<vmem>>, vector<1x32xf32>
    %cst_62 = arith.constant dense<0.000000e+00> : vector<16xf32>
    %150 = vector.multi_reduction <add>, %147, %cst_62 [1] : vector<16x32xf32> to vector<16xf32>
    %151 = vector.shape_cast %150 : vector<16xf32> to vector<16x1xf32>
    %cst_63 = arith.constant 3.200000e+01 : f32
    %152 = vector.broadcast %cst_63 : f32 to vector<16x1xf32>
    %153 = arith.divf %151, %152 : vector<16x1xf32>
    %154 = vector.broadcast %153 : vector<16x1xf32> to vector<16x32xf32>
    %155 = arith.subf %147, %154 : vector<16x32xf32>
    %156 = arith.mulf %155, %155 : vector<16x32xf32>
    %cst_64 = arith.constant dense<0.000000e+00> : vector<16xf32>
    %157 = vector.multi_reduction <add>, %156, %cst_64 [1] : vector<16x32xf32> to vector<16xf32>
    %158 = vector.shape_cast %157 : vector<16xf32> to vector<16x1xf32>
    %cst_65 = arith.constant 0.0322580636 : f32
    %159 = vector.broadcast %cst_65 : f32 to vector<16x1xf32>
    %160 = arith.mulf %158, %159 : vector<16x1xf32>
    %161 = vector.broadcast %148 : vector<1x32xf32> to vector<16x32xf32>
    %162 = arith.mulf %161, %155 : vector<16x32xf32>
    %163 = math.sqrt %160 : vector<16x1xf32>
    %cst_66 = arith.constant 9.99999997E-7 : f32
    %164 = vector.broadcast %cst_66 : f32 to vector<16x1xf32>
    %165 = arith.addf %163, %164 : vector<16x1xf32>
    %166 = vector.broadcast %165 : vector<16x1xf32> to vector<16x32xf32>
    %167 = arith.divf %162, %166 : vector<16x32xf32>
    %168 = vector.broadcast %149 : vector<1x32xf32> to vector<16x32xf32>
    %169 = arith.addf %167, %168 : vector<16x32xf32>
    %c1_i32 = arith.constant 1 : i32
    %c0_67 = arith.constant 0 : index
    %c0_68 = arith.constant 0 : index
    %170 = vector.load %arg1[%c0_67, %c0_68] : memref<32x96xf32, #tpu.memory_space<vmem>>, vector<32x96xf32>
    %cst_69 = arith.constant dense<0.000000e+00> : vector<16x96xf32>
    %171 = tpu.matmul %169, %170, %cst_69 {dimension_numbers = #tpu.dot_dimension_numbers<[1], [0], [0], [1], [0, 0, 1, 1], [], []>} : vector<16x32xf32>, vector<32x96xf32>, vector<16x96xf32> -> vector<16x96xf32>
    %c0_70 = arith.constant 0 : index
    %c0_71 = arith.constant 0 : index
    %172 = vector.load %arg2[%c0_70, %c0_71] : memref<1x96xf32, #tpu.memory_space<vmem>>, vector<1x96xf32>
    %173 = vector.broadcast %172 : vector<1x96xf32> to vector<16x96xf32>
    %174 = arith.addf %171, %173 : vector<16x96xf32>
    %175 = vector.extract_strided_slice %174 {offsets = [0, 0], sizes = [16, 8], strides = [1, 1]} : vector<16x96xf32> to vector<16x8xf32>
    %176 = vector.shape_cast %175 : vector<16x8xf32> to vector<2x8x8xf32>
    %177 = vector.extract_strided_slice %174 {offsets = [0, 32], sizes = [16, 8], strides = [1, 1]} : vector<16x96xf32> to vector<16x8xf32>
    %178 = vector.shape_cast %177 : vector<16x8xf32> to vector<2x8x8xf32>
    %179 = vector.extract_strided_slice %174 {offsets = [0, 64], sizes = [16, 8], strides = [1, 1]} : vector<16x96xf32> to vector<16x8xf32>
    %180 = vector.shape_cast %179 : vector<16x8xf32> to vector<2x8x8xf32>
    "tpu.trace_start"() <{level = 10 : i32, message = "bqe,bke->bqk"}> : () -> ()
    %cst_72 = arith.constant dense<0.000000e+00> : vector<2x8x8xf32>
    %181 = tpu.matmul %176, %178, %cst_72 {dimension_numbers = #tpu.dot_dimension_numbers<[2], [2], [1], [1], [0, 0, 0, 1, 1, 1], [0], [0]>} : vector<2x8x8xf32>, vector<2x8x8xf32>, vector<2x8x8xf32> -> vector<2x8x8xf32>
    "tpu.trace_stop"() : () -> ()
    %cst_73 = arith.constant 0.353553385 : f32
    %182 = vector.broadcast %cst_73 : f32 to vector<2x8x8xf32>
    %183 = arith.mulf %181, %182 : vector<2x8x8xf32>
    %cst_74 = arith.constant dense<0xFF800000> : vector<2x8xf32>
    %184 = vector.multi_reduction <maximumf>, %183, %cst_74 [2] : vector<2x8x8xf32> to vector<2x8xf32>
    %185 = vector.shape_cast %184 : vector<2x8xf32> to vector<2x8x1xf32>
    %186 = vector.broadcast %185 : vector<2x8x1xf32> to vector<2x8x8xf32>
    %187 = arith.subf %183, %186 : vector<2x8x8xf32>
    %188 = math.exp %187 : vector<2x8x8xf32>
    %cst_75 = arith.constant dense<0.000000e+00> : vector<2x8xf32>
    %189 = vector.multi_reduction <add>, %188, %cst_75 [2] : vector<2x8x8xf32> to vector<2x8xf32>
    %190 = vector.shape_cast %189 : vector<2x8xf32> to vector<2x8x1xf32>
    %191 = vector.broadcast %190 : vector<2x8x1xf32> to vector<2x8x8xf32>
    %192 = arith.divf %188, %191 : vector<2x8x8xf32>
    "tpu.trace_start"() <{level = 10 : i32, message = "bqk,bke->bqe"}> : () -> ()
    %cst_76 = arith.constant dense<0.000000e+00> : vector<2x8x8xf32>
    %193 = tpu.matmul %192, %180, %cst_76 {dimension_numbers = #tpu.dot_dimension_numbers<[2], [1], [1], [2], [0, 0, 0, 1, 1, 2], [0], [0]>} : vector<2x8x8xf32>, vector<2x8x8xf32>, vector<2x8x8xf32> -> vector<2x8x8xf32>
    "tpu.trace_stop"() : () -> ()
    %194 = vector.shape_cast %193 : vector<2x8x8xf32> to vector<16x8xf32>
    %195 = vector.extract_strided_slice %174 {offsets = [0, 8], sizes = [16, 8], strides = [1, 1]} : vector<16x96xf32> to vector<16x8xf32>
    %196 = vector.shape_cast %195 : vector<16x8xf32> to vector<2x8x8xf32>
    %197 = vector.extract_strided_slice %174 {offsets = [0, 40], sizes = [16, 8], strides = [1, 1]} : vector<16x96xf32> to vector<16x8xf32>
    %198 = vector.shape_cast %197 : vector<16x8xf32> to vector<2x8x8xf32>
    %199 = vector.extract_strided_slice %174 {offsets = [0, 72], sizes = [16, 8], strides = [1, 1]} : vector<16x96xf32> to vector<16x8xf32>
    %200 = vector.shape_cast %199 : vector<16x8xf32> to vector<2x8x8xf32>
    "tpu.trace_start"() <{level = 10 : i32, message = "bqe,bke->bqk"}> : () -> ()
    %cst_77 = arith.constant dense<0.000000e+00> : vector<2x8x8xf32>
    %201 = tpu.matmul %196, %198, %cst_77 {dimension_numbers = #tpu.dot_dimension_numbers<[2], [2], [1], [1], [0, 0, 0, 1, 1, 1], [0], [0]>} : vector<2x8x8xf32>, vector<2x8x8xf32>, vector<2x8x8xf32> -> vector<2x8x8xf32>
    "tpu.trace_stop"() : () -> ()
    %cst_78 = arith.constant 0.353553385 : f32
    %202 = vector.broadcast %cst_78 : f32 to vector<2x8x8xf32>
    %203 = arith.mulf %201, %202 : vector<2x8x8xf32>
    %cst_79 = arith.constant dense<0xFF800000> : vector<2x8xf32>
    %204 = vector.multi_reduction <maximumf>, %203, %cst_79 [2] : vector<2x8x8xf32> to vector<2x8xf32>
    %205 = vector.shape_cast %204 : vector<2x8xf32> to vector<2x8x1xf32>
    %206 = vector.broadcast %205 : vector<2x8x1xf32> to vector<2x8x8xf32>
    %207 = arith.subf %203, %206 : vector<2x8x8xf32>
    %208 = math.exp %207 : vector<2x8x8xf32>
    %cst_80 = arith.constant dense<0.000000e+00> : vector<2x8xf32>
    %209 = vector.multi_reduction <add>, %208, %cst_80 [2] : vector<2x8x8xf32> to vector<2x8xf32>
    %210 = vector.shape_cast %209 : vector<2x8xf32> to vector<2x8x1xf32>
    %211 = vector.broadcast %210 : vector<2x8x1xf32> to vector<2x8x8xf32>
    %212 = arith.divf %208, %211 : vector<2x8x8xf32>
    "tpu.trace_start"() <{level = 10 : i32, message = "bqk,bke->bqe"}> : () -> ()
    %cst_81 = arith.constant dense<0.000000e+00> : vector<2x8x8xf32>
    %213 = tpu.matmul %212, %200, %cst_81 {dimension_numbers = #tpu.dot_dimension_numbers<[2], [1], [1], [2], [0, 0, 0, 1, 1, 2], [0], [0]>} : vector<2x8x8xf32>, vector<2x8x8xf32>, vector<2x8x8xf32> -> vector<2x8x8xf32>
    "tpu.trace_stop"() : () -> ()
    %214 = vector.shape_cast %213 : vector<2x8x8xf32> to vector<16x8xf32>
    %215 = vector.extract_strided_slice %174 {offsets = [0, 16], sizes = [16, 8], strides = [1, 1]} : vector<16x96xf32> to vector<16x8xf32>
    %216 = vector.shape_cast %215 : vector<16x8xf32> to vector<2x8x8xf32>
    %217 = vector.extract_strided_slice %174 {offsets = [0, 48], sizes = [16, 8], strides = [1, 1]} : vector<16x96xf32> to vector<16x8xf32>
    %218 = vector.shape_cast %217 : vector<16x8xf32> to vector<2x8x8xf32>
    %219 = vector.extract_strided_slice %174 {offsets = [0, 80], sizes = [16, 8], strides = [1, 1]} : vector<16x96xf32> to vector<16x8xf32>
    %220 = vector.shape_cast %219 : vector<16x8xf32> to vector<2x8x8xf32>
    "tpu.trace_start"() <{level = 10 : i32, message = "bqe,bke->bqk"}> : () -> ()
    %cst_82 = arith.constant dense<0.000000e+00> : vector<2x8x8xf32>
    %221 = tpu.matmul %216, %218, %cst_82 {dimension_numbers = #tpu.dot_dimension_numbers<[2], [2], [1], [1], [0, 0, 0, 1, 1, 1], [0], [0]>} : vector<2x8x8xf32>, vector<2x8x8xf32>, vector<2x8x8xf32> -> vector<2x8x8xf32>
    "tpu.trace_stop"() : () -> ()
    %cst_83 = arith.constant 0.353553385 : f32
    %222 = vector.broadcast %cst_83 : f32 to vector<2x8x8xf32>
    %223 = arith.mulf %221, %222 : vector<2x8x8xf32>
    %cst_84 = arith.constant dense<0xFF800000> : vector<2x8xf32>
    %224 = vector.multi_reduction <maximumf>, %223, %cst_84 [2] : vector<2x8x8xf32> to vector<2x8xf32>
    %225 = vector.shape_cast %224 : vector<2x8xf32> to vector<2x8x1xf32>
    %226 = vector.broadcast %225 : vector<2x8x1xf32> to vector<2x8x8xf32>
    %227 = arith.subf %223, %226 : vector<2x8x8xf32>
    %228 = math.exp %227 : vector<2x8x8xf32>
    %cst_85 = arith.constant dense<0.000000e+00> : vector<2x8xf32>
    %229 = vector.multi_reduction <add>, %228, %cst_85 [2] : vector<2x8x8xf32> to vector<2x8xf32>
    %230 = vector.shape_cast %229 : vector<2x8xf32> to vector<2x8x1xf32>
    %231 = vector.broadcast %230 : vector<2x8x1xf32> to vector<2x8x8xf32>
    %232 = arith.divf %228, %231 : vector<2x8x8xf32>
    "tpu.trace_start"() <{level = 10 : i32, message = "bqk,bke->bqe"}> : () -> ()
    %cst_86 = arith.constant dense<0.000000e+00> : vector<2x8x8xf32>
    %233 = tpu.matmul %232, %220, %cst_86 {dimension_numbers = #tpu.dot_dimension_numbers<[2], [1], [1], [2], [0, 0, 0, 1, 1, 2], [0], [0]>} : vector<2x8x8xf32>, vector<2x8x8xf32>, vector<2x8x8xf32> -> vector<2x8x8xf32>
    "tpu.trace_stop"() : () -> ()
    %234 = vector.shape_cast %233 : vector<2x8x8xf32> to vector<16x8xf32>
    %235 = vector.extract_strided_slice %174 {offsets = [0, 24], sizes = [16, 8], strides = [1, 1]} : vector<16x96xf32> to vector<16x8xf32>
    %236 = vector.shape_cast %235 : vector<16x8xf32> to vector<2x8x8xf32>
    %237 = vector.extract_strided_slice %174 {offsets = [0, 56], sizes = [16, 8], strides = [1, 1]} : vector<16x96xf32> to vector<16x8xf32>
    %238 = vector.shape_cast %237 : vector<16x8xf32> to vector<2x8x8xf32>
    %239 = vector.extract_strided_slice %174 {offsets = [0, 88], sizes = [16, 8], strides = [1, 1]} : vector<16x96xf32> to vector<16x8xf32>
    %240 = vector.shape_cast %239 : vector<16x8xf32> to vector<2x8x8xf32>
    "tpu.trace_start"() <{level = 10 : i32, message = "bqe,bke->bqk"}> : () -> ()
    %cst_87 = arith.constant dense<0.000000e+00> : vector<2x8x8xf32>
    %241 = tpu.matmul %236, %238, %cst_87 {dimension_numbers = #tpu.dot_dimension_numbers<[2], [2], [1], [1], [0, 0, 0, 1, 1, 1], [0], [0]>} : vector<2x8x8xf32>, vector<2x8x8xf32>, vector<2x8x8xf32> -> vector<2x8x8xf32>
    "tpu.trace_stop"() : () -> ()
    %cst_88 = arith.constant 0.353553385 : f32
    %242 = vector.broadcast %cst_88 : f32 to vector<2x8x8xf32>
    %243 = arith.mulf %241, %242 : vector<2x8x8xf32>
    %cst_89 = arith.constant dense<0xFF800000> : vector<2x8xf32>
    %244 = vector.multi_reduction <maximumf>, %243, %cst_89 [2] : vector<2x8x8xf32> to vector<2x8xf32>
    %245 = vector.shape_cast %244 : vector<2x8xf32> to vector<2x8x1xf32>
    %246 = vector.broadcast %245 : vector<2x8x1xf32> to vector<2x8x8xf32>
    %247 = arith.subf %243, %246 : vector<2x8x8xf32>
    %248 = math.exp %247 : vector<2x8x8xf32>
    %cst_90 = arith.constant dense<0.000000e+00> : vector<2x8xf32>
    %249 = vector.multi_reduction <add>, %248, %cst_90 [2] : vector<2x8x8xf32> to vector<2x8xf32>
    %250 = vector.shape_cast %249 : vector<2x8xf32> to vector<2x8x1xf32>
    %251 = vector.broadcast %250 : vector<2x8x1xf32> to vector<2x8x8xf32>
    %252 = arith.divf %248, %251 : vector<2x8x8xf32>
    "tpu.trace_start"() <{level = 10 : i32, message = "bqk,bke->bqe"}> : () -> ()
    %cst_91 = arith.constant dense<0.000000e+00> : vector<2x8x8xf32>
    %253 = tpu.matmul %252, %240, %cst_91 {dimension_numbers = #tpu.dot_dimension_numbers<[2], [1], [1], [2], [0, 0, 0, 1, 1, 2], [0], [0]>} : vector<2x8x8xf32>, vector<2x8x8xf32>, vector<2x8x8xf32> -> vector<2x8x8xf32>
    "tpu.trace_stop"() : () -> ()
    %254 = vector.shape_cast %253 : vector<2x8x8xf32> to vector<16x8xf32>
    %255 = tpu.concatenate %194, %214, %234, %254 in 1 : vector<16x8xf32>, vector<16x8xf32>, vector<16x8xf32>, vector<16x8xf32> -> vector<16x32xf32>
    %c0_92 = arith.constant 0 : index
    %c0_93 = arith.constant 0 : index
    %256 = vector.load %arg3[%c0_92, %c0_93] : memref<32x32xf32, #tpu.memory_space<vmem>>, vector<32x32xf32>
    %cst_94 = arith.constant dense<0.000000e+00> : vector<16x32xf32>
    %257 = tpu.matmul %255, %256, %cst_94 {dimension_numbers = #tpu.dot_dimension_numbers<[1], [0], [0], [1], [0, 0, 1, 1], [], []>} : vector<16x32xf32>, vector<32x32xf32>, vector<16x32xf32> -> vector<16x32xf32>
    %c0_95 = arith.constant 0 : index
    %c0_96 = arith.constant 0 : index
    %258 = vector.load %arg4[%c0_95, %c0_96] : memref<1x32xf32, #tpu.memory_space<vmem>>, vector<1x32xf32>
    %259 = vector.broadcast %258 : vector<1x32xf32> to vector<16x32xf32>
    %260 = arith.addf %257, %259 : vector<16x32xf32>
    %261 = arith.addf %169, %260 : vector<16x32xf32>
    %c0_97 = arith.constant 0 : index
    %c0_98 = arith.constant 0 : index
    %262 = vector.load %arg7[%c0_97, %c0_98] : memref<1x32xf32, #tpu.memory_space<vmem>>, vector<1x32xf32>
    %c0_99 = arith.constant 0 : index
    %c0_100 = arith.constant 0 : index
    %263 = vector.load %arg8[%c0_99, %c0_100] : memref<1x32xf32, #tpu.memory_space<vmem>>, vector<1x32xf32>
    %cst_101 = arith.constant dense<0.000000e+00> : vector<16xf32>
    %264 = vector.multi_reduction <add>, %261, %cst_101 [1] : vector<16x32xf32> to vector<16xf32>
    %265 = vector.shape_cast %264 : vector<16xf32> to vector<16x1xf32>
    %cst_102 = arith.constant 3.200000e+01 : f32
    %266 = vector.broadcast %cst_102 : f32 to vector<16x1xf32>
    %267 = arith.divf %265, %266 : vector<16x1xf32>
    %268 = vector.broadcast %267 : vector<16x1xf32> to vector<16x32xf32>
    %269 = arith.subf %261, %268 : vector<16x32xf32>
    %270 = arith.mulf %269, %269 : vector<16x32xf32>
    %cst_103 = arith.constant dense<0.000000e+00> : vector<16xf32>
    %271 = vector.multi_reduction <add>, %270, %cst_103 [1] : vector<16x32xf32> to vector<16xf32>
    %272 = vector.shape_cast %271 : vector<16xf32> to vector<16x1xf32>
    %cst_104 = arith.constant 0.0322580636 : f32
    %273 = vector.broadcast %cst_104 : f32 to vector<16x1xf32>
    %274 = arith.mulf %272, %273 : vector<16x1xf32>
    %275 = vector.broadcast %262 : vector<1x32xf32> to vector<16x32xf32>
    %276 = arith.mulf %275, %269 : vector<16x32xf32>
    %277 = math.sqrt %274 : vector<16x1xf32>
    %cst_105 = arith.constant 9.99999997E-7 : f32
    %278 = vector.broadcast %cst_105 : f32 to vector<16x1xf32>
    %279 = arith.addf %277, %278 : vector<16x1xf32>
    %280 = vector.broadcast %279 : vector<16x1xf32> to vector<16x32xf32>
    %281 = arith.divf %276, %280 : vector<16x32xf32>
    %282 = vector.broadcast %263 : vector<1x32xf32> to vector<16x32xf32>
    %283 = arith.addf %281, %282 : vector<16x32xf32>
    %c0_106 = arith.constant 0 : index
    %c0_107 = arith.constant 0 : index
    %284 = vector.load %arg5[%c0_106, %c0_107] : memref<32x32xf32, #tpu.memory_space<vmem>>, vector<32x32xf32>
    %cst_108 = arith.constant dense<0.000000e+00> : vector<16x32xf32>
    %285 = tpu.matmul %283, %284, %cst_108 {dimension_numbers = #tpu.dot_dimension_numbers<[1], [0], [0], [1], [0, 0, 1, 1], [], []>} : vector<16x32xf32>, vector<32x32xf32>, vector<16x32xf32> -> vector<16x32xf32>
    %c0_109 = arith.constant 0 : index
    %c0_110 = arith.constant 0 : index
    %286 = vector.load %arg6[%c0_109, %c0_110] : memref<1x32xf32, #tpu.memory_space<vmem>>, vector<1x32xf32>
    %287 = vector.broadcast %286 : vector<1x32xf32> to vector<16x32xf32>
    %288 = arith.addf %285, %287 : vector<16x32xf32>
    %289 = arith.addf %288, %283 : vector<16x32xf32>
    %c0_111 = arith.constant 0 : index
    %c0_112 = arith.constant 0 : index
    %290 = vector.load %arg7[%c0_111, %c0_112] : memref<1x32xf32, #tpu.memory_space<vmem>>, vector<1x32xf32>
    %c0_113 = arith.constant 0 : index
    %c0_114 = arith.constant 0 : index
    %291 = vector.load %arg8[%c0_113, %c0_114] : memref<1x32xf32, #tpu.memory_space<vmem>>, vector<1x32xf32>
    %cst_115 = arith.constant dense<0.000000e+00> : vector<16xf32>
    %292 = vector.multi_reduction <add>, %289, %cst_115 [1] : vector<16x32xf32> to vector<16xf32>
    %293 = vector.shape_cast %292 : vector<16xf32> to vector<16x1xf32>
    %cst_116 = arith.constant 3.200000e+01 : f32
    %294 = vector.broadcast %cst_116 : f32 to vector<16x1xf32>
    %295 = arith.divf %293, %294 : vector<16x1xf32>
    %296 = vector.broadcast %295 : vector<16x1xf32> to vector<16x32xf32>
    %297 = arith.subf %289, %296 : vector<16x32xf32>
    %298 = arith.mulf %297, %297 : vector<16x32xf32>
    %cst_117 = arith.constant dense<0.000000e+00> : vector<16xf32>
    %299 = vector.multi_reduction <add>, %298, %cst_117 [1] : vector<16x32xf32> to vector<16xf32>
    %300 = vector.shape_cast %299 : vector<16xf32> to vector<16x1xf32>
    %cst_118 = arith.constant 0.0322580636 : f32
    %301 = vector.broadcast %cst_118 : f32 to vector<16x1xf32>
    %302 = arith.mulf %300, %301 : vector<16x1xf32>
    %303 = vector.broadcast %290 : vector<1x32xf32> to vector<16x32xf32>
    %304 = arith.mulf %303, %297 : vector<16x32xf32>
    %305 = math.sqrt %302 : vector<16x1xf32>
    %cst_119 = arith.constant 9.99999997E-7 : f32
    %306 = vector.broadcast %cst_119 : f32 to vector<16x1xf32>
    %307 = arith.addf %305, %306 : vector<16x1xf32>
    %308 = vector.broadcast %307 : vector<16x1xf32> to vector<16x32xf32>
    %309 = arith.divf %304, %308 : vector<16x32xf32>
    %310 = vector.broadcast %291 : vector<1x32xf32> to vector<16x32xf32>
    %311 = arith.addf %309, %310 : vector<16x32xf32>
    %c0_120 = arith.constant 0 : index
    %c0_121 = arith.constant 0 : index
    %312 = vector.load %arg9[%c0_120, %c0_121] : memref<32x32xf32, #tpu.memory_space<vmem>>, vector<32x32xf32>
    %cst_122 = arith.constant dense<0.000000e+00> : vector<16x32xf32>
    %313 = tpu.matmul %311, %312, %cst_122 {dimension_numbers = #tpu.dot_dimension_numbers<[1], [0], [0], [1], [0, 0, 1, 1], [], []>} : vector<16x32xf32>, vector<32x32xf32>, vector<16x32xf32> -> vector<16x32xf32>
    %c0_123 = arith.constant 0 : index
    %c0_124 = arith.constant 0 : index
    %314 = vector.load %arg10[%c0_123, %c0_124] : memref<1x32xf32, #tpu.memory_space<vmem>>, vector<1x32xf32>
    %315 = vector.broadcast %314 : vector<1x32xf32> to vector<16x32xf32>
    %316 = arith.addf %313, %315 : vector<16x32xf32>
    %c0_125 = arith.constant 0 : index
    %c0_126 = arith.constant 0 : index
    %317 = vector.load %arg11[%c0_125, %c0_126] : memref<1x32xf32, #tpu.memory_space<vmem>>, vector<1x32xf32>
    %c0_127 = arith.constant 0 : index
    %c0_128 = arith.constant 0 : index
    %318 = vector.load %arg12[%c0_127, %c0_128] : memref<1x32xf32, #tpu.memory_space<vmem>>, vector<1x32xf32>
    %cst_129 = arith.constant dense<0.000000e+00> : vector<16xf32>
    %319 = vector.multi_reduction <add>, %316, %cst_129 [1] : vector<16x32xf32> to vector<16xf32>
    %320 = vector.shape_cast %319 : vector<16xf32> to vector<16x1xf32>
    %cst_130 = arith.constant 3.200000e+01 : f32
    %321 = vector.broadcast %cst_130 : f32 to vector<16x1xf32>
    %322 = arith.divf %320, %321 : vector<16x1xf32>
    %323 = vector.broadcast %322 : vector<16x1xf32> to vector<16x32xf32>
    %324 = arith.subf %316, %323 : vector<16x32xf32>
    %325 = arith.mulf %324, %324 : vector<16x32xf32>
    %cst_131 = arith.constant dense<0.000000e+00> : vector<16xf32>
    %326 = vector.multi_reduction <add>, %325, %cst_131 [1] : vector<16x32xf32> to vector<16xf32>
    %327 = vector.shape_cast %326 : vector<16xf32> to vector<16x1xf32>
    %cst_132 = arith.constant 0.0322580636 : f32
    %328 = vector.broadcast %cst_132 : f32 to vector<16x1xf32>
    %329 = arith.mulf %327, %328 : vector<16x1xf32>
    %330 = vector.broadcast %317 : vector<1x32xf32> to vector<16x32xf32>
    %331 = arith.mulf %330, %324 : vector<16x32xf32>
    %332 = math.sqrt %329 : vector<16x1xf32>
    %cst_133 = arith.constant 9.99999997E-7 : f32
    %333 = vector.broadcast %cst_133 : f32 to vector<16x1xf32>
    %334 = arith.addf %332, %333 : vector<16x1xf32>
    %335 = vector.broadcast %334 : vector<16x1xf32> to vector<16x32xf32>
    %336 = arith.divf %331, %335 : vector<16x32xf32>
    %337 = vector.broadcast %318 : vector<1x32xf32> to vector<16x32xf32>
    %338 = arith.addf %336, %337 : vector<16x32xf32>
    %c0_134 = arith.constant 0 : index
    %c0_135 = arith.constant 0 : index
    %339 = vector.load %arg13[%c0_134, %c0_135] : memref<16x32xf32, #tpu.memory_space<vmem>>, vector<16x32xf32>
    tpu.vector_store %arg13[%c0_134, %c0_135], %338 {strides = array<i32>} : memref<16x32xf32, #tpu.memory_space<vmem>>, vector<16x32xf32>,
    return
  }
}

</mosaic_0001>

<llo_original>
// kernel: encoder_forward.1
$region0: #{encoder_forward.1}
  #allocation0 [shape = 'u32[]', space=smem, size = 0x4, offset = 0x4, fixed_abs, tag = 'smem constant byte address 0x4 - core index']
  #allocation1 [shape = 'u32[144,128]{1,0:T(1,128)}', space=vmem, size = 0x12000, scoped, tag = 'internal scratch']
  %s0 = inlined_call_operand.vmem [shape: f32[16,32], index: 0, kind: input, shape index: {}]
  %s1 = inlined_call_operand.vmem [shape: f32[32,96], index: 1, kind: input, shape index: {}]
  %s2 = inlined_call_operand.vmem [shape: f32[1,96], index: 2, kind: input, shape index: {}]
  %s3 = inlined_call_operand.vmem [shape: f32[32,32], index: 3, kind: input, shape index: {}]
  %s4 = inlined_call_operand.vmem [shape: f32[1,32], index: 4, kind: input, shape index: {}]
  %s5 = inlined_call_operand.vmem [shape: f32[32,32], index: 5, kind: input, shape index: {}]
  %s6 = inlined_call_operand.vmem [shape: f32[1,32], index: 6, kind: input, shape index: {}]
  %s7 = inlined_call_operand.vmem [shape: f32[1,32], index: 7, kind: input, shape index: {}]
  %s8 = inlined_call_operand.vmem [shape: f32[1,32], index: 8, kind: input, shape index: {}]
  %s9 = inlined_call_operand.vmem [shape: f32[32,32], index: 9, kind: input, shape index: {}]
  %s10 = inlined_call_operand.vmem [shape: f32[1,32], index: 10, kind: input, shape index: {}]
  %s11 = inlined_call_operand.vmem [shape: f32[1,32], index: 11, kind: input, shape index: {}]
  %s12 = inlined_call_operand.vmem [shape: f32[1,32], index: 12, kind: input, shape index: {}]
  %s13 = inlined_call_operand.hbm [shape: f32[16,32], index: 13, kind: output, shape index: {}]
  %s14 = sld [smem:[#allocation0]]
  $region62: #{encoder_forward.1} parent=0
    _
  %s16 = ssub.s32 1, %s14
  %s17 = scalar_select 0, %s16, %s14
  $region1: #{encoder_forward.1} parent=0
    #allocation2 [shape = 'u8[8192]{0}', space=vmem, size = 0x2000, scoped, tag = 'output window, operand 0, single buffered']
    #allocation3 [shape = 's32[1]{0}', space=sflag, size = 0x4, scoped, tag = 'scoped memory for encoder_forward.1']
    %18 = vsyncpa [#allocation3], 0
    // Predicated region
    $region2: #{encoder_forward.1} parent=1 // pred_check
      _
    $region3: #{encoder_forward.1} parent=1 // pred_check_branch
      %20 = sbr.rel (0) target = $region5
    $region4: #{encoder_forward.1} parent=1 // pred_region
      _
    $region5: #{encoder_forward.1} parent=1 // pred_fallthru
      _
    // Predicated region
    $region6: #{encoder_forward.1} parent=1 // pred_check
      _
    $region7: #{encoder_forward.1} parent=1 // pred_check_branch
      %22 = sbr.rel (0) target = $region9
    $region8: #{encoder_forward.1} parent=1 // pred_region
      _
    $region9: #{encoder_forward.1} parent=1 // pred_fallthru
      _
    // Predicated region
    $region10: #{encoder_forward.1} parent=1 // pred_check
      _
    $region11: #{encoder_forward.1} parent=1 // pred_check_branch
      %24 = sbr.rel (0) target = $region13
    $region12: #{encoder_forward.1} parent=1 // pred_region
      _
    $region13: #{encoder_forward.1} parent=1 // pred_fallthru
      _
    // Predicated region
    $region14: #{encoder_forward.1} parent=1 // pred_check
      _
    $region15: #{encoder_forward.1} parent=1 // pred_check_branch
      %26 = sbr.rel (0) target = $region17
    $region16: #{encoder_forward.1} parent=1 // pred_region
      _
    $region17: #{encoder_forward.1} parent=1 // pred_fallthru
      _
    // Predicated region
    $region18: #{encoder_forward.1} parent=1 // pred_check
      _
    $region19: #{encoder_forward.1} parent=1 // pred_check_branch
      %28 = sbr.rel (0) target = $region21
    $region20: #{encoder_forward.1} parent=1 // pred_region
      _
    $region21: #{encoder_forward.1} parent=1 // pred_fallthru
      _
    // Predicated region
    $region22: #{encoder_forward.1} parent=1 // pred_check
      _
    $region23: #{encoder_forward.1} parent=1 // pred_check_branch
      %30 = sbr.rel (0) target = $region25
    $region24: #{encoder_forward.1} parent=1 // pred_region
      _
    $region25: #{encoder_forward.1} parent=1 // pred_fallthru
      _
    // Predicated region
    $region26: #{encoder_forward.1} parent=1 // pred_check
      _
    $region27: #{encoder_forward.1} parent=1 // pred_check_branch
      %32 = sbr.rel (0) target = $region29
    $region28: #{encoder_forward.1} parent=1 // pred_region
      _
    $region29: #{encoder_forward.1} parent=1 // pred_fallthru
      _
    // Predicated region
    $region30: #{encoder_forward.1} parent=1 // pred_check
      _
    $region31: #{encoder_forward.1} parent=1 // pred_check_branch
      %34 = sbr.rel (0) target = $region33
    $region32: #{encoder_forward.1} parent=1 // pred_region
      _
    $region33: #{encoder_forward.1} parent=1 // pred_fallthru
      _
    // Predicated region
    $region34: #{encoder_forward.1} parent=1 // pred_check
      _
    $region35: #{encoder_forward.1} parent=1 // pred_check_branch
      %36 = sbr.rel (0) target = $region37
    $region36: #{encoder_forward.1} parent=1 // pred_region
      _
    $region37: #{encoder_forward.1} parent=1 // pred_fallthru
      _
    // Predicated region
    $region38: #{encoder_forward.1} parent=1 // pred_check
      _
    $region39: #{encoder_forward.1} parent=1 // pred_check_branch
      %38 = sbr.rel (0) target = $region41
    $region40: #{encoder_forward.1} parent=1 // pred_region
      _
    $region41: #{encoder_forward.1} parent=1 // pred_fallthru
      _
    // Predicated region
    $region42: #{encoder_forward.1} parent=1 // pred_check
      _
    $region43: #{encoder_forward.1} parent=1 // pred_check_branch
      %40 = sbr.rel (0) target = $region45
    $region44: #{encoder_forward.1} parent=1 // pred_region
      _
    $region45: #{encoder_forward.1} parent=1 // pred_fallthru
      _
    // Predicated region
    $region46: #{encoder_forward.1} parent=1 // pred_check
      _
    $region47: #{encoder_forward.1} parent=1 // pred_check_branch
      %42 = sbr.rel (0) target = $region49
    $region48: #{encoder_forward.1} parent=1 // pred_region
      _
    $region49: #{encoder_forward.1} parent=1 // pred_fallthru
      _
    // Predicated region
    $region50: #{encoder_forward.1} parent=1 // pred_check
      _
    $region51: #{encoder_forward.1} parent=1 // pred_check_branch
      %44 = sbr.rel (0) target = $region53
    $region52: #{encoder_forward.1} parent=1 // pred_region
      _
    $region53: #{encoder_forward.1} parent=1 // pred_fallthru
      _
    %v45 = vld [vmem:[%s0] sm:$0xff]
    %v46 = vld [vmem:[%s0 + $0x8] sm:$0xff]
    %v47 = vld [vmem:[%s1] sm:$0xff]
    %v48 = vld [vmem:[%s1 + $0x8] sm:$0xff]
    %v49 = vld [vmem:[%s1 + $0x10] sm:$0xff]
    %v50 = vld [vmem:[%s1 + $0x18] sm:$0xff]
    %v51 = vld [vmem:[%s2] sm:$0x1]
    %v53 = vlaneseq
    %v54 = vshrl.u32 %v53, 7
    %v55 = vsub.s32 0, %v54
    %v56 = vrot.slane %v51, %v55
    %vm58 = vcmask 261120
    %v60 = vsel %vm58, %v45, 0
    %v63 = vsel %vm58, %v46, 0
    %65 = vmatprep.subr.mxu0 0.0
    %66 = vmatpush1.msra.mxu0 %v47
    %67 = vmatprep.subr.mxu0 0.0
    %68 = vmatpush1.msra.mxu0 %v48
    %69 = vmatprep.subr.mxu0 0.0
    %70 = vmatpush1.msra.mxu0 %v49
    %71 = vmatprep.subr.mxu0 0.0
    %72 = vmatpush1.msra.mxu0 %v50
    %73 = vmatprep.subr.mxu0 0.0
    %74 = vmatpush1.msra.mxu0 0.0
    %75 = vmatprep.subr.mxu0 0.0
    %76 = vmatpush1.msra.mxu0 0.0
    %77 = vmatprep.subr.mxu0 0.0
    %78 = vmatpush1.msra.mxu0 0.0
    %79 = vmatprep.subr.mxu0 0.0
    %80 = vmatpush1.msra.mxu0 0.0
    %81 = vmatprep.subr.mxu0 0.0
    %82 = vmatpush1.msra.mxu0 0.0
    %83 = vmatprep.subr.mxu0 0.0
    %84 = vmatpush1.msra.mxu0 0.0
    %85 = vmatprep.subr.mxu0 0.0
    %86 = vmatpush1.msra.mxu0 0.0
    %87 = vmatprep.subr.mxu0 0.0
    %88 = vmatpush1.msra.mxu0 0.0
    %89 = vmatprep.subr.mxu0 0.0
    %90 = vmatpush1.msra.mxu0 0.0
    %91 = vmatprep.subr.mxu0 0.0
    %92 = vmatpush1.msra.mxu0 0.0
    %93 = vmatprep.subr.mxu0 0.0
    %94 = vmatpush1.msra.mxu0 0.0
    %95 = vmatprep.subr.mxu0 0.0
    %96 = vmatpush1.msra.mxu0 0.0
    %97 = vmatprep.subr.mxu0 0.0
    %98 = vmatpush1.msra.mxu0 0.0
    %99 = vmatprep.subr.mxu0 0.0
    %100 = vmatpush1.msra.mxu0 0.0
    %101 = vmatprep.subr.mxu0 0.0
    %102 = vmatpush1.msra.mxu0 0.0
    %103 = vmatprep.subr.mxu0 0.0
    %104 = vmatpush1.msra.mxu0 0.0
    %105 = vmatprep.subr.mxu0 0.0
    %106 = vmatpush1.msra.mxu0 0.0
    %107 = vmatprep.subr.mxu0 0.0
    %108 = vmatpush1.msra.mxu0 0.0
    %109 = vmatprep.subr.mxu0 0.0
    %110 = vmatpush1.msra.mxu0 0.0
    %111 = vmatprep.subr.mxu0 0.0
    %112 = vmatpush1.msra.mxu0 0.0
    %113 = vmatprep.subr.mxu0 0.0
    %114 = vmatpush1.msra.mxu0 0.0
    %115 = vmatprep.subr.mxu0 0.0
    %116 = vmatpush1.msra.mxu0 0.0
    %117 = vmatprep.subr.mxu0 0.0
    %118 = vmatpush1.msra.mxu0 0.0
    %119 = vmatprep.subr.mxu0 0.0
    %120 = vmatpush1.msra.mxu0 0.0
    %121 = vmatprep.subr.mxu0 0.0
    %122 = vmatpush1.msra.mxu0 0.0
    %123 = vmatprep.subr.mxu0 0.0
    %124 = vmatpush1.msra.mxu0 0.0
    %125 = vmatprep.subr.mxu0 0.0
    %126 = vmatpush1.msra.mxu0 0.0
    %127 = vmatprep.subr.mxu0 0.0
    %128 = vmatpush1.msra.mxu0 0.0
    %129 = vmatprep.mubr.f32.mxu0 0.0
    %130 = vmatmul.mubr.f32.gmra.mrb[0].mxu0 %v60
    %v131 = vpop.f32.mrb[0].mxu0
    %v132 = vadd.f32 %v56, %v131
    %v133 = vpop.f32.mrb[0].mxu0
    %134 = vmatprep.mubr.f32.mxu0 0.0
    %135 = vmatmul.mubr.f32.gmra.mrb[0].mxu0 %v63
    %v136 = vpop.f32.mrb[0].mxu0
    %v137 = vadd.f32 %v56, %v136
    %v138 = vpop.f32.mrb[0].mxu0
    %139 = vdwg.mxu0
    %141 = vrot.lane.b32.xlu0 %v132, 96
    %v142 = vpop.permute.xlu0 %141
    %vm143 = vcmask 64512
    %v144 = vsel %vm143, %v132, 0
    %v146 = vsel %vm143, %v142, 0
    %148 = vmatprep.subr.mxu0 0.0
    %149 = vmatpush1.xpose.msra.mxu0 %v146
    %150 = vmatprep.subr.mxu0 0.0
    %151 = vmatpush1.xpose.msra.mxu0 0.0
    %152 = vmatprep.subr.mxu0 0.0
    %153 = vmatpush1.xpose.msra.mxu0 0.0
    %154 = vmatprep.subr.mxu0 0.0
    %155 = vmatpush1.xpose.msra.mxu0 0.0
    %156 = vmatprep.subr.mxu0 0.0
    %157 = vmatpush1.xpose.msra.mxu0 0.0
    %158 = vmatprep.subr.mxu0 0.0
    %159 = vmatpush1.xpose.msra.mxu0 0.0
    %160 = vmatprep.subr.mxu0 0.0
    %161 = vmatpush1.xpose.msra.mxu0 0.0
    %162 = vmatprep.subr.mxu0 0.0
    %163 = vmatpush1.xpose.msra.mxu0 0.0
    %164 = vmatprep.subr.mxu0 0.0
    %165 = vmatpush1.xpose.msra.mxu0 0.0
    %166 = vmatprep.subr.mxu0 0.0
    %167 = vmatpush1.xpose.msra.mxu0 0.0
    %168 = vmatprep.subr.mxu0 0.0
    %169 = vmatpush1.xpose.msra.mxu0 0.0
    %170 = vmatprep.subr.mxu0 0.0
    %171 = vmatpush1.xpose.msra.mxu0 0.0
    %172 = vmatprep.subr.mxu0 0.0
    %173 = vmatpush1.xpose.msra.mxu0 0.0
    %174 = vmatprep.subr.mxu0 0.0
    %175 = vmatpush1.xpose.msra.mxu0 0.0
    %176 = vmatprep.subr.mxu0 0.0
    %177 = vmatpush1.xpose.msra.mxu0 0.0
    %178 = vmatprep.subr.mxu0 0.0
    %179 = vmatpush1.xpose.msra.mxu0 0.0
    %180 = vmatprep.subr.mxu0 0.0
    %181 = vmatpush1.xpose.msra.mxu0 0.0
    %182 = vmatprep.subr.mxu0 0.0
    %183 = vmatpush1.xpose.msra.mxu0 0.0
    %184 = vmatprep.subr.mxu0 0.0
    %185 = vmatpush1.xpose.msra.mxu0 0.0
    %186 = vmatprep.subr.mxu0 0.0
    %187 = vmatpush1.xpose.msra.mxu0 0.0
    %188 = vmatprep.subr.mxu0 0.0
    %189 = vmatpush1.xpose.msra.mxu0 0.0
    %190 = vmatprep.subr.mxu0 0.0
    %191 = vmatpush1.xpose.msra.mxu0 0.0
    %192 = vmatprep.subr.mxu0 0.0
    %193 = vmatpush1.xpose.msra.mxu0 0.0
    %194 = vmatprep.subr.mxu0 0.0
    %195 = vmatpush1.xpose.msra.mxu0 0.0
    %196 = vmatprep.subr.mxu0 0.0
    %197 = vmatpush1.xpose.msra.mxu0 0.0
    %198 = vmatprep.subr.mxu0 0.0
    %199 = vmatpush1.xpose.msra.mxu0 0.0
    %200 = vmatprep.subr.mxu0 0.0
    %201 = vmatpush1.xpose.msra.mxu0 0.0
    %202 = vmatprep.subr.mxu0 0.0
    %203 = vmatpush1.xpose.msra.mxu0 0.0
    %204 = vmatprep.subr.mxu0 0.0
    %205 = vmatpush1.xpose.msra.mxu0 0.0
    %206 = vmatprep.subr.mxu0 0.0
    %207 = vmatpush1.xpose.msra.mxu0 0.0
    %208 = vmatprep.subr.mxu0 0.0
    %209 = vmatpush1.xpose.msra.mxu0 0.0
    %210 = vmatprep.subr.mxu0 0.0
    %211 = vmatpush1.xpose.msra.mxu0 0.0
    %212 = vmatprep.mubr.f32.mxu0 0.0
    %213 = vmatmul.mubr.f32.gmra.mrb[0].mxu0 %v144
    %v214 = vpop.f32.mrb[0].mxu0
    %v215 = vadd.f32 0.0, %v214
    %v216 = vpop.f32.mrb[0].mxu0
    %217 = vdwg.mxu0
    %219 = vrot.lane.b32.xlu0 %v137, 96
    %v220 = vpop.permute.xlu0 %219
    %v221 = vsel %vm143, %v137, 0
    %v223 = vsel %vm143, %v220, 0
    %225 = vmatprep.subr.mxu0 0.0
    %226 = vmatpush1.xpose.msra.mxu0 %v223
    %227 = vmatprep.subr.mxu0 0.0
    %228 = vmatpush1.xpose.msra.mxu0 0.0
    %229 = vmatprep.subr.mxu0 0.0
    %230 = vmatpush1.xpose.msra.mxu0 0.0
    %231 = vmatprep.subr.mxu0 0.0
    %232 = vmatpush1.xpose.msra.mxu0 0.0
    %233 = vmatprep.subr.mxu0 0.0
    %234 = vmatpush1.xpose.msra.mxu0 0.0
    %235 = vmatprep.subr.mxu0 0.0
    %236 = vmatpush1.xpose.msra.mxu0 0.0
    %237 = vmatprep.subr.mxu0 0.0
    %238 = vmatpush1.xpose.msra.mxu0 0.0
    %239 = vmatprep.subr.mxu0 0.0
    %240 = vmatpush1.xpose.msra.mxu0 0.0
    %241 = vmatprep.subr.mxu0 0.0
    %242 = vmatpush1.xpose.msra.mxu0 0.0
    %243 = vmatprep.subr.mxu0 0.0
    %244 = vmatpush1.xpose.msra.mxu0 0.0
    %245 = vmatprep.subr.mxu0 0.0
    %246 = vmatpush1.xpose.msra.mxu0 0.0
    %247 = vmatprep.subr.mxu0 0.0
    %248 = vmatpush1.xpose.msra.mxu0 0.0
    %249 = vmatprep.subr.mxu0 0.0
    %250 = vmatpush1.xpose.msra.mxu0 0.0
    %251 = vmatprep.subr.mxu0 0.0
    %252 = vmatpush1.xpose.msra.mxu0 0.0
    %253 = vmatprep.subr.mxu0 0.0
    %254 = vmatpush1.xpose.msra.mxu0 0.0
    %255 = vmatprep.subr.mxu0 0.0
    %256 = vmatpush1.xpose.msra.mxu0 0.0
    %257 = vmatprep.subr.mxu0 0.0
    %258 = vmatpush1.xpose.msra.mxu0 0.0
    %259 = vmatprep.subr.mxu0 0.0
    %260 = vmatpush1.xpose.msra.mxu0 0.0
    %261 = vmatprep.subr.mxu0 0.0
    %262 = vmatpush1.xpose.msra.mxu0 0.0
    %263 = vmatprep.subr.mxu0 0.0
    %264 = vmatpush1.xpose.msra.mxu0 0.0
    %265 = vmatprep.subr.mxu0 0.0
    %266 = vmatpush1.xpose.msra.mxu0 0.0
    %267 = vmatprep.subr.mxu0 0.0
    %268 = vmatpush1.xpose.msra.mxu0 0.0
    %269 = vmatprep.subr.mxu0 0.0
    %270 = vmatpush1.xpose.msra.mxu0 0.0
    %271 = vmatprep.subr.mxu0 0.0
    %272 = vmatpush1.xpose.msra.mxu0 0.0
    %273 = vmatprep.subr.mxu0 0.0
    %274 = vmatpush1.xpose.msra.mxu0 0.0
    %275 = vmatprep.subr.mxu0 0.0
    %276 = vmatpush1.xpose.msra.mxu0 0.0
    %277 = vmatprep.subr.mxu0 0.0
    %278 = vmatpush1.xpose.msra.mxu0 0.0
    %279 = vmatprep.subr.mxu0 0.0
    %280 = vmatpush1.xpose.msra.mxu0 0.0
    %281 = vmatprep.subr.mxu0 0.0
    %282 = vmatpush1.xpose.msra.mxu0 0.0
    %283 = vmatprep.subr.mxu0 0.0
    %284 = vmatpush1.xpose.msra.mxu0 0.0
    %285 = vmatprep.subr.mxu0 0.0
    %286 = vmatpush1.xpose.msra.mxu0 0.0
    %287 = vmatprep.subr.mxu0 0.0
    %288 = vmatpush1.xpose.msra.mxu0 0.0
    %289 = vmatprep.mubr.f32.mxu0 0.0
    %290 = vmatmul.mubr.f32.gmra.mrb[0].mxu0 %v221
    %v291 = vpop.f32.mrb[0].mxu0
    %v292 = vadd.f32 0.0, %v291
    %v293 = vpop.f32.mrb[0].mxu0
    %294 = vdwg.mxu0
    %v295 = vmul.f32 %v215, 0.35355338
    %v296 = vmul.f32 %v292, 0.35355338
    %v297 = vsel %vm143, %v295, -inf
    %298 = vmax.xlane.f32.xlu0 %v297
    %v299 = vpop.xlane.xlu0 %298
    %v300 = vsel %vm143, %v296, -inf
    %301 = vmax.xlane.f32.xlu0 %v300
    %v302 = vpop.xlane.xlu0 %301
    %v303 = vsub.f32 %v295, %v299
    %v304 = vsub.f32 %v296, %v302
    %v305 = vmul.f32 %v303, 1.442695
    %v306 = vpow.pop %v305
    %v307 = vmul.f32 %v304, 1.442695
    %v308 = vpow.pop %v307
    %v309 = vsel %vm143, %v306, 0.0
    %310 = vadd.xlane.f32.xlu0 %v309
    %v311 = vpop.xlane.xlu0 %310
    %v312 = vsel %vm143, %v308, 0.0
    %313 = vadd.xlane.f32.xlu0 %v312
    %v314 = vpop.xlane.xlu0 %313
    %v315 = vrcp.pop %v311
    %v316 = vmul.f32 %v306, %v315
    %v317 = vrcp.pop %v314
    %v318 = vmul.f32 %v308, %v317
    %319 = vrot.lane.b32.xlu0 %v132, 64
    %v320 = vpop.permute.xlu0 %319
    %v323 = vsel %vm143, %v316, 0
    %325 = vmatprep.subr.mxu0 0.0
    %326 = vmatpush1.msra.mxu0 %v320
    %327 = vmatprep.subr.mxu0 0.0
    %328 = vmatpush1.msra.mxu0 0.0
    %329 = vmatprep.subr.mxu0 0.0
    %330 = vmatpush1.msra.mxu0 0.0
    %331 = vmatprep.subr.mxu0 0.0
    %332 = vmatpush1.msra.mxu0 0.0
    %333 = vmatprep.subr.mxu0 0.0
    %334 = vmatpush1.msra.mxu0 0.0
    %335 = vmatprep.subr.mxu0 0.0
    %336 = vmatpush1.msra.mxu0 0.0
    %337 = vmatprep.subr.mxu0 0.0
    %338 = vmatpush1.msra.mxu0 0.0
    %339 = vmatprep.subr.mxu0 0.0
    %340 = vmatpush1.msra.mxu0 0.0
    %341 = vmatprep.subr.mxu0 0.0
    %342 = vmatpush1.msra.mxu0 0.0
    %343 = vmatprep.subr.mxu0 0.0
    %344 = vmatpush1.msra.mxu0 0.0
    %345 = vmatprep.subr.mxu0 0.0
    %346 = vmatpush1.msra.mxu0 0.0
    %347 = vmatprep.subr.mxu0 0.0
    %348 = vmatpush1.msra.mxu0 0.0
    %349 = vmatprep.subr.mxu0 0.0
    %350 = vmatpush1.msra.mxu0 0.0
    %351 = vmatprep.subr.mxu0 0.0
    %352 = vmatpush1.msra.mxu0 0.0
    %353 = vmatprep.subr.mxu0 0.0
    %354 = vmatpush1.msra.mxu0 0.0
    %355 = vmatprep.subr.mxu0 0.0
    %356 = vmatpush1.msra.mxu0 0.0
    %357 = vmatprep.subr.mxu0 0.0
    %358 = vmatpush1.msra.mxu0 0.0
    %359 = vmatprep.subr.mxu0 0.0
    %360 = vmatpush1.msra.mxu0 0.0
    %361 = vmatprep.subr.mxu0 0.0
    %362 = vmatpush1.msra.mxu0 0.0
    %363 = vmatprep.subr.mxu0 0.0
    %364 = vmatpush1.msra.mxu0 0.0
    %365 = vmatprep.subr.mxu0 0.0
    %366 = vmatpush1.msra.mxu0 0.0
    %367 = vmatprep.subr.mxu0 0.0
    %368 = vmatpush1.msra.mxu0 0.0
    %369 = vmatprep.subr.mxu0 0.0
    %370 = vmatpush1.msra.mxu0 0.0
    %371 = vmatprep.subr.mxu0 0.0
    %372 = vmatpush1.msra.mxu0 0.0
    %373 = vmatprep.subr.mxu0 0.0
    %374 = vmatpush1.msra.mxu0 0.0
    %375 = vmatprep.subr.mxu0 0.0
    %376 = vmatpush1.msra.mxu0 0.0
    %377 = vmatprep.subr.mxu0 0.0
    %378 = vmatpush1.msra.mxu0 0.0
    %379 = vmatprep.subr.mxu0 0.0
    %380 = vmatpush1.msra.mxu0 0.0
    %381 = vmatprep.subr.mxu0 0.0
    %382 = vmatpush1.msra.mxu0 0.0
    %383 = vmatprep.subr.mxu0 0.0
    %384 = vmatpush1.msra.mxu0 0.0
    %385 = vmatprep.subr.mxu0 0.0
    %386 = vmatpush1.msra.mxu0 0.0
    %387 = vmatprep.subr.mxu0 0.0
    %388 = vmatpush1.msra.mxu0 0.0
    %389 = vmatprep.mubr.f32.mxu0 0.0
    %390 = vmatmul.mubr.f32.gmra.mrb[0].mxu0 %v323
    %v391 = vpop.f32.mrb[0].mxu0
    %v392 = vadd.f32 0.0, %v391
    %v393 = vpop.f32.mrb[0].mxu0
    %394 = vdwg.mxu0
    %395 = vrot.lane.b32.xlu0 %v137, 64
    %v396 = vpop.permute.xlu0 %395
    %v399 = vsel %vm143, %v318, 0
    %401 = vmatprep.subr.mxu0 0.0
    %402 = vmatpush1.msra.mxu0 %v396
    %403 = vmatprep.subr.mxu0 0.0
    %404 = vmatpush1.msra.mxu0 0.0
    %405 = vmatprep.subr.mxu0 0.0
    %406 = vmatpush1.msra.mxu0 0.0
    %407 = vmatprep.subr.mxu0 0.0
    %408 = vmatpush1.msra.mxu0 0.0
    %409 = vmatprep.subr.mxu0 0.0
    %410 = vmatpush1.msra.mxu0 0.0
    %411 = vmatprep.subr.mxu0 0.0
    %412 = vmatpush1.msra.mxu0 0.0
    %413 = vmatprep.subr.mxu0 0.0
    %414 = vmatpush1.msra.mxu0 0.0
    %415 = vmatprep.subr.mxu0 0.0
    %416 = vmatpush1.msra.mxu0 0.0
    %417 = vmatprep.subr.mxu0 0.0
    %418 = vmatpush1.msra.mxu0 0.0
    %419 = vmatprep.subr.mxu0 0.0
    %420 = vmatpush1.msra.mxu0 0.0
    %421 = vmatprep.subr.mxu0 0.0
    %422 = vmatpush1.msra.mxu0 0.0
    %423 = vmatprep.subr.mxu0 0.0
    %424 = vmatpush1.msra.mxu0 0.0
    %425 = vmatprep.subr.mxu0 0.0
    %426 = vmatpush1.msra.mxu0 0.0
    %427 = vmatprep.subr.mxu0 0.0
    %428 = vmatpush1.msra.mxu0 0.0
    %429 = vmatprep.subr.mxu0 0.0
    %430 = vmatpush1.msra.mxu0 0.0
    %431 = vmatprep.subr.mxu0 0.0
    %432 = vmatpush1.msra.mxu0 0.0
    %433 = vmatprep.subr.mxu0 0.0
    %434 = vmatpush1.msra.mxu0 0.0
    %435 = vmatprep.subr.mxu0 0.0
    %436 = vmatpush1.msra.mxu0 0.0
    %437 = vmatprep.subr.mxu0 0.0
    %438 = vmatpush1.msra.mxu0 0.0
    %439 = vmatprep.subr.mxu0 0.0
    %440 = vmatpush1.msra.mxu0 0.0
    %441 = vmatprep.subr.mxu0 0.0
    %442 = vmatpush1.msra.mxu0 0.0
    %443 = vmatprep.subr.mxu0 0.0
    %444 = vmatpush1.msra.mxu0 0.0
    %445 = vmatprep.subr.mxu0 0.0
    %446 = vmatpush1.msra.mxu0 0.0
    %447 = vmatprep.subr.mxu0 0.0
    %448 = vmatpush1.msra.mxu0 0.0
    %449 = vmatprep.subr.mxu0 0.0
    %450 = vmatpush1.msra.mxu0 0.0
    %451 = vmatprep.subr.mxu0 0.0
    %452 = vmatpush1.msra.mxu0 0.0
    %453 = vmatprep.subr.mxu0 0.0
    %454 = vmatpush1.msra.mxu0 0.0
    %455 = vmatprep.subr.mxu0 0.0
    %456 = vmatpush1.msra.mxu0 0.0
    %457 = vmatprep.subr.mxu0 0.0
    %458 = vmatpush1.msra.mxu0 0.0
    %459 = vmatprep.subr.mxu0 0.0
    %460 = vmatpush1.msra.mxu0 0.0
    %461 = vmatprep.subr.mxu0 0.0
    %462 = vmatpush1.msra.mxu0 0.0
    %463 = vmatprep.subr.mxu0 0.0
    %464 = vmatpush1.msra.mxu0 0.0
    %465 = vmatprep.mubr.f32.mxu0 0.0
    %466 = vmatmul.mubr.f32.gmra.mrb[0].mxu0 %v399
    %v467 = vpop.f32.mrb[0].mxu0
    %v468 = vadd.f32 0.0, %v467
    %v469 = vpop.f32.mrb[0].mxu0
    %470 = vdwg.mxu0
    %471 = vrot.lane.b32.xlu0 %v132, 120
    %v472 = vpop.permute.xlu0 %471
    %473 = vrot.lane.b32.xlu0 %v132, 88
    %v474 = vpop.permute.xlu0 %473
    %v475 = vsel %vm143, %v472, 0
    %v477 = vsel %vm143, %v474, 0
    %479 = vmatprep.subr.mxu0 0.0
    %480 = vmatpush1.xpose.msra.mxu0 %v477
    %481 = vmatprep.subr.mxu0 0.0
    %482 = vmatpush1.xpose.msra.mxu0 0.0
    %483 = vmatprep.subr.mxu0 0.0
    %484 = vmatpush1.xpose.msra.mxu0 0.0
    %485 = vmatprep.subr.mxu0 0.0
    %486 = vmatpush1.xpose.msra.mxu0 0.0
    %487 = vmatprep.subr.mxu0 0.0
    %488 = vmatpush1.xpose.msra.mxu0 0.0
    %489 = vmatprep.subr.mxu0 0.0
    %490 = vmatpush1.xpose.msra.mxu0 0.0
    %491 = vmatprep.subr.mxu0 0.0
    %492 = vmatpush1.xpose.msra.mxu0 0.0
    %493 = vmatprep.subr.mxu0 0.0
    %494 = vmatpush1.xpose.msra.mxu0 0.0
    %495 = vmatprep.subr.mxu0 0.0
    %496 = vmatpush1.xpose.msra.mxu0 0.0
    %497 = vmatprep.subr.mxu0 0.0
    %498 = vmatpush1.xpose.msra.mxu0 0.0
    %499 = vmatprep.subr.mxu0 0.0
    %500 = vmatpush1.xpose.msra.mxu0 0.0
    %501 = vmatprep.subr.mxu0 0.0
    %502 = vmatpush1.xpose.msra.mxu0 0.0
    %503 = vmatprep.subr.mxu0 0.0
    %504 = vmatpush1.xpose.msra.mxu0 0.0
    %505 = vmatprep.subr.mxu0 0.0
    %506 = vmatpush1.xpose.msra.mxu0 0.0
    %507 = vmatprep.subr.mxu0 0.0
    %508 = vmatpush1.xpose.msra.mxu0 0.0
    %509 = vmatprep.subr.mxu0 0.0
    %510 = vmatpush1.xpose.msra.mxu0 0.0
    %511 = vmatprep.subr.mxu0 0.0
    %512 = vmatpush1.xpose.msra.mxu0 0.0
    %513 = vmatprep.subr.mxu0 0.0
    %514 = vmatpush1.xpose.msra.mxu0 0.0
    %515 = vmatprep.subr.mxu0 0.0
    %516 = vmatpush1.xpose.msra.mxu0 0.0
    %517 = vmatprep.subr.mxu0 0.0
    %518 = vmatpush1.xpose.msra.mxu0 0.0
    %519 = vmatprep.subr.mxu0 0.0
    %520 = vmatpush1.xpose.msra.mxu0 0.0
    %521 = vmatprep.subr.mxu0 0.0
    %522 = vmatpush1.xpose.msra.mxu0 0.0
    %523 = vmatprep.subr.mxu0 0.0
    %524 = vmatpush1.xpose.msra.mxu0 0.0
    %525 = vmatprep.subr.mxu0 0.0
    %526 = vmatpush1.xpose.msra.mxu0 0.0
    %527 = vmatprep.subr.mxu0 0.0
    %528 = vmatpush1.xpose.msra.mxu0 0.0
    %529 = vmatprep.subr.mxu0 0.0
    %530 = vmatpush1.xpose.msra.mxu0 0.0
    %531 = vmatprep.subr.mxu0 0.0
    %532 = vmatpush1.xpose.msra.mxu0 0.0
    %533 = vmatprep.subr.mxu0 0.0
    %534 = vmatpush1.xpose.msra.mxu0 0.0
    %535 = vmatprep.subr.mxu0 0.0
    %536 = vmatpush1.xpose.msra.mxu0 0.0
    %537 = vmatprep.subr.mxu0 0.0
    %538 = vmatpush1.xpose.msra.mxu0 0.0
    %539 = vmatprep.subr.mxu0 0.0
    %540 = vmatpush1.xpose.msra.mxu0 0.0
    %541 = vmatprep.subr.mxu0 0.0
    %542 = vmatpush1.xpose.msra.mxu0 0.0
    %543 = vmatprep.mubr.f32.mxu0 0.0
    %544 = vmatmul.mubr.f32.gmra.mrb[0].mxu0 %v475
    %v545 = vpop.f32.mrb[0].mxu0
    %v546 = vadd.f32 0.0, %v545
    %v547 = vpop.f32.mrb[0].mxu0
    %548 = vdwg.mxu0
    %549 = vrot.lane.b32.xlu0 %v137, 120
    %v550 = vpop.permute.xlu0 %549
    %551 = vrot.lane.b32.xlu0 %v137, 88
    %v552 = vpop.permute.xlu0 %551
    %v553 = vsel %vm143, %v550, 0
    %v555 = vsel %vm143, %v552, 0
    %557 = vmatprep.subr.mxu0 0.0
    %558 = vmatpush1.xpose.msra.mxu0 %v555
    %559 = vmatprep.subr.mxu0 0.0
    %560 = vmatpush1.xpose.msra.mxu0 0.0
    %561 = vmatprep.subr.mxu0 0.0
    %562 = vmatpush1.xpose.msra.mxu0 0.0
    %563 = vmatprep.subr.mxu0 0.0
    %564 = vmatpush1.xpose.msra.mxu0 0.0
    %565 = vmatprep.subr.mxu0 0.0
    %566 = vmatpush1.xpose.msra.mxu0 0.0
    %567 = vmatprep.subr.mxu0 0.0
    %568 = vmatpush1.xpose.msra.mxu0 0.0
    %569 = vmatprep.subr.mxu0 0.0
    %570 = vmatpush1.xpose.msra.mxu0 0.0
    %571 = vmatprep.subr.mxu0 0.0
    %572 = vmatpush1.xpose.msra.mxu0 0.0
    %573 = vmatprep.subr.mxu0 0.0
    %574 = vmatpush1.xpose.msra.mxu0 0.0
    %575 = vmatprep.subr.mxu0 0.0
    %576 = vmatpush1.xpose.msra.mxu0 0.0
    %577 = vmatprep.subr.mxu0 0.0
    %578 = vmatpush1.xpose.msra.mxu0 0.0
    %579 = vmatprep.subr.mxu0 0.0
    %580 = vmatpush1.xpose.msra.mxu0 0.0
    %581 = vmatprep.subr.mxu0 0.0
    %582 = vmatpush1.xpose.msra.mxu0 0.0
    %583 = vmatprep.subr.mxu0 0.0
    %584 = vmatpush1.xpose.msra.mxu0 0.0
    %585 = vmatprep.subr.mxu0 0.0
    %586 = vmatpush1.xpose.msra.mxu0 0.0
    %587 = vmatprep.subr.mxu0 0.0
    %588 = vmatpush1.xpose.msra.mxu0 0.0
    %589 = vmatprep.subr.mxu0 0.0
    %590 = vmatpush1.xpose.msra.mxu0 0.0
    %591 = vmatprep.subr.mxu0 0.0
    %592 = vmatpush1.xpose.msra.mxu0 0.0
    %593 = vmatprep.subr.mxu0 0.0
    %594 = vmatpush1.xpose.msra.mxu0 0.0
    %595 = vmatprep.subr.mxu0 0.0
    %596 = vmatpush1.xpose.msra.mxu0 0.0
    %597 = vmatprep.subr.mxu0 0.0
    %598 = vmatpush1.xpose.msra.mxu0 0.0
    %599 = vmatprep.subr.mxu0 0.0
    %600 = vmatpush1.xpose.msra.mxu0 0.0
    %601 = vmatprep.subr.mxu0 0.0
    %602 = vmatpush1.xpose.msra.mxu0 0.0
    %603 = vmatprep.subr.mxu0 0.0
    %604 = vmatpush1.xpose.msra.mxu0 0.0
    %605 = vmatprep.subr.mxu0 0.0
    %606 = vmatpush1.xpose.msra.mxu0 0.0
    %607 = vmatprep.subr.mxu0 0.0
    %608 = vmatpush1.xpose.msra.mxu0 0.0
    %609 = vmatprep.subr.mxu0 0.0
    %610 = vmatpush1.xpose.msra.mxu0 0.0
    %611 = vmatprep.subr.mxu0 0.0
    %612 = vmatpush1.xpose.msra.mxu0 0.0
    %613 = vmatprep.subr.mxu0 0.0
    %614 = vmatpush1.xpose.msra.mxu0 0.0
    %615 = vmatprep.subr.mxu0 0.0
    %616 = vmatpush1.xpose.msra.mxu0 0.0
    %617 = vmatprep.subr.mxu0 0.0
    %618 = vmatpush1.xpose.msra.mxu0 0.0
    %619 = vmatprep.subr.mxu0 0.0
    %620 = vmatpush1.xpose.msra.mxu0 0.0
    %621 = vmatprep.mubr.f32.mxu0 0.0
    %622 = vmatmul.mubr.f32.gmra.mrb[0].mxu0 %v553
    %v623 = vpop.f32.mrb[0].mxu0
    %v624 = vadd.f32 0.0, %v623
    %v625 = vpop.f32.mrb[0].mxu0
    %626 = vdwg.mxu0
    %v627 = vmul.f32 %v546, 0.35355338
    %v628 = vmul.f32 %v624, 0.35355338
    %v629 = vsel %vm143, %v627, -inf
    %630 = vmax.xlane.f32.xlu0 %v629
    %v631 = vpop.xlane.xlu0 %630
    %v632 = vsel %vm143, %v628, -inf
    %633 = vmax.xlane.f32.xlu0 %v632
    %v634 = vpop.xlane.xlu0 %633
    %v635 = vsub.f32 %v627, %v631
    %v636 = vsub.f32 %v628, %v634
    %v637 = vmul.f32 %v635, 1.442695
    %v638 = vpow.pop %v637
    %v639 = vmul.f32 %v636, 1.442695
    %v640 = vpow.pop %v639
    %v641 = vsel %vm143, %v638, 0.0
    %642 = vadd.xlane.f32.xlu0 %v641
    %v643 = vpop.xlane.xlu0 %642
    %v644 = vsel %vm143, %v640, 0.0
    %645 = vadd.xlane.f32.xlu0 %v644
    %v646 = vpop.xlane.xlu0 %645
    %v647 = vrcp.pop %v643
    %v648 = vmul.f32 %v638, %v647
    %v649 = vrcp.pop %v646
    %v650 = vmul.f32 %v640, %v649
    %651 = vrot.lane.b32.xlu0 %v132, 56
    %v652 = vpop.permute.xlu0 %651
    %v655 = vsel %vm143, %v648, 0
    %657 = vmatprep.subr.mxu0 0.0
    %658 = vmatpush1.msra.mxu0 %v652
    %659 = vmatprep.subr.mxu0 0.0
    %660 = vmatpush1.msra.mxu0 0.0
    %661 = vmatprep.subr.mxu0 0.0
    %662 = vmatpush1.msra.mxu0 0.0
    %663 = vmatprep.subr.mxu0 0.0
    %664 = vmatpush1.msra.mxu0 0.0
    %665 = vmatprep.subr.mxu0 0.0
    %666 = vmatpush1.msra.mxu0 0.0
    %667 = vmatprep.subr.mxu0 0.0
    %668 = vmatpush1.msra.mxu0 0.0
    %669 = vmatprep.subr.mxu0 0.0
    %670 = vmatpush1.msra.mxu0 0.0
    %671 = vmatprep.subr.mxu0 0.0
    %672 = vmatpush1.msra.mxu0 0.0
    %673 = vmatprep.subr.mxu0 0.0
    %674 = vmatpush1.msra.mxu0 0.0
    %675 = vmatprep.subr.mxu0 0.0
    %676 = vmatpush1.msra.mxu0 0.0
    %677 = vmatprep.subr.mxu0 0.0
    %678 = vmatpush1.msra.mxu0 0.0
    %679 = vmatprep.subr.mxu0 0.0
    %680 = vmatpush1.msra.mxu0 0.0
    %681 = vmatprep.subr.mxu0 0.0
    %682 = vmatpush1.msra.mxu0 0.0
    %683 = vmatprep.subr.mxu0 0.0
    %684 = vmatpush1.msra.mxu0 0.0
    %685 = vmatprep.subr.mxu0 0.0
    %686 = vmatpush1.msra.mxu0 0.0
    %687 = vmatprep.subr.mxu0 0.0
    %688 = vmatpush1.msra.mxu0 0.0
    %689 = vmatprep.subr.mxu0 0.0
    %690 = vmatpush1.msra.mxu0 0.0
    %691 = vmatprep.subr.mxu0 0.0
    %692 = vmatpush1.msra.mxu0 0.0
    %693 = vmatprep.subr.mxu0 0.0
    %694 = vmatpush1.msra.mxu0 0.0
    %695 = vmatprep.subr.mxu0 0.0
    %696 = vmatpush1.msra.mxu0 0.0
    %697 = vmatprep.subr.mxu0 0.0
    %698 = vmatpush1.msra.mxu0 0.0
    %699 = vmatprep.subr.mxu0 0.0
    %700 = vmatpush1.msra.mxu0 0.0
    %701 = vmatprep.subr.mxu0 0.0
    %702 = vmatpush1.msra.mxu0 0.0
    %703 = vmatprep.subr.mxu0 0.0
    %704 = vmatpush1.msra.mxu0 0.0
    %705 = vmatprep.subr.mxu0 0.0
    %706 = vmatpush1.msra.mxu0 0.0
    %707 = vmatprep.subr.mxu0 0.0
    %708 = vmatpush1.msra.mxu0 0.0
    %709 = vmatprep.subr.mxu0 0.0
    %710 = vmatpush1.msra.mxu0 0.0
    %711 = vmatprep.subr.mxu0 0.0
    %712 = vmatpush1.msra.mxu0 0.0
    %713 = vmatprep.subr.mxu0 0.0
    %714 = vmatpush1.msra.mxu0 0.0
    %715 = vmatprep.subr.mxu0 0.0
    %716 = vmatpush1.msra.mxu0 0.0
    %717 = vmatprep.subr.mxu0 0.0
    %718 = vmatpush1.msra.mxu0 0.0
    %719 = vmatprep.subr.mxu0 0.0
    %720 = vmatpush1.msra.mxu0 0.0
    %721 = vmatprep.mubr.f32.mxu0 0.0
    %722 = vmatmul.mubr.f32.gmra.mrb[0].mxu0 %v655
    %v723 = vpop.f32.mrb[0].mxu0
    %v724 = vadd.f32 0.0, %v723
    %v725 = vpop.f32.mrb[0].mxu0
    %726 = vdwg.mxu0
    %727 = vrot.lane.b32.xlu0 %v137, 56
    %v728 = vpop.permute.xlu0 %727
    %v731 = vsel %vm143, %v650, 0
    %733 = vmatprep.subr.mxu0 0.0
    %734 = vmatpush1.msra.mxu0 %v728
    %735 = vmatprep.subr.mxu0 0.0
    %736 = vmatpush1.msra.mxu0 0.0
    %737 = vmatprep.subr.mxu0 0.0
    %738 = vmatpush1.msra.mxu0 0.0
    %739 = vmatprep.subr.mxu0 0.0
    %740 = vmatpush1.msra.mxu0 0.0
    %741 = vmatprep.subr.mxu0 0.0
    %742 = vmatpush1.msra.mxu0 0.0
    %743 = vmatprep.subr.mxu0 0.0
    %744 = vmatpush1.msra.mxu0 0.0
    %745 = vmatprep.subr.mxu0 0.0
    %746 = vmatpush1.msra.mxu0 0.0
    %747 = vmatprep.subr.mxu0 0.0
    %748 = vmatpush1.msra.mxu0 0.0
    %749 = vmatprep.subr.mxu0 0.0
    %750 = vmatpush1.msra.mxu0 0.0
    %751 = vmatprep.subr.mxu0 0.0
    %752 = vmatpush1.msra.mxu0 0.0
    %753 = vmatprep.subr.mxu0 0.0
    %754 = vmatpush1.msra.mxu0 0.0
    %755 = vmatprep.subr.mxu0 0.0
    %756 = vmatpush1.msra.mxu0 0.0
    %757 = vmatprep.subr.mxu0 0.0
    %758 = vmatpush1.msra.mxu0 0.0
    %759 = vmatprep.subr.mxu0 0.0
    %760 = vmatpush1.msra.mxu0 0.0
    %761 = vmatprep.subr.mxu0 0.0
    %762 = vmatpush1.msra.mxu0 0.0
    %763 = vmatprep.subr.mxu0 0.0
    %764 = vmatpush1.msra.mxu0 0.0
    %765 = vmatprep.subr.mxu0 0.0
    %766 = vmatpush1.msra.mxu0 0.0
    %767 = vmatprep.subr.mxu0 0.0
    %768 = vmatpush1.msra.mxu0 0.0
    %769 = vmatprep.subr.mxu0 0.0
    %770 = vmatpush1.msra.mxu0 0.0
    %771 = vmatprep.subr.mxu0 0.0
    %772 = vmatpush1.msra.mxu0 0.0
    %773 = vmatprep.subr.mxu0 0.0
    %774 = vmatpush1.msra.mxu0 0.0
    %775 = vmatprep.subr.mxu0 0.0
    %776 = vmatpush1.msra.mxu0 0.0
    %777 = vmatprep.subr.mxu0 0.0
    %778 = vmatpush1.msra.mxu0 0.0
    %779 = vmatprep.subr.mxu0 0.0
    %780 = vmatpush1.msra.mxu0 0.0
    %781 = vmatprep.subr.mxu0 0.0
    %782 = vmatpush1.msra.mxu0 0.0
    %783 = vmatprep.subr.mxu0 0.0
    %784 = vmatpush1.msra.mxu0 0.0
    %785 = vmatprep.subr.mxu0 0.0
    %786 = vmatpush1.msra.mxu0 0.0
    %787 = vmatprep.subr.mxu0 0.0
    %788 = vmatpush1.msra.mxu0 0.0
    %789 = vmatprep.subr.mxu0 0.0
    %790 = vmatpush1.msra.mxu0 0.0
    %791 = vmatprep.subr.mxu0 0.0
    %792 = vmatpush1.msra.mxu0 0.0
    %793 = vmatprep.subr.mxu0 0.0
    %794 = vmatpush1.msra.mxu0 0.0
    %795 = vmatprep.subr.mxu0 0.0
    %796 = vmatpush1.msra.mxu0 0.0
    %797 = vmatprep.mubr.f32.mxu0 0.0
    %798 = vmatmul.mubr.f32.gmra.mrb[0].mxu0 %v731
    %v799 = vpop.f32.mrb[0].mxu0
    %v800 = vadd.f32 0.0, %v799
    %v801 = vpop.f32.mrb[0].mxu0
    %802 = vdwg.mxu0
    %803 = vrot.lane.b32.xlu0 %v132, 112
    %v804 = vpop.permute.xlu0 %803
    %805 = vrot.lane.b32.xlu0 %v132, 80
    %v806 = vpop.permute.xlu0 %805
    %v807 = vsel %vm143, %v804, 0
    %v809 = vsel %vm143, %v806, 0
    %811 = vmatprep.subr.mxu0 0.0
    %812 = vmatpush1.xpose.msra.mxu0 %v809
    %813 = vmatprep.subr.mxu0 0.0
    %814 = vmatpush1.xpose.msra.mxu0 0.0
    %815 = vmatprep.subr.mxu0 0.0
    %816 = vmatpush1.xpose.msra.mxu0 0.0
    %817 = vmatprep.subr.mxu0 0.0
    %818 = vmatpush1.xpose.msra.mxu0 0.0
    %819 = vmatprep.subr.mxu0 0.0
    %820 = vmatpush1.xpose.msra.mxu0 0.0
    %821 = vmatprep.subr.mxu0 0.0
    %822 = vmatpush1.xpose.msra.mxu0 0.0
    %823 = vmatprep.subr.mxu0 0.0
    %824 = vmatpush1.xpose.msra.mxu0 0.0
    %825 = vmatprep.subr.mxu0 0.0
    %826 = vmatpush1.xpose.msra.mxu0 0.0
    %827 = vmatprep.subr.mxu0 0.0
    %828 = vmatpush1.xpose.msra.mxu0 0.0
    %829 = vmatprep.subr.mxu0 0.0
    %830 = vmatpush1.xpose.msra.mxu0 0.0
    %831 = vmatprep.subr.mxu0 0.0
    %832 = vmatpush1.xpose.msra.mxu0 0.0
    %833 = vmatprep.subr.mxu0 0.0
    %834 = vmatpush1.xpose.msra.mxu0 0.0
    %835 = vmatprep.subr.mxu0 0.0
    %836 = vmatpush1.xpose.msra.mxu0 0.0
    %837 = vmatprep.subr.mxu0 0.0
    %838 = vmatpush1.xpose.msra.mxu0 0.0
    %839 = vmatprep.subr.mxu0 0.0
    %840 = vmatpush1.xpose.msra.mxu0 0.0
    %841 = vmatprep.subr.mxu0 0.0
    %842 = vmatpush1.xpose.msra.mxu0 0.0
    %843 = vmatprep.subr.mxu0 0.0
    %844 = vmatpush1.xpose.msra.mxu0 0.0
    %845 = vmatprep.subr.mxu0 0.0
    %846 = vmatpush1.xpose.msra.mxu0 0.0
    %847 = vmatprep.subr.mxu0 0.0
    %848 = vmatpush1.xpose.msra.mxu0 0.0
    %849 = vmatprep.subr.mxu0 0.0
    %850 = vmatpush1.xpose.msra.mxu0 0.0
    %851 = vmatprep.subr.mxu0 0.0
    %852 = vmatpush1.xpose.msra.mxu0 0.0
    %853 = vmatprep.subr.mxu0 0.0
    %854 = vmatpush1.xpose.msra.mxu0 0.0
    %855 = vmatprep.subr.mxu0 0.0
    %856 = vmatpush1.xpose.msra.mxu0 0.0
    %857 = vmatprep.subr.mxu0 0.0
    %858 = vmatpush1.xpose.msra.mxu0 0.0
    %859 = vmatprep.subr.mxu0 0.0
    %860 = vmatpush1.xpose.msra.mxu0 0.0
    %861 = vmatprep.subr.mxu0 0.0
    %862 = vmatpush1.xpose.msra.mxu0 0.0
    %863 = vmatprep.subr.mxu0 0.0
    %864 = vmatpush1.xpose.msra.mxu0 0.0
    %865 = vmatprep.subr.mxu0 0.0
    %866 = vmatpush1.xpose.msra.mxu0 0.0
    %867 = vmatprep.subr.mxu0 0.0
    %868 = vmatpush1.xpose.msra.mxu0 0.0
    %869 = vmatprep.subr.mxu0 0.0
    %870 = vmatpush1.xpose.msra.mxu0 0.0
    %871 = vmatprep.subr.mxu0 0.0
    %872 = vmatpush1.xpose.msra.mxu0 0.0
    %873 = vmatprep.subr.mxu0 0.0
    %874 = vmatpush1.xpose.msra.mxu0 0.0
    %875 = vmatprep.mubr.f32.mxu0 0.0
    %876 = vmatmul.mubr.f32.gmra.mrb[0].mxu0 %v807
    %v877 = vpop.f32.mrb[0].mxu0
    %v878 = vadd.f32 0.0, %v877
    %v879 = vpop.f32.mrb[0].mxu0
    %880 = vdwg.mxu0
    %881 = vrot.lane.b32.xlu0 %v137, 112
    %v882 = vpop.permute.xlu0 %881
    %883 = vrot.lane.b32.xlu0 %v137, 80
    %v884 = vpop.permute.xlu0 %883
    %v885 = vsel %vm143, %v882, 0
    %v887 = vsel %vm143, %v884, 0
    %889 = vmatprep.subr.mxu0 0.0
    %890 = vmatpush1.xpose.msra.mxu0 %v887
    %891 = vmatprep.subr.mxu0 0.0
    %892 = vmatpush1.xpose.msra.mxu0 0.0
    %893 = vmatprep.subr.mxu0 0.0
    %894 = vmatpush1.xpose.msra.mxu0 0.0
    %895 = vmatprep.subr.mxu0 0.0
    %896 = vmatpush1.xpose.msra.mxu0 0.0
    %897 = vmatprep.subr.mxu0 0.0
    %898 = vmatpush1.xpose.msra.mxu0 0.0
    %899 = vmatprep.subr.mxu0 0.0
    %900 = vmatpush1.xpose.msra.mxu0 0.0
    %901 = vmatprep.subr.mxu0 0.0
    %902 = vmatpush1.xpose.msra.mxu0 0.0
    %903 = vmatprep.subr.mxu0 0.0
    %904 = vmatpush1.xpose.msra.mxu0 0.0
    %905 = vmatprep.subr.mxu0 0.0
    %906 = vmatpush1.xpose.msra.mxu0 0.0
    %907 = vmatprep.subr.mxu0 0.0
    %908 = vmatpush1.xpose.msra.mxu0 0.0
    %909 = vmatprep.subr.mxu0 0.0
    %910 = vmatpush1.xpose.msra.mxu0 0.0
    %911 = vmatprep.subr.mxu0 0.0
    %912 = vmatpush1.xpose.msra.mxu0 0.0
    %913 = vmatprep.subr.mxu0 0.0
    %914 = vmatpush1.xpose.msra.mxu0 0.0
    %915 = vmatprep.subr.mxu0 0.0
    %916 = vmatpush1.xpose.msra.mxu0 0.0
    %917 = vmatprep.subr.mxu0 0.0
    %918 = vmatpush1.xpose.msra.mxu0 0.0
    %919 = vmatprep.subr.mxu0 0.0
    %920 = vmatpush1.xpose.msra.mxu0 0.0
    %921 = vmatprep.subr.mxu0 0.0
    %922 = vmatpush1.xpose.msra.mxu0 0.0
    %923 = vmatprep.subr.mxu0 0.0
    %924 = vmatpush1.xpose.msra.mxu0 0.0
    %925 = vmatprep.subr.mxu0 0.0
    %926 = vmatpush1.xpose.msra.mxu0 0.0
    %927 = vmatprep.subr.mxu0 0.0
    %928 = vmatpush1.xpose.msra.mxu0 0.0
    %929 = vmatprep.subr.mxu0 0.0
    %930 = vmatpush1.xpose.msra.mxu0 0.0
    %931 = vmatprep.subr.mxu0 0.0
    %932 = vmatpush1.xpose.msra.mxu0 0.0
    %933 = vmatprep.subr.mxu0 0.0
    %934 = vmatpush1.xpose.msra.mxu0 0.0
    %935 = vmatprep.subr.mxu0 0.0
    %936 = vmatpush1.xpose.msra.mxu0 0.0
    %937 = vmatprep.subr.mxu0 0.0
    %938 = vmatpush1.xpose.msra.mxu0 0.0
    %939 = vmatprep.subr.mxu0 0.0
    %940 = vmatpush1.xpose.msra.mxu0 0.0
    %941 = vmatprep.subr.mxu0 0.0
    %942 = vmatpush1.xpose.msra.mxu0 0.0
    %943 = vmatprep.subr.mxu0 0.0
    %944 = vmatpush1.xpose.msra.mxu0 0.0
    %945 = vmatprep.subr.mxu0 0.0
    %946 = vmatpush1.xpose.msra.mxu0 0.0
    %947 = vmatprep.subr.mxu0 0.0
    %948 = vmatpush1.xpose.msra.mxu0 0.0
    %949 = vmatprep.subr.mxu0 0.0
    %950 = vmatpush1.xpose.msra.mxu0 0.0
    %951 = vmatprep.subr.mxu0 0.0
    %952 = vmatpush1.xpose.msra.mxu0 0.0
    %953 = vmatprep.mubr.f32.mxu0 0.0
    %954 = vmatmul.mubr.f32.gmra.mrb[0].mxu0 %v885
    %v955 = vpop.f32.mrb[0].mxu0
    %v956 = vadd.f32 0.0, %v955
    %v957 = vpop.f32.mrb[0].mxu0
    %958 = vdwg.mxu0
    %v959 = vmul.f32 %v878, 0.35355338
    %v960 = vmul.f32 %v956, 0.35355338
    %v961 = vsel %vm143, %v959, -inf
    %962 = vmax.xlane.f32.xlu0 %v961
    %v963 = vpop.xlane.xlu0 %962
    %v964 = vsel %vm143, %v960, -inf
    %965 = vmax.xlane.f32.xlu0 %v964
    %v966 = vpop.xlane.xlu0 %965
    %v967 = vsub.f32 %v959, %v963
    %v968 = vsub.f32 %v960, %v966
    %v969 = vmul.f32 %v967, 1.442695
    %v970 = vpow.pop %v969
    %v971 = vmul.f32 %v968, 1.442695
    %v972 = vpow.pop %v971
    %v973 = vsel %vm143, %v970, 0.0
    %974 = vadd.xlane.f32.xlu0 %v973
    %v975 = vpop.xlane.xlu0 %974
    %v976 = vsel %vm143, %v972, 0.0
    %977 = vadd.xlane.f32.xlu0 %v976
    %v978 = vpop.xlane.xlu0 %977
    %v979 = vrcp.pop %v975
    %v980 = vmul.f32 %v970, %v979
    %v981 = vrcp.pop %v978
    %v982 = vmul.f32 %v972, %v981
    %983 = vrot.lane.b32.xlu0 %v132, 48
    %v984 = vpop.permute.xlu0 %983
    %v987 = vsel %vm143, %v980, 0
    %989 = vmatprep.subr.mxu0 0.0
    %990 = vmatpush1.msra.mxu0 %v984
    %991 = vmatprep.subr.mxu0 0.0
    %992 = vmatpush1.msra.mxu0 0.0
    %993 = vmatprep.subr.mxu0 0.0
    %994 = vmatpush1.msra.mxu0 0.0
    %995 = vmatprep.subr.mxu0 0.0
    %996 = vmatpush1.msra.mxu0 0.0
    %997 = vmatprep.subr.mxu0 0.0
    %998 = vmatpush1.msra.mxu0 0.0
    %999 = vmatprep.subr.mxu0 0.0
    %1000 = vmatpush1.msra.mxu0 0.0
    %1001 = vmatprep.subr.mxu0 0.0
    %1002 = vmatpush1.msra.mxu0 0.0
    %1003 = vmatprep.subr.mxu0 0.0
    %1004 = vmatpush1.msra.mxu0 0.0
    %1005 = vmatprep.subr.mxu0 0.0
    %1006 = vmatpush1.msra.mxu0 0.0
    %1007 = vmatprep.subr.mxu0 0.0
    %1008 = vmatpush1.msra.mxu0 0.0
    %1009 = vmatprep.subr.mxu0 0.0
    %1010 = vmatpush1.msra.mxu0 0.0
    %1011 = vmatprep.subr.mxu0 0.0
    %1012 = vmatpush1.msra.mxu0 0.0
    %1013 = vmatprep.subr.mxu0 0.0
    %1014 = vmatpush1.msra.mxu0 0.0
    %1015 = vmatprep.subr.mxu0 0.0
    %1016 = vmatpush1.msra.mxu0 0.0
    %1017 = vmatprep.subr.mxu0 0.0
    %1018 = vmatpush1.msra.mxu0 0.0
    %1019 = vmatprep.subr.mxu0 0.0
    %1020 = vmatpush1.msra.mxu0 0.0
    %1021 = vmatprep.subr.mxu0 0.0
    %1022 = vmatpush1.msra.mxu0 0.0
    %1023 = vmatprep.subr.mxu0 0.0
    %1024 = vmatpush1.msra.mxu0 0.0
    %1025 = vmatprep.subr.mxu0 0.0
    %1026 = vmatpush1.msra.mxu0 0.0
    %1027 = vmatprep.subr.mxu0 0.0
    %1028 = vmatpush1.msra.mxu0 0.0
    %1029 = vmatprep.subr.mxu0 0.0
    %1030 = vmatpush1.msra.mxu0 0.0
    %1031 = vmatprep.subr.mxu0 0.0
    %1032 = vmatpush1.msra.mxu0 0.0
    %1033 = vmatprep.subr.mxu0 0.0
    %1034 = vmatpush1.msra.mxu0 0.0
    %1035 = vmatprep.subr.mxu0 0.0
    %1036 = vmatpush1.msra.mxu0 0.0
    %1037 = vmatprep.subr.mxu0 0.0
    %1038 = vmatpush1.msra.mxu0 0.0
    %1039 = vmatprep.subr.mxu0 0.0
    %1040 = vmatpush1.msra.mxu0 0.0
    %1041 = vmatprep.subr.mxu0 0.0
    %1042 = vmatpush1.msra.mxu0 0.0
    %1043 = vmatprep.subr.mxu0 0.0
    %1044 = vmatpush1.msra.mxu0 0.0
    %1045 = vmatprep.subr.mxu0 0.0
    %1046 = vmatpush1.msra.mxu0 0.0
    %1047 = vmatprep.subr.mxu0 0.0
    %1048 = vmatpush1.msra.mxu0 0.0
    %1049 = vmatprep.subr.mxu0 0.0
    %1050 = vmatpush1.msra.mxu0 0.0
    %1051 = vmatprep.subr.mxu0 0.0
    %1052 = vmatpush1.msra.mxu0 0.0
    %1053 = vmatprep.mubr.f32.mxu0 0.0
    %1054 = vmatmul.mubr.f32.gmra.mrb[0].mxu0 %v987
    %v1055 = vpop.f32.mrb[0].mxu0
    %v1056 = vadd.f32 0.0, %v1055
    %v1057 = vpop.f32.mrb[0].mxu0
    %1058 = vdwg.mxu0
    %1059 = vrot.lane.b32.xlu0 %v137, 48
    %v1060 = vpop.permute.xlu0 %1059
    %v1063 = vsel %vm143, %v982, 0
    %1065 = vmatprep.subr.mxu0 0.0
    %1066 = vmatpush1.msra.mxu0 %v1060
    %1067 = vmatprep.subr.mxu0 0.0
    %1068 = vmatpush1.msra.mxu0 0.0
    %1069 = vmatprep.subr.mxu0 0.0
    %1070 = vmatpush1.msra.mxu0 0.0
    %1071 = vmatprep.subr.mxu0 0.0
    %1072 = vmatpush1.msra.mxu0 0.0
    %1073 = vmatprep.subr.mxu0 0.0
    %1074 = vmatpush1.msra.mxu0 0.0
    %1075 = vmatprep.subr.mxu0 0.0
    %1076 = vmatpush1.msra.mxu0 0.0
    %1077 = vmatprep.subr.mxu0 0.0
    %1078 = vmatpush1.msra.mxu0 0.0
    %1079 = vmatprep.subr.mxu0 0.0
    %1080 = vmatpush1.msra.mxu0 0.0
    %1081 = vmatprep.subr.mxu0 0.0
    %1082 = vmatpush1.msra.mxu0 0.0
    %1083 = vmatprep.subr.mxu0 0.0
    %1084 = vmatpush1.msra.mxu0 0.0
    %1085 = vmatprep.subr.mxu0 0.0
    %1086 = vmatpush1.msra.mxu0 0.0
    %1087 = vmatprep.subr.mxu0 0.0
    %1088 = vmatpush1.msra.mxu0 0.0
    %1089 = vmatprep.subr.mxu0 0.0
    %1090 = vmatpush1.msra.mxu0 0.0
    %1091 = vmatprep.subr.mxu0 0.0
    %1092 = vmatpush1.msra.mxu0 0.0
    %1093 = vmatprep.subr.mxu0 0.0
    %1094 = vmatpush1.msra.mxu0 0.0
    %1095 = vmatprep.subr.mxu0 0.0
    %1096 = vmatpush1.msra.mxu0 0.0
    %1097 = vmatprep.subr.mxu0 0.0
    %1098 = vmatpush1.msra.mxu0 0.0
    %1099 = vmatprep.subr.mxu0 0.0
    %1100 = vmatpush1.msra.mxu0 0.0
    %1101 = vmatprep.subr.mxu0 0.0
    %1102 = vmatpush1.msra.mxu0 0.0
    %1103 = vmatprep.subr.mxu0 0.0
    %1104 = vmatpush1.msra.mxu0 0.0
    %1105 = vmatprep.subr.mxu0 0.0
    %1106 = vmatpush1.msra.mxu0 0.0
    %1107 = vmatprep.subr.mxu0 0.0
    %1108 = vmatpush1.msra.mxu0 0.0
    %1109 = vmatprep.subr.mxu0 0.0
    %1110 = vmatpush1.msra.mxu0 0.0
    %1111 = vmatprep.subr.mxu0 0.0
    %1112 = vmatpush1.msra.mxu0 0.0
    %1113 = vmatprep.subr.mxu0 0.0
    %1114 = vmatpush1.msra.mxu0 0.0
    %1115 = vmatprep.subr.mxu0 0.0
    %1116 = vmatpush1.msra.mxu0 0.0
    %1117 = vmatprep.subr.mxu0 0.0
    %1118 = vmatpush1.msra.mxu0 0.0
    %1119 = vmatprep.subr.mxu0 0.0
    %1120 = vmatpush1.msra.mxu0 0.0
    %1121 = vmatprep.subr.mxu0 0.0
    %1122 = vmatpush1.msra.mxu0 0.0
    %1123 = vmatprep.subr.mxu0 0.0
    %1124 = vmatpush1.msra.mxu0 0.0
    %1125 = vmatprep.subr.mxu0 0.0
    %1126 = vmatpush1.msra.mxu0 0.0
    %1127 = vmatprep.subr.mxu0 0.0
    %1128 = vmatpush1.msra.mxu0 0.0
    %1129 = vmatprep.mubr.f32.mxu0 0.0
    %1130 = vmatmul.mubr.f32.gmra.mrb[0].mxu0 %v1063
    %v1131 = vpop.f32.mrb[0].mxu0
    %v1132 = vadd.f32 0.0, %v1131
    %v1133 = vpop.f32.mrb[0].mxu0
    %1134 = vdwg.mxu0
    %1135 = vrot.lane.b32.xlu0 %v132, 104
    %v1136 = vpop.permute.xlu0 %1135
    %1137 = vrot.lane.b32.xlu0 %v132, 72
    %v1138 = vpop.permute.xlu0 %1137
    %v1139 = vsel %vm143, %v1136, 0
    %v1141 = vsel %vm143, %v1138, 0
    %1143 = vmatprep.subr.mxu0 0.0
    %1144 = vmatpush1.xpose.msra.mxu0 %v1141
    %1145 = vmatprep.subr.mxu0 0.0
    %1146 = vmatpush1.xpose.msra.mxu0 0.0
    %1147 = vmatprep.subr.mxu0 0.0
    %1148 = vmatpush1.xpose.msra.mxu0 0.0
    %1149 = vmatprep.subr.mxu0 0.0
    %1150 = vmatpush1.xpose.msra.mxu0 0.0
    %1151 = vmatprep.subr.mxu0 0.0
    %1152 = vmatpush1.xpose.msra.mxu0 0.0
    %1153 = vmatprep.subr.mxu0 0.0
    %1154 = vmatpush1.xpose.msra.mxu0 0.0
    %1155 = vmatprep.subr.mxu0 0.0
    %1156 = vmatpush1.xpose.msra.mxu0 0.0
    %1157 = vmatprep.subr.mxu0 0.0
    %1158 = vmatpush1.xpose.msra.mxu0 0.0
    %1159 = vmatprep.subr.mxu0 0.0
    %1160 = vmatpush1.xpose.msra.mxu0 0.0
    %1161 = vmatprep.subr.mxu0 0.0
    %1162 = vmatpush1.xpose.msra.mxu0 0.0
    %1163 = vmatprep.subr.mxu0 0.0
    %1164 = vmatpush1.xpose.msra.mxu0 0.0
    %1165 = vmatprep.subr.mxu0 0.0
    %1166 = vmatpush1.xpose.msra.mxu0 0.0
    %1167 = vmatprep.subr.mxu0 0.0
    %1168 = vmatpush1.xpose.msra.mxu0 0.0
    %1169 = vmatprep.subr.mxu0 0.0
    %1170 = vmatpush1.xpose.msra.mxu0 0.0
    %1171 = vmatprep.subr.mxu0 0.0
    %1172 = vmatpush1.xpose.msra.mxu0 0.0
    %1173 = vmatprep.subr.mxu0 0.0
    %1174 = vmatpush1.xpose.msra.mxu0 0.0
    %1175 = vmatprep.subr.mxu0 0.0
    %1176 = vmatpush1.xpose.msra.mxu0 0.0
    %1177 = vmatprep.subr.mxu0 0.0
    %1178 = vmatpush1.xpose.msra.mxu0 0.0
    %1179 = vmatprep.subr.mxu0 0.0
    %1180 = vmatpush1.xpose.msra.mxu0 0.0
    %1181 = vmatprep.subr.mxu0 0.0
    %1182 = vmatpush1.xpose.msra.mxu0 0.0
    %1183 = vmatprep.subr.mxu0 0.0
    %1184 = vmatpush1.xpose.msra.mxu0 0.0
    %1185 = vmatprep.subr.mxu0 0.0
    %1186 = vmatpush1.xpose.msra.mxu0 0.0
    %1187 = vmatprep.subr.mxu0 0.0
    %1188 = vmatpush1.xpose.msra.mxu0 0.0
    %1189 = vmatprep.subr.mxu0 0.0
    %1190 = vmatpush1.xpose.msra.mxu0 0.0
    %1191 = vmatprep.subr.mxu0 0.0
    %1192 = vmatpush1.xpose.msra.mxu0 0.0
    %1193 = vmatprep.subr.mxu0 0.0
    %1194 = vmatpush1.xpose.msra.mxu0 0.0
    %1195 = vmatprep.subr.mxu0 0.0
    %1196 = vmatpush1.xpose.msra.mxu0 0.0
    %1197 = vmatprep.subr.mxu0 0.0
    %1198 = vmatpush1.xpose.msra.mxu0 0.0
    %1199 = vmatprep.subr.mxu0 0.0
    %1200 = vmatpush1.xpose.msra.mxu0 0.0
    %1201 = vmatprep.subr.mxu0 0.0
    %1202 = vmatpush1.xpose.msra.mxu0 0.0
    %1203 = vmatprep.subr.mxu0 0.0
    %1204 = vmatpush1.xpose.msra.mxu0 0.0
    %1205 = vmatprep.subr.mxu0 0.0
    %1206 = vmatpush1.xpose.msra.mxu0 0.0
    %1207 = vmatprep.mubr.f32.mxu0 0.0
    %1208 = vmatmul.mubr.f32.gmra.mrb[0].mxu0 %v1139
    %v1209 = vpop.f32.mrb[0].mxu0
    %v1210 = vadd.f32 0.0, %v1209
    %v1211 = vpop.f32.mrb[0].mxu0
    %1212 = vdwg.mxu0
    %1213 = vrot.lane.b32.xlu0 %v137, 104
    %v1214 = vpop.permute.xlu0 %1213
    %1215 = vrot.lane.b32.xlu0 %v137, 72
    %v1216 = vpop.permute.xlu0 %1215
    %v1217 = vsel %vm143, %v1214, 0
    %v1219 = vsel %vm143, %v1216, 0
    %1221 = vmatprep.subr.mxu0 0.0
    %1222 = vmatpush1.xpose.msra.mxu0 %v1219
    %1223 = vmatprep.subr.mxu0 0.0
    %1224 = vmatpush1.xpose.msra.mxu0 0.0
    %1225 = vmatprep.subr.mxu0 0.0
    %1226 = vmatpush1.xpose.msra.mxu0 0.0
    %1227 = vmatprep.subr.mxu0 0.0
    %1228 = vmatpush1.xpose.msra.mxu0 0.0
    %1229 = vmatprep.subr.mxu0 0.0
    %1230 = vmatpush1.xpose.msra.mxu0 0.0
    %1231 = vmatprep.subr.mxu0 0.0
    %1232 = vmatpush1.xpose.msra.mxu0 0.0
    %1233 = vmatprep.subr.mxu0 0.0
    %1234 = vmatpush1.xpose.msra.mxu0 0.0
    %1235 = vmatprep.subr.mxu0 0.0
    %1236 = vmatpush1.xpose.msra.mxu0 0.0
    %1237 = vmatprep.subr.mxu0 0.0
    %1238 = vmatpush1.xpose.msra.mxu0 0.0
    %1239 = vmatprep.subr.mxu0 0.0
    %1240 = vmatpush1.xpose.msra.mxu0 0.0
    %1241 = vmatprep.subr.mxu0 0.0
    %1242 = vmatpush1.xpose.msra.mxu0 0.0
    %1243 = vmatprep.subr.mxu0 0.0
    %1244 = vmatpush1.xpose.msra.mxu0 0.0
    %1245 = vmatprep.subr.mxu0 0.0
    %1246 = vmatpush1.xpose.msra.mxu0 0.0
    %1247 = vmatprep.subr.mxu0 0.0
    %1248 = vmatpush1.xpose.msra.mxu0 0.0
    %1249 = vmatprep.subr.mxu0 0.0
    %1250 = vmatpush1.xpose.msra.mxu0 0.0
    %1251 = vmatprep.subr.mxu0 0.0
    %1252 = vmatpush1.xpose.msra.mxu0 0.0
    %1253 = vmatprep.subr.mxu0 0.0
    %1254 = vmatpush1.xpose.msra.mxu0 0.0
    %1255 = vmatprep.subr.mxu0 0.0
    %1256 = vmatpush1.xpose.msra.mxu0 0.0
    %1257 = vmatprep.subr.mxu0 0.0
    %1258 = vmatpush1.xpose.msra.mxu0 0.0
    %1259 = vmatprep.subr.mxu0 0.0
    %1260 = vmatpush1.xpose.msra.mxu0 0.0
    %1261 = vmatprep.subr.mxu0 0.0
    %1262 = vmatpush1.xpose.msra.mxu0 0.0
    %1263 = vmatprep.subr.mxu0 0.0
    %1264 = vmatpush1.xpose.msra.mxu0 0.0
    %1265 = vmatprep.subr.mxu0 0.0
    %1266 = vmatpush1.xpose.msra.mxu0 0.0
    %1267 = vmatprep.subr.mxu0 0.0
    %1268 = vmatpush1.xpose.msra.mxu0 0.0
    %1269 = vmatprep.subr.mxu0 0.0
    %1270 = vmatpush1.xpose.msra.mxu0 0.0
    %1271 = vmatprep.subr.mxu0 0.0
    %1272 = vmatpush1.xpose.msra.mxu0 0.0
    %1273 = vmatprep.subr.mxu0 0.0
    %1274 = vmatpush1.xpose.msra.mxu0 0.0
    %1275 = vmatprep.subr.mxu0 0.0
    %1276 = vmatpush1.xpose.msra.mxu0 0.0
    %1277 = vmatprep.subr.mxu0 0.0
    %1278 = vmatpush1.xpose.msra.mxu0 0.0
    %1279 = vmatprep.subr.mxu0 0.0
    %1280 = vmatpush1.xpose.msra.mxu0 0.0
    %1281 = vmatprep.subr.mxu0 0.0
    %1282 = vmatpush1.xpose.msra.mxu0 0.0
    %1283 = vmatprep.subr.mxu0 0.0
    %1284 = vmatpush1.xpose.msra.mxu0 0.0
    %1285 = vmatprep.mubr.f32.mxu0 0.0
    %1286 = vmatmul.mubr.f32.gmra.mrb[0].mxu0 %v1217
    %v1287 = vpop.f32.mrb[0].mxu0
    %v1288 = vadd.f32 0.0, %v1287
    %v1289 = vpop.f32.mrb[0].mxu0
    %1290 = vdwg.mxu0
    %v1291 = vmul.f32 %v1210, 0.35355338
    %v1292 = vmul.f32 %v1288, 0.35355338
    %v1293 = vsel %vm143, %v1291, -inf
    %1294 = vmax.xlane.f32.xlu0 %v1293
    %v1295 = vpop.xlane.xlu0 %1294
    %v1296 = vsel %vm143, %v1292, -inf
    %1297 = vmax.xlane.f32.xlu0 %v1296
    %v1298 = vpop.xlane.xlu0 %1297
    %v1299 = vsub.f32 %v1291, %v1295
    %v1300 = vsub.f32 %v1292, %v1298
    %v1301 = vmul.f32 %v1299, 1.442695
    %v1302 = vpow.pop %v1301
    %v1303 = vmul.f32 %v1300, 1.442695
    %v1304 = vpow.pop %v1303
    %v1305 = vsel %vm143, %v1302, 0.0
    %1306 = vadd.xlane.f32.xlu0 %v1305
    %v1307 = vpop.xlane.xlu0 %1306
    %v1308 = vsel %vm143, %v1304, 0.0
    %1309 = vadd.xlane.f32.xlu0 %v1308
    %v1310 = vpop.xlane.xlu0 %1309
    %v1311 = vrcp.pop %v1307
    %v1312 = vmul.f32 %v1302, %v1311
    %v1313 = vrcp.pop %v1310
    %v1314 = vmul.f32 %v1304, %v1313
    %1315 = vrot.lane.b32.xlu0 %v132, 40
    %v1316 = vpop.permute.xlu0 %1315
    %v1319 = vsel %vm143, %v1312, 0
    %1321 = vmatprep.subr.mxu0 0.0
    %1322 = vmatpush1.msra.mxu0 %v1316
    %1323 = vmatprep.subr.mxu0 0.0
    %1324 = vmatpush1.msra.mxu0 0.0
    %1325 = vmatprep.subr.mxu0 0.0
    %1326 = vmatpush1.msra.mxu0 0.0
    %1327 = vmatprep.subr.mxu0 0.0
    %1328 = vmatpush1.msra.mxu0 0.0
    %1329 = vmatprep.subr.mxu0 0.0
    %1330 = vmatpush1.msra.mxu0 0.0
    %1331 = vmatprep.subr.mxu0 0.0
    %1332 = vmatpush1.msra.mxu0 0.0
    %1333 = vmatprep.subr.mxu0 0.0
    %1334 = vmatpush1.msra.mxu0 0.0
    %1335 = vmatprep.subr.mxu0 0.0
    %1336 = vmatpush1.msra.mxu0 0.0
    %1337 = vmatprep.subr.mxu0 0.0
    %1338 = vmatpush1.msra.mxu0 0.0
    %1339 = vmatprep.subr.mxu0 0.0
    %1340 = vmatpush1.msra.mxu0 0.0
    %1341 = vmatprep.subr.mxu0 0.0
    %1342 = vmatpush1.msra.mxu0 0.0
    %1343 = vmatprep.subr.mxu0 0.0
    %1344 = vmatpush1.msra.mxu0 0.0
    %1345 = vmatprep.subr.mxu0 0.0
    %1346 = vmatpush1.msra.mxu0 0.0
    %1347 = vmatprep.subr.mxu0 0.0
    %1348 = vmatpush1.msra.mxu0 0.0
    %1349 = vmatprep.subr.mxu0 0.0
    %1350 = vmatpush1.msra.mxu0 0.0
    %1351 = vmatprep.subr.mxu0 0.0
    %1352 = vmatpush1.msra.mxu0 0.0
    %1353 = vmatprep.subr.mxu0 0.0
    %1354 = vmatpush1.msra.mxu0 0.0
    %1355 = vmatprep.subr.mxu0 0.0
    %1356 = vmatpush1.msra.mxu0 0.0
    %1357 = vmatprep.subr.mxu0 0.0
    %1358 = vmatpush1.msra.mxu0 0.0
    %1359 = vmatprep.subr.mxu0 0.0
    %1360 = vmatpush1.msra.mxu0 0.0
    %1361 = vmatprep.subr.mxu0 0.0
    %1362 = vmatpush1.msra.mxu0 0.0
    %1363 = vmatprep.subr.mxu0 0.0
    %1364 = vmatpush1.msra.mxu0 0.0
    %1365 = vmatprep.subr.mxu0 0.0
    %1366 = vmatpush1.msra.mxu0 0.0
    %1367 = vmatprep.subr.mxu0 0.0
    %1368 = vmatpush1.msra.mxu0 0.0
    %1369 = vmatprep.subr.mxu0 0.0
    %1370 = vmatpush1.msra.mxu0 0.0
    %1371 = vmatprep.subr.mxu0 0.0
    %1372 = vmatpush1.msra.mxu0 0.0
    %1373 = vmatprep.subr.mxu0 0.0
    %1374 = vmatpush1.msra.mxu0 0.0
    %1375 = vmatprep.subr.mxu0 0.0
    %1376 = vmatpush1.msra.mxu0 0.0
    %1377 = vmatprep.subr.mxu0 0.0
    %1378 = vmatpush1.msra.mxu0 0.0
    %1379 = vmatprep.subr.mxu0 0.0
    %1380 = vmatpush1.msra.mxu0 0.0
    %1381 = vmatprep.subr.mxu0 0.0
    %1382 = vmatpush1.msra.mxu0 0.0
    %1383 = vmatprep.subr.mxu0 0.0
    %1384 = vmatpush1.msra.mxu0 0.0
    %1385 = vmatprep.mubr.f32.mxu0 0.0
    %1386 = vmatmul.mubr.f32.gmra.mrb[0].mxu0 %v1319
    %v1387 = vpop.f32.mrb[0].mxu0
    %v1388 = vadd.f32 0.0, %v1387
    %v1389 = vpop.f32.mrb[0].mxu0
    %1390 = vdwg.mxu0
    %1391 = vrot.lane.b32.xlu0 %v137, 40
    %v1392 = vpop.permute.xlu0 %1391
    %v1395 = vsel %vm143, %v1314, 0
    %1397 = vmatprep.subr.mxu0 0.0
    %1398 = vmatpush1.msra.mxu0 %v1392
    %1399 = vmatprep.subr.mxu0 0.0
    %1400 = vmatpush1.msra.mxu0 0.0
    %1401 = vmatprep.subr.mxu0 0.0
    %1402 = vmatpush1.msra.mxu0 0.0
    %1403 = vmatprep.subr.mxu0 0.0
    %1404 = vmatpush1.msra.mxu0 0.0
    %1405 = vmatprep.subr.mxu0 0.0
    %1406 = vmatpush1.msra.mxu0 0.0
    %1407 = vmatprep.subr.mxu0 0.0
    %1408 = vmatpush1.msra.mxu0 0.0
    %1409 = vmatprep.subr.mxu0 0.0
    %1410 = vmatpush1.msra.mxu0 0.0
    %1411 = vmatprep.subr.mxu0 0.0
    %1412 = vmatpush1.msra.mxu0 0.0
    %1413 = vmatprep.subr.mxu0 0.0
    %1414 = vmatpush1.msra.mxu0 0.0
    %1415 = vmatprep.subr.mxu0 0.0
    %1416 = vmatpush1.msra.mxu0 0.0
    %1417 = vmatprep.subr.mxu0 0.0
    %1418 = vmatpush1.msra.mxu0 0.0
    %1419 = vmatprep.subr.mxu0 0.0
    %1420 = vmatpush1.msra.mxu0 0.0
    %1421 = vmatprep.subr.mxu0 0.0
    %1422 = vmatpush1.msra.mxu0 0.0
    %1423 = vmatprep.subr.mxu0 0.0
    %1424 = vmatpush1.msra.mxu0 0.0
    %1425 = vmatprep.subr.mxu0 0.0
    %1426 = vmatpush1.msra.mxu0 0.0
    %1427 = vmatprep.subr.mxu0 0.0
    %1428 = vmatpush1.msra.mxu0 0.0
    %1429 = vmatprep.subr.mxu0 0.0
    %1430 = vmatpush1.msra.mxu0 0.0
    %1431 = vmatprep.subr.mxu0 0.0
    %1432 = vmatpush1.msra.mxu0 0.0
    %1433 = vmatprep.subr.mxu0 0.0
    %1434 = vmatpush1.msra.mxu0 0.0
    %1435 = vmatprep.subr.mxu0 0.0
    %1436 = vmatpush1.msra.mxu0 0.0
    %1437 = vmatprep.subr.mxu0 0.0
    %1438 = vmatpush1.msra.mxu0 0.0
    %1439 = vmatprep.subr.mxu0 0.0
    %1440 = vmatpush1.msra.mxu0 0.0
    %1441 = vmatprep.subr.mxu0 0.0
    %1442 = vmatpush1.msra.mxu0 0.0
    %1443 = vmatprep.subr.mxu0 0.0
    %1444 = vmatpush1.msra.mxu0 0.0
    %1445 = vmatprep.subr.mxu0 0.0
    %1446 = vmatpush1.msra.mxu0 0.0
    %1447 = vmatprep.subr.mxu0 0.0
    %1448 = vmatpush1.msra.mxu0 0.0
    %1449 = vmatprep.subr.mxu0 0.0
    %1450 = vmatpush1.msra.mxu0 0.0
    %1451 = vmatprep.subr.mxu0 0.0
    %1452 = vmatpush1.msra.mxu0 0.0
    %1453 = vmatprep.subr.mxu0 0.0
    %1454 = vmatpush1.msra.mxu0 0.0
    %1455 = vmatprep.subr.mxu0 0.0
    %1456 = vmatpush1.msra.mxu0 0.0
    %1457 = vmatprep.subr.mxu0 0.0
    %1458 = vmatpush1.msra.mxu0 0.0
    %1459 = vmatprep.subr.mxu0 0.0
    %1460 = vmatpush1.msra.mxu0 0.0
    %1461 = vmatprep.mubr.f32.mxu0 0.0
    %1462 = vmatmul.mubr.f32.gmra.mrb[0].mxu0 %v1395
    %v1463 = vpop.f32.mrb[0].mxu0
    %v1464 = vadd.f32 0.0, %v1463
    %v1465 = vpop.f32.mrb[0].mxu0
    %1466 = vdwg.mxu0
    %1469 = vrot.lane.b32.xlu0 %v724, 8
    %v1470 = vpop.permute.xlu0 %1469
    %1471 = vrot.lane.b32.xlu0 %v800, 8
    %v1472 = vpop.permute.xlu0 %1471
    %1477 = vrot.lane.b32.xlu0 %v1056, 16
    %v1478 = vpop.permute.xlu0 %1477
    %1479 = vrot.lane.b32.xlu0 %v1132, 16
    %v1480 = vpop.permute.xlu0 %1479
    %1485 = vrot.lane.b32.xlu0 %v1388, 24
    %v1486 = vpop.permute.xlu0 %1485
    %1487 = vrot.lane.b32.xlu0 %v1464, 24
    %v1488 = vpop.permute.xlu0 %1487
    %v1491 = vsel %vm143, %v392, %v1470
    %v1492 = vsel %vm143, %v468, %v1472
    %vm1493 = vcmask 130048
    %v1494 = vsel %vm1493, %v1491, %v1478
    %v1495 = vsel %vm1493, %v1492, %v1480
    %vm1496 = vcmask 195584
    %v1497 = vsel %vm1496, %v1494, %v1486
    %v1498 = vsel %vm1496, %v1495, %v1488
    %v1499 = vld [vmem:[%s3] sm:$0xff]
    %v1500 = vld [vmem:[%s3 + $0x8] sm:$0xff]
    %v1501 = vld [vmem:[%s3 + $0x10] sm:$0xff]
    %v1502 = vld [vmem:[%s3 + $0x18] sm:$0xff]
    %v1503 = vld [vmem:[%s4] sm:$0x1]
    %v1505 = vlaneseq
    %v1506 = vshrl.u32 %v1505, 7
    %v1507 = vsub.s32 0, %v1506
    %v1508 = vrot.slane %v1503, %v1507
    %v1511 = vsel %vm58, %v1497, 0
    %v1514 = vsel %vm58, %v1498, 0
    %1516 = vmatprep.subr.mxu0 0.0
    %1517 = vmatpush1.msra.mxu0 %v1499
    %1518 = vmatprep.subr.mxu0 0.0
    %1519 = vmatpush1.msra.mxu0 %v1500
    %1520 = vmatprep.subr.mxu0 0.0
    %1521 = vmatpush1.msra.mxu0 %v1501
    %1522 = vmatprep.subr.mxu0 0.0
    %1523 = vmatpush1.msra.mxu0 %v1502
    %1524 = vmatprep.subr.mxu0 0.0
    %1525 = vmatpush1.msra.mxu0 0.0
    %1526 = vmatprep.subr.mxu0 0.0
    %1527 = vmatpush1.msra.mxu0 0.0
    %1528 = vmatprep.subr.mxu0 0.0
    %1529 = vmatpush1.msra.mxu0 0.0
    %1530 = vmatprep.subr.mxu0 0.0
    %1531 = vmatpush1.msra.mxu0 0.0
    %1532 = vmatprep.subr.mxu0 0.0
    %1533 = vmatpush1.msra.mxu0 0.0
    %1534 = vmatprep.subr.mxu0 0.0
    %1535 = vmatpush1.msra.mxu0 0.0
    %1536 = vmatprep.subr.mxu0 0.0
    %1537 = vmatpush1.msra.mxu0 0.0
    %1538 = vmatprep.subr.mxu0 0.0
    %1539 = vmatpush1.msra.mxu0 0.0
    %1540 = vmatprep.subr.mxu0 0.0
    %1541 = vmatpush1.msra.mxu0 0.0
    %1542 = vmatprep.subr.mxu0 0.0
    %1543 = vmatpush1.msra.mxu0 0.0
    %1544 = vmatprep.subr.mxu0 0.0
    %1545 = vmatpush1.msra.mxu0 0.0
    %1546 = vmatprep.subr.mxu0 0.0
    %1547 = vmatpush1.msra.mxu0 0.0
    %1548 = vmatprep.subr.mxu0 0.0
    %1549 = vmatpush1.msra.mxu0 0.0
    %1550 = vmatprep.subr.mxu0 0.0
    %1551 = vmatpush1.msra.mxu0 0.0
    %1552 = vmatprep.subr.mxu0 0.0
    %1553 = vmatpush1.msra.mxu0 0.0
    %1554 = vmatprep.subr.mxu0 0.0
    %1555 = vmatpush1.msra.mxu0 0.0
    %1556 = vmatprep.subr.mxu0 0.0
    %1557 = vmatpush1.msra.mxu0 0.0
    %1558 = vmatprep.subr.mxu0 0.0
    %1559 = vmatpush1.msra.mxu0 0.0
    %1560 = vmatprep.subr.mxu0 0.0
    %1561 = vmatpush1.msra.mxu0 0.0
    %1562 = vmatprep.subr.mxu0 0.0
    %1563 = vmatpush1.msra.mxu0 0.0
    %1564 = vmatprep.subr.mxu0 0.0
    %1565 = vmatpush1.msra.mxu0 0.0
    %1566 = vmatprep.subr.mxu0 0.0
    %1567 = vmatpush1.msra.mxu0 0.0
    %1568 = vmatprep.subr.mxu0 0.0
    %1569 = vmatpush1.msra.mxu0 0.0
    %1570 = vmatprep.subr.mxu0 0.0
    %1571 = vmatpush1.msra.mxu0 0.0
    %1572 = vmatprep.subr.mxu0 0.0
    %1573 = vmatpush1.msra.mxu0 0.0
    %1574 = vmatprep.subr.mxu0 0.0
    %1575 = vmatpush1.msra.mxu0 0.0
    %1576 = vmatprep.subr.mxu0 0.0
    %1577 = vmatpush1.msra.mxu0 0.0
    %1578 = vmatprep.subr.mxu0 0.0
    %1579 = vmatpush1.msra.mxu0 0.0
    %1580 = vmatprep.mubr.f32.mxu0 0.0
    %1581 = vmatmul.mubr.f32.gmra.mrb[0].mxu0 %v1511
    %v1582 = vpop.f32.mrb[0].mxu0
    %v1583 = vadd.f32 %v1508, %v1582
    %v1584 = vpop.f32.mrb[0].mxu0
    %1585 = vmatprep.mubr.f32.mxu0 0.0
    %1586 = vmatmul.mubr.f32.gmra.mrb[0].mxu0 %v1514
    %v1587 = vpop.f32.mrb[0].mxu0
    %v1588 = vadd.f32 %v1508, %v1587
    %v1589 = vpop.f32.mrb[0].mxu0
    %1590 = vdwg.mxu0
    %v1591 = vadd.f32 %v45, %v1583
    %v1592 = vadd.f32 %v46, %v1588
    %v1593 = vld [vmem:[%s7] sm:$0x1]
    %v1594 = vld [vmem:[%s8] sm:$0x1]
    %v1595 = vsel %vm58, %v1591, 0.0
    %1596 = vadd.xlane.f32.xlu0 %v1595
    %v1597 = vpop.xlane.xlu0 %1596
    %v1598 = vsel %vm58, %v1592, 0.0
    %1599 = vadd.xlane.f32.xlu0 %v1598
    %v1600 = vpop.xlane.xlu0 %1599
    %v1601 = vrcp.pop 32.0
    %v1602 = vmul.f32 %v1597, %v1601
    %v1603 = vmul.f32 %v1600, %v1601
    %v1604 = vsub.f32 %v1591, %v1602
    %v1605 = vsub.f32 %v1592, %v1603
    %v1606 = vmul.f32 %v1604, %v1604
    %v1607 = vmul.f32 %v1605, %v1605
    %v1608 = vsel %vm58, %v1606, 0.0
    %1609 = vadd.xlane.f32.xlu0 %v1608
    %v1610 = vpop.xlane.xlu0 %1609
    %v1611 = vsel %vm58, %v1607, 0.0
    %1612 = vadd.xlane.f32.xlu0 %v1611
    %v1613 = vpop.xlane.xlu0 %1612
    %v1614 = vmul.f32 %v1610, 0.032258064
    %v1615 = vmul.f32 %v1613, 0.032258064
    %v1617 = vlaneseq
    %v1618 = vshrl.u32 %v1617, 7
    %v1619 = vsub.s32 0, %v1618
    %v1620 = vrot.slane %v1593, %v1619
    %v1622 = vmul.f32 %v1620, %v1604
    %v1623 = vmul.f32 %v1620, %v1605
    %v1624 = vrsqrt.pop %v1614
    %v1625 = vmul.f32 %v1614, %v1624
    %vm1626 = vcmp.eq.f32.partialorder %v1614, inf
    %v1627 = vsel %vm1626, %v1614, %v1625
    %vm1628 = vcmp.eq.f32.partialorder %v1614, 0.0
    %v1629 = vand.u32 %v1614, 2147483648
    %v1630 = vsel %vm1628, %v1629, %v1627
    %v1631 = vrsqrt.pop %v1615
    %v1632 = vmul.f32 %v1615, %v1631
    %vm1633 = vcmp.eq.f32.partialorder %v1615, inf
    %v1634 = vsel %vm1633, %v1615, %v1632
    %vm1635 = vcmp.eq.f32.partialorder %v1615, 0.0
    %v1636 = vand.u32 %v1615, 2147483648
    %v1637 = vsel %vm1635, %v1636, %v1634
    %v1638 = vadd.f32 %v1630, 1e-06
    %v1639 = vadd.f32 %v1637, 1e-06
    %v1640 = vrcp.pop %v1638
    %v1641 = vmul.f32 %v1622, %v1640
    %v1642 = vrcp.pop %v1639
    %v1643 = vmul.f32 %v1623, %v1642
    %v1645 = vlaneseq
    %v1646 = vshrl.u32 %v1645, 7
    %v1647 = vsub.s32 0, %v1646
    %v1648 = vrot.slane %v1594, %v1647
    %v1650 = vadd.f32 %v1641, %v1648
    %v1651 = vadd.f32 %v1643, %v1648
    %v1652 = vld [vmem:[%s5] sm:$0xff]
    %v1653 = vld [vmem:[%s5 + $0x8] sm:$0xff]
    %v1654 = vld [vmem:[%s5 + $0x10] sm:$0xff]
    %v1655 = vld [vmem:[%s5 + $0x18] sm:$0xff]
    %v1656 = vld [vmem:[%s6] sm:$0x1]
    %v1658 = vlaneseq
    %v1659 = vshrl.u32 %v1658, 7
    %v1660 = vsub.s32 0, %v1659
    %v1661 = vrot.slane %v1656, %v1660
    %v1664 = vsel %vm58, %v1650, 0
    %v1667 = vsel %vm58, %v1651, 0
    %1669 = vmatprep.subr.mxu0 0.0
    %1670 = vmatpush1.msra.mxu0 %v1652
    %1671 = vmatprep.subr.mxu0 0.0
    %1672 = vmatpush1.msra.mxu0 %v1653
    %1673 = vmatprep.subr.mxu0 0.0
    %1674 = vmatpush1.msra.mxu0 %v1654
    %1675 = vmatprep.subr.mxu0 0.0
    %1676 = vmatpush1.msra.mxu0 %v1655
    %1677 = vmatprep.subr.mxu0 0.0
    %1678 = vmatpush1.msra.mxu0 0.0
    %1679 = vmatprep.subr.mxu0 0.0
    %1680 = vmatpush1.msra.mxu0 0.0
    %1681 = vmatprep.subr.mxu0 0.0
    %1682 = vmatpush1.msra.mxu0 0.0
    %1683 = vmatprep.subr.mxu0 0.0
    %1684 = vmatpush1.msra.mxu0 0.0
    %1685 = vmatprep.subr.mxu0 0.0
    %1686 = vmatpush1.msra.mxu0 0.0
    %1687 = vmatprep.subr.mxu0 0.0
    %1688 = vmatpush1.msra.mxu0 0.0
    %1689 = vmatprep.subr.mxu0 0.0
    %1690 = vmatpush1.msra.mxu0 0.0
    %1691 = vmatprep.subr.mxu0 0.0
    %1692 = vmatpush1.msra.mxu0 0.0
    %1693 = vmatprep.subr.mxu0 0.0
    %1694 = vmatpush1.msra.mxu0 0.0
    %1695 = vmatprep.subr.mxu0 0.0
    %1696 = vmatpush1.msra.mxu0 0.0
    %1697 = vmatprep.subr.mxu0 0.0
    %1698 = vmatpush1.msra.mxu0 0.0
    %1699 = vmatprep.subr.mxu0 0.0
    %1700 = vmatpush1.msra.mxu0 0.0
    %1701 = vmatprep.subr.mxu0 0.0
    %1702 = vmatpush1.msra.mxu0 0.0
    %1703 = vmatprep.subr.mxu0 0.0
    %1704 = vmatpush1.msra.mxu0 0.0
    %1705 = vmatprep.subr.mxu0 0.0
    %1706 = vmatpush1.msra.mxu0 0.0
    %1707 = vmatprep.subr.mxu0 0.0
    %1708 = vmatpush1.msra.mxu0 0.0
    %1709 = vmatprep.subr.mxu0 0.0
    %1710 = vmatpush1.msra.mxu0 0.0
    %1711 = vmatprep.subr.mxu0 0.0
    %1712 = vmatpush1.msra.mxu0 0.0
    %1713 = vmatprep.subr.mxu0 0.0
    %1714 = vmatpush1.msra.mxu0 0.0
    %1715 = vmatprep.subr.mxu0 0.0
    %1716 = vmatpush1.msra.mxu0 0.0
    %1717 = vmatprep.subr.mxu0 0.0
    %1718 = vmatpush1.msra.mxu0 0.0
    %1719 = vmatprep.subr.mxu0 0.0
    %1720 = vmatpush1.msra.mxu0 0.0
    %1721 = vmatprep.subr.mxu0 0.0
    %1722 = vmatpush1.msra.mxu0 0.0
    %1723 = vmatprep.subr.mxu0 0.0
    %1724 = vmatpush1.msra.mxu0 0.0
    %1725 = vmatprep.subr.mxu0 0.0
    %1726 = vmatpush1.msra.mxu0 0.0
    %1727 = vmatprep.subr.mxu0 0.0
    %1728 = vmatpush1.msra.mxu0 0.0
    %1729 = vmatprep.subr.mxu0 0.0
    %1730 = vmatpush1.msra.mxu0 0.0
    %1731 = vmatprep.subr.mxu0 0.0
    %1732 = vmatpush1.msra.mxu0 0.0
    %1733 = vmatprep.mubr.f32.mxu0 0.0
    %1734 = vmatmul.mubr.f32.gmra.mrb[0].mxu0 %v1664
    %v1735 = vpop.f32.mrb[0].mxu0
    %v1736 = vadd.f32 %v1661, %v1735
    %v1737 = vpop.f32.mrb[0].mxu0
    %1738 = vmatprep.mubr.f32.mxu0 0.0
    %1739 = vmatmul.mubr.f32.gmra.mrb[0].mxu0 %v1667
    %v1740 = vpop.f32.mrb[0].mxu0
    %v1741 = vadd.f32 %v1661, %v1740
    %v1742 = vpop.f32.mrb[0].mxu0
    %1743 = vdwg.mxu0
    %v1744 = vadd.f32 %v1736, %v1650
    %v1745 = vadd.f32 %v1741, %v1651
    %v1746 = vsel %vm58, %v1744, 0.0
    %1747 = vadd.xlane.f32.xlu0 %v1746
    %v1748 = vpop.xlane.xlu0 %1747
    %v1749 = vsel %vm58, %v1745, 0.0
    %1750 = vadd.xlane.f32.xlu0 %v1749
    %v1751 = vpop.xlane.xlu0 %1750
    %v1752 = vmul.f32 %v1748, %v1601
    %v1753 = vmul.f32 %v1751, %v1601
    %v1754 = vsub.f32 %v1744, %v1752
    %v1755 = vsub.f32 %v1745, %v1753
    %v1756 = vmul.f32 %v1754, %v1754
    %v1757 = vmul.f32 %v1755, %v1755
    %v1758 = vsel %vm58, %v1756, 0.0
    %1759 = vadd.xlane.f32.xlu0 %v1758
    %v1760 = vpop.xlane.xlu0 %1759
    %v1761 = vsel %vm58, %v1757, 0.0
    %1762 = vadd.xlane.f32.xlu0 %v1761
    %v1763 = vpop.xlane.xlu0 %1762
    %v1764 = vmul.f32 %v1760, 0.032258064
    %v1765 = vmul.f32 %v1763, 0.032258064
    %v1766 = vmul.f32 %v1620, %v1754
    %v1767 = vmul.f32 %v1620, %v1755
    %v1768 = vrsqrt.pop %v1764
    %v1769 = vmul.f32 %v1764, %v1768
    %vm1770 = vcmp.eq.f32.partialorder %v1764, inf
    %v1771 = vsel %vm1770, %v1764, %v1769
    %vm1772 = vcmp.eq.f32.partialorder %v1764, 0.0
    %v1773 = vand.u32 %v1764, 2147483648
    %v1774 = vsel %vm1772, %v1773, %v1771
    %v1775 = vrsqrt.pop %v1765
    %v1776 = vmul.f32 %v1765, %v1775
    %vm1777 = vcmp.eq.f32.partialorder %v1765, inf
    %v1778 = vsel %vm1777, %v1765, %v1776
    %vm1779 = vcmp.eq.f32.partialorder %v1765, 0.0
    %v1780 = vand.u32 %v1765, 2147483648
    %v1781 = vsel %vm1779, %v1780, %v1778
    %v1782 = vadd.f32 %v1774, 1e-06
    %v1783 = vadd.f32 %v1781, 1e-06
    %v1784 = vrcp.pop %v1782
    %v1785 = vmul.f32 %v1766, %v1784
    %v1786 = vrcp.pop %v1783
    %v1787 = vmul.f32 %v1767, %v1786
    %v1788 = vadd.f32 %v1785, %v1648
    %v1789 = vadd.f32 %v1787, %v1648
    %v1790 = vld [vmem:[%s9] sm:$0xff]
    %v1791 = vld [vmem:[%s9 + $0x8] sm:$0xff]
    %v1792 = vld [vmem:[%s9 + $0x10] sm:$0xff]
    %v1793 = vld [vmem:[%s9 + $0x18] sm:$0xff]
    %v1794 = vld [vmem:[%s10] sm:$0x1]
    %v1796 = vlaneseq
    %v1797 = vshrl.u32 %v1796, 7
    %v1798 = vsub.s32 0, %v1797
    %v1799 = vrot.slane %v1794, %v1798
    %v1802 = vsel %vm58, %v1788, 0
    %v1805 = vsel %vm58, %v1789, 0
    %1807 = vmatprep.subr.mxu0 0.0
    %1808 = vmatpush1.msra.mxu0 %v1790
    %1809 = vmatprep.subr.mxu0 0.0
    %1810 = vmatpush1.msra.mxu0 %v1791
    %1811 = vmatprep.subr.mxu0 0.0
    %1812 = vmatpush1.msra.mxu0 %v1792
    %1813 = vmatprep.subr.mxu0 0.0
    %1814 = vmatpush1.msra.mxu0 %v1793
    %1815 = vmatprep.subr.mxu0 0.0
    %1816 = vmatpush1.msra.mxu0 0.0
    %1817 = vmatprep.subr.mxu0 0.0
    %1818 = vmatpush1.msra.mxu0 0.0
    %1819 = vmatprep.subr.mxu0 0.0
    %1820 = vmatpush1.msra.mxu0 0.0
    %1821 = vmatprep.subr.mxu0 0.0
    %1822 = vmatpush1.msra.mxu0 0.0
    %1823 = vmatprep.subr.mxu0 0.0
    %1824 = vmatpush1.msra.mxu0 0.0
    %1825 = vmatprep.subr.mxu0 0.0
    %1826 = vmatpush1.msra.mxu0 0.0
    %1827 = vmatprep.subr.mxu0 0.0
    %1828 = vmatpush1.msra.mxu0 0.0
    %1829 = vmatprep.subr.mxu0 0.0
    %1830 = vmatpush1.msra.mxu0 0.0
    %1831 = vmatprep.subr.mxu0 0.0
    %1832 = vmatpush1.msra.mxu0 0.0
    %1833 = vmatprep.subr.mxu0 0.0
    %1834 = vmatpush1.msra.mxu0 0.0
    %1835 = vmatprep.subr.mxu0 0.0
    %1836 = vmatpush1.msra.mxu0 0.0
    %1837 = vmatprep.subr.mxu0 0.0
    %1838 = vmatpush1.msra.mxu0 0.0
    %1839 = vmatprep.subr.mxu0 0.0
    %1840 = vmatpush1.msra.mxu0 0.0
    %1841 = vmatprep.subr.mxu0 0.0
    %1842 = vmatpush1.msra.mxu0 0.0
    %1843 = vmatprep.subr.mxu0 0.0
    %1844 = vmatpush1.msra.mxu0 0.0
    %1845 = vmatprep.subr.mxu0 0.0
    %1846 = vmatpush1.msra.mxu0 0.0
    %1847 = vmatprep.subr.mxu0 0.0
    %1848 = vmatpush1.msra.mxu0 0.0
    %1849 = vmatprep.subr.mxu0 0.0
    %1850 = vmatpush1.msra.mxu0 0.0
    %1851 = vmatprep.subr.mxu0 0.0
    %1852 = vmatpush1.msra.mxu0 0.0
    %1853 = vmatprep.subr.mxu0 0.0
    %1854 = vmatpush1.msra.mxu0 0.0
    %1855 = vmatprep.subr.mxu0 0.0
    %1856 = vmatpush1.msra.mxu0 0.0
    %1857 = vmatprep.subr.mxu0 0.0
    %1858 = vmatpush1.msra.mxu0 0.0
    %1859 = vmatprep.subr.mxu0 0.0
    %1860 = vmatpush1.msra.mxu0 0.0
    %1861 = vmatprep.subr.mxu0 0.0
    %1862 = vmatpush1.msra.mxu0 0.0
    %1863 = vmatprep.subr.mxu0 0.0
    %1864 = vmatpush1.msra.mxu0 0.0
    %1865 = vmatprep.subr.mxu0 0.0
    %1866 = vmatpush1.msra.mxu0 0.0
    %1867 = vmatprep.subr.mxu0 0.0
    %1868 = vmatpush1.msra.mxu0 0.0
    %1869 = vmatprep.subr.mxu0 0.0
    %1870 = vmatpush1.msra.mxu0 0.0
    %1871 = vmatprep.mubr.f32.mxu0 0.0
    %1872 = vmatmul.mubr.f32.gmra.mrb[0].mxu0 %v1802
    %v1873 = vpop.f32.mrb[0].mxu0
    %v1874 = vadd.f32 %v1799, %v1873
    %v1875 = vpop.f32.mrb[0].mxu0
    %1876 = vmatprep.mubr.f32.mxu0 0.0
    %1877 = vmatmul.mubr.f32.gmra.mrb[0].mxu0 %v1805
    %v1878 = vpop.f32.mrb[0].mxu0
    %v1879 = vadd.f32 %v1799, %v1878
    %v1880 = vpop.f32.mrb[0].mxu0
    %1881 = vdwg.mxu0
    %v1882 = vld [vmem:[%s11] sm:$0x1]
    %v1883 = vld [vmem:[%s12] sm:$0x1]
    %v1884 = vsel %vm58, %v1874, 0.0
    %1885 = vadd.xlane.f32.xlu0 %v1884
    %v1886 = vpop.xlane.xlu0 %1885
    %v1887 = vsel %vm58, %v1879, 0.0
    %1888 = vadd.xlane.f32.xlu0 %v1887
    %v1889 = vpop.xlane.xlu0 %1888
    %v1890 = vmul.f32 %v1886, %v1601
    %v1891 = vmul.f32 %v1889, %v1601
    %v1892 = vsub.f32 %v1874, %v1890
    %v1893 = vsub.f32 %v1879, %v1891
    %v1894 = vmul.f32 %v1892, %v1892
    %v1895 = vmul.f32 %v1893, %v1893
    %v1896 = vsel %vm58, %v1894, 0.0
    %1897 = vadd.xlane.f32.xlu0 %v1896
    %v1898 = vpop.xlane.xlu0 %1897
    %v1899 = vsel %vm58, %v1895, 0.0
    %1900 = vadd.xlane.f32.xlu0 %v1899
    %v1901 = vpop.xlane.xlu0 %1900
    %v1902 = vmul.f32 %v1898, 0.032258064
    %v1903 = vmul.f32 %v1901, 0.032258064
    %v1905 = vlaneseq
    %v1906 = vshrl.u32 %v1905, 7
    %v1907 = vsub.s32 0, %v1906
    %v1908 = vrot.slane %v1882, %v1907
    %v1910 = vmul.f32 %v1908, %v1892
    %v1911 = vmul.f32 %v1908, %v1893
    %v1912 = vrsqrt.pop %v1902
    %v1913 = vmul.f32 %v1902, %v1912
    %vm1914 = vcmp.eq.f32.partialorder %v1902, inf
    %v1915 = vsel %vm1914, %v1902, %v1913
    %vm1916 = vcmp.eq.f32.partialorder %v1902, 0.0
    %v1917 = vand.u32 %v1902, 2147483648
    %v1918 = vsel %vm1916, %v1917, %v1915
    %v1919 = vrsqrt.pop %v1903
    %v1920 = vmul.f32 %v1903, %v1919
    %vm1921 = vcmp.eq.f32.partialorder %v1903, inf
    %v1922 = vsel %vm1921, %v1903, %v1920
    %vm1923 = vcmp.eq.f32.partialorder %v1903, 0.0
    %v1924 = vand.u32 %v1903, 2147483648
    %v1925 = vsel %vm1923, %v1924, %v1922
    %v1926 = vadd.f32 %v1918, 1e-06
    %v1927 = vadd.f32 %v1925, 1e-06
    %v1928 = vrcp.pop %v1926
    %v1929 = vmul.f32 %v1910, %v1928
    %v1930 = vrcp.pop %v1927
    %v1931 = vmul.f32 %v1911, %v1930
    %v1933 = vlaneseq
    %v1934 = vshrl.u32 %v1933, 7
    %v1935 = vsub.s32 0, %v1934
    %v1936 = vrot.slane %v1883, %v1935
    %v1938 = vadd.f32 %v1929, %v1936
    %v1939 = vadd.f32 %v1931, %v1936
    %v1940 = vld [vmem:[%s1] sm:$0xff]
    %v1941 = vld [vmem:[%s1 + $0x8] sm:$0xff]
    %v1942 = vld [vmem:[%s1 + $0x10] sm:$0xff]
    %v1943 = vld [vmem:[%s1 + $0x18] sm:$0xff]
    %v1944 = vld [vmem:[%s2] sm:$0x1]
    %v1946 = vlaneseq
    %v1947 = vshrl.u32 %v1946, 7
    %v1948 = vsub.s32 0, %v1947
    %v1949 = vrot.slane %v1944, %v1948
    %v1952 = vsel %vm58, %v1938, 0
    %v1955 = vsel %vm58, %v1939, 0
    %1957 = vmatprep.subr.mxu0 0.0
    %1958 = vmatpush1.msra.mxu0 %v1940
    %1959 = vmatprep.subr.mxu0 0.0
    %1960 = vmatpush1.msra.mxu0 %v1941
    %1961 = vmatprep.subr.mxu0 0.0
    %1962 = vmatpush1.msra.mxu0 %v1942
    %1963 = vmatprep.subr.mxu0 0.0
    %1964 = vmatpush1.msra.mxu0 %v1943
    %1965 = vmatprep.subr.mxu0 0.0
    %1966 = vmatpush1.msra.mxu0 0.0
    %1967 = vmatprep.subr.mxu0 0.0
    %1968 = vmatpush1.msra.mxu0 0.0
    %1969 = vmatprep.subr.mxu0 0.0
    %1970 = vmatpush1.msra.mxu0 0.0
    %1971 = vmatprep.subr.mxu0 0.0
    %1972 = vmatpush1.msra.mxu0 0.0
    %1973 = vmatprep.subr.mxu0 0.0
    %1974 = vmatpush1.msra.mxu0 0.0
    %1975 = vmatprep.subr.mxu0 0.0
    %1976 = vmatpush1.msra.mxu0 0.0
    %1977 = vmatprep.subr.mxu0 0.0
    %1978 = vmatpush1.msra.mxu0 0.0
    %1979 = vmatprep.subr.mxu0 0.0
    %1980 = vmatpush1.msra.mxu0 0.0
    %1981 = vmatprep.subr.mxu0 0.0
    %1982 = vmatpush1.msra.mxu0 0.0
    %1983 = vmatprep.subr.mxu0 0.0
    %1984 = vmatpush1.msra.mxu0 0.0
    %1985 = vmatprep.subr.mxu0 0.0
    %1986 = vmatpush1.msra.mxu0 0.0
    %1987 = vmatprep.subr.mxu0 0.0
    %1988 = vmatpush1.msra.mxu0 0.0
    %1989 = vmatprep.subr.mxu0 0.0
    %1990 = vmatpush1.msra.mxu0 0.0
    %1991 = vmatprep.subr.mxu0 0.0
    %1992 = vmatpush1.msra.mxu0 0.0
    %1993 = vmatprep.subr.mxu0 0.0
    %1994 = vmatpush1.msra.mxu0 0.0
    %1995 = vmatprep.subr.mxu0 0.0
    %1996 = vmatpush1.msra.mxu0 0.0
    %1997 = vmatprep.subr.mxu0 0.0
    %1998 = vmatpush1.msra.mxu0 0.0
    %1999 = vmatprep.subr.mxu0 0.0
    %2000 = vmatpush1.msra.mxu0 0.0
    %2001 = vmatprep.subr.mxu0 0.0
    %2002 = vmatpush1.msra.mxu0 0.0
    %2003 = vmatprep.subr.mxu0 0.0
    %2004 = vmatpush1.msra.mxu0 0.0
    %2005 = vmatprep.subr.mxu0 0.0
    %2006 = vmatpush1.msra.mxu0 0.0
    %2007 = vmatprep.subr.mxu0 0.0
    %2008 = vmatpush1.msra.mxu0 0.0
    %2009 = vmatprep.subr.mxu0 0.0
    %2010 = vmatpush1.msra.mxu0 0.0
    %2011 = vmatprep.subr.mxu0 0.0
    %2012 = vmatpush1.msra.mxu0 0.0
    %2013 = vmatprep.subr.mxu0 0.0
    %2014 = vmatpush1.msra.mxu0 0.0
    %2015 = vmatprep.subr.mxu0 0.0
    %2016 = vmatpush1.msra.mxu0 0.0
    %2017 = vmatprep.subr.mxu0 0.0
    %2018 = vmatpush1.msra.mxu0 0.0
    %2019 = vmatprep.subr.mxu0 0.0
    %2020 = vmatpush1.msra.mxu0 0.0
    %2021 = vmatprep.mubr.f32.mxu0 0.0
    %2022 = vmatmul.mubr.f32.gmra.mrb[0].mxu0 %v1952
    %v2023 = vpop.f32.mrb[0].mxu0
    %v2024 = vadd.f32 %v1949, %v2023
    %v2025 = vpop.f32.mrb[0].mxu0
    %2026 = vmatprep.mubr.f32.mxu0 0.0
    %2027 = vmatmul.mubr.f32.gmra.mrb[0].mxu0 %v1955
    %v2028 = vpop.f32.mrb[0].mxu0
    %v2029 = vadd.f32 %v1949, %v2028
    %v2030 = vpop.f32.mrb[0].mxu0
    %2031 = vdwg.mxu0
    %2033 = vrot.lane.b32.xlu0 %v2024, 96
    %v2034 = vpop.permute.xlu0 %2033
    %v2035 = vsel %vm143, %v2024, 0
    %v2037 = vsel %vm143, %v2034, 0
    %2039 = vmatprep.subr.mxu0 0.0
    %2040 = vmatpush1.xpose.msra.mxu0 %v2037
    %2041 = vmatprep.subr.mxu0 0.0
    %2042 = vmatpush1.xpose.msra.mxu0 0.0
    %2043 = vmatprep.subr.mxu0 0.0
    %2044 = vmatpush1.xpose.msra.mxu0 0.0
    %2045 = vmatprep.subr.mxu0 0.0
    %2046 = vmatpush1.xpose.msra.mxu0 0.0
    %2047 = vmatprep.subr.mxu0 0.0
    %2048 = vmatpush1.xpose.msra.mxu0 0.0
    %2049 = vmatprep.subr.mxu0 0.0
    %2050 = vmatpush1.xpose.msra.mxu0 0.0
    %2051 = vmatprep.subr.mxu0 0.0
    %2052 = vmatpush1.xpose.msra.mxu0 0.0
    %2053 = vmatprep.subr.mxu0 0.0
    %2054 = vmatpush1.xpose.msra.mxu0 0.0
    %2055 = vmatprep.subr.mxu0 0.0
    %2056 = vmatpush1.xpose.msra.mxu0 0.0
    %2057 = vmatprep.subr.mxu0 0.0
    %2058 = vmatpush1.xpose.msra.mxu0 0.0
    %2059 = vmatprep.subr.mxu0 0.0
    %2060 = vmatpush1.xpose.msra.mxu0 0.0
    %2061 = vmatprep.subr.mxu0 0.0
    %2062 = vmatpush1.xpose.msra.mxu0 0.0
    %2063 = vmatprep.subr.mxu0 0.0
    %2064 = vmatpush1.xpose.msra.mxu0 0.0
    %2065 = vmatprep.subr.mxu0 0.0
    %2066 = vmatpush1.xpose.msra.mxu0 0.0
    %2067 = vmatprep.subr.mxu0 0.0
    %2068 = vmatpush1.xpose.msra.mxu0 0.0
    %2069 = vmatprep.subr.mxu0 0.0
    %2070 = vmatpush1.xpose.msra.mxu0 0.0
    %2071 = vmatprep.subr.mxu0 0.0
    %2072 = vmatpush1.xpose.msra.mxu0 0.0
    %2073 = vmatprep.subr.mxu0 0.0
    %2074 = vmatpush1.xpose.msra.mxu0 0.0
    %2075 = vmatprep.subr.mxu0 0.0
    %2076 = vmatpush1.xpose.msra.mxu0 0.0
    %2077 = vmatprep.subr.mxu0 0.0
    %2078 = vmatpush1.xpose.msra.mxu0 0.0
    %2079 = vmatprep.subr.mxu0 0.0
    %2080 = vmatpush1.xpose.msra.mxu0 0.0
    %2081 = vmatprep.subr.mxu0 0.0
    %2082 = vmatpush1.xpose.msra.mxu0 0.0
    %2083 = vmatprep.subr.mxu0 0.0
    %2084 = vmatpush1.xpose.msra.mxu0 0.0
    %2085 = vmatprep.subr.mxu0 0.0
    %2086 = vmatpush1.xpose.msra.mxu0 0.0
    %2087 = vmatprep.subr.mxu0 0.0
    %2088 = vmatpush1.xpose.msra.mxu0 0.0
    %2089 = vmatprep.subr.mxu0 0.0
    %2090 = vmatpush1.xpose.msra.mxu0 0.0
    %2091 = vmatprep.subr.mxu0 0.0
    %2092 = vmatpush1.xpose.msra.mxu0 0.0
    %2093 = vmatprep.subr.mxu0 0.0
    %2094 = vmatpush1.xpose.msra.mxu0 0.0
    %2095 = vmatprep.subr.mxu0 0.0
    %2096 = vmatpush1.xpose.msra.mxu0 0.0
    %2097 = vmatprep.subr.mxu0 0.0
    %2098 = vmatpush1.xpose.msra.mxu0 0.0
    %2099 = vmatprep.subr.mxu0 0.0
    %2100 = vmatpush1.xpose.msra.mxu0 0.0
    %2101 = vmatprep.subr.mxu0 0.0
    %2102 = vmatpush1.xpose.msra.mxu0 0.0
    %2103 = vmatprep.mubr.f32.mxu0 0.0
    %2104 = vmatmul.mubr.f32.gmra.mrb[0].mxu0 %v2035
    %v2105 = vpop.f32.mrb[0].mxu0
    %v2106 = vadd.f32 0.0, %v2105
    %v2107 = vpop.f32.mrb[0].mxu0
    %2108 = vdwg.mxu0
    %2110 = vrot.lane.b32.xlu0 %v2029, 96
    %v2111 = vpop.permute.xlu0 %2110
    %v2112 = vsel %vm143, %v2029, 0
    %v2114 = vsel %vm143, %v2111, 0
    %2116 = vmatprep.subr.mxu0 0.0
    %2117 = vmatpush1.xpose.msra.mxu0 %v2114
    %2118 = vmatprep.subr.mxu0 0.0
    %2119 = vmatpush1.xpose.msra.mxu0 0.0
    %2120 = vmatprep.subr.mxu0 0.0
    %2121 = vmatpush1.xpose.msra.mxu0 0.0
    %2122 = vmatprep.subr.mxu0 0.0
    %2123 = vmatpush1.xpose.msra.mxu0 0.0
    %2124 = vmatprep.subr.mxu0 0.0
    %2125 = vmatpush1.xpose.msra.mxu0 0.0
    %2126 = vmatprep.subr.mxu0 0.0
    %2127 = vmatpush1.xpose.msra.mxu0 0.0
    %2128 = vmatprep.subr.mxu0 0.0
    %2129 = vmatpush1.xpose.msra.mxu0 0.0
    %2130 = vmatprep.subr.mxu0 0.0
    %2131 = vmatpush1.xpose.msra.mxu0 0.0
    %2132 = vmatprep.subr.mxu0 0.0
    %2133 = vmatpush1.xpose.msra.mxu0 0.0
    %2134 = vmatprep.subr.mxu0 0.0
    %2135 = vmatpush1.xpose.msra.mxu0 0.0
    %2136 = vmatprep.subr.mxu0 0.0
    %2137 = vmatpush1.xpose.msra.mxu0 0.0
    %2138 = vmatprep.subr.mxu0 0.0
    %2139 = vmatpush1.xpose.msra.mxu0 0.0
    %2140 = vmatprep.subr.mxu0 0.0
    %2141 = vmatpush1.xpose.msra.mxu0 0.0
    %2142 = vmatprep.subr.mxu0 0.0
    %2143 = vmatpush1.xpose.msra.mxu0 0.0
    %2144 = vmatprep.subr.mxu0 0.0
    %2145 = vmatpush1.xpose.msra.mxu0 0.0
    %2146 = vmatprep.subr.mxu0 0.0
    %2147 = vmatpush1.xpose.msra.mxu0 0.0
    %2148 = vmatprep.subr.mxu0 0.0
    %2149 = vmatpush1.xpose.msra.mxu0 0.0
    %2150 = vmatprep.subr.mxu0 0.0
    %2151 = vmatpush1.xpose.msra.mxu0 0.0
    %2152 = vmatprep.subr.mxu0 0.0
    %2153 = vmatpush1.xpose.msra.mxu0 0.0
    %2154 = vmatprep.subr.mxu0 0.0
    %2155 = vmatpush1.xpose.msra.mxu0 0.0
    %2156 = vmatprep.subr.mxu0 0.0
    %2157 = vmatpush1.xpose.msra.mxu0 0.0
    %2158 = vmatprep.subr.mxu0 0.0
    %2159 = vmatpush1.xpose.msra.mxu0 0.0
    %2160 = vmatprep.subr.mxu0 0.0
    %2161 = vmatpush1.xpose.msra.mxu0 0.0
    %2162 = vmatprep.subr.mxu0 0.0
    %2163 = vmatpush1.xpose.msra.mxu0 0.0
    %2164 = vmatprep.subr.mxu0 0.0
    %2165 = vmatpush1.xpose.msra.mxu0 0.0
    %2166 = vmatprep.subr.mxu0 0.0
    %2167 = vmatpush1.xpose.msra.mxu0 0.0
    %2168 = vmatprep.subr.mxu0 0.0
    %2169 = vmatpush1.xpose.msra.mxu0 0.0
    %2170 = vmatprep.subr.mxu0 0.0
    %2171 = vmatpush1.xpose.msra.mxu0 0.0
    %2172 = vmatprep.subr.mxu0 0.0
    %2173 = vmatpush1.xpose.msra.mxu0 0.0
    %2174 = vmatprep.subr.mxu0 0.0
    %2175 = vmatpush1.xpose.msra.mxu0 0.0
    %2176 = vmatprep.subr.mxu0 0.0
    %2177 = vmatpush1.xpose.msra.mxu0 0.0
    %2178 = vmatprep.subr.mxu0 0.0
    %2179 = vmatpush1.xpose.msra.mxu0 0.0
    %2180 = vmatprep.mubr.f32.mxu0 0.0
    %2181 = vmatmul.mubr.f32.gmra.mrb[0].mxu0 %v2112
    %v2182 = vpop.f32.mrb[0].mxu0
    %v2183 = vadd.f32 0.0, %v2182
    %v2184 = vpop.f32.mrb[0].mxu0
    %2185 = vdwg.mxu0
    %v2186 = vmul.f32 %v2106, 0.35355338
    %v2187 = vmul.f32 %v2183, 0.35355338
    %v2188 = vsel %vm143, %v2186, -inf
    %2189 = vmax.xlane.f32.xlu0 %v2188
    %v2190 = vpop.xlane.xlu0 %2189
    %v2191 = vsel %vm143, %v2187, -inf
    %2192 = vmax.xlane.f32.xlu0 %v2191
    %v2193 = vpop.xlane.xlu0 %2192
    %v2194 = vsub.f32 %v2186, %v2190
    %v2195 = vsub.f32 %v2187, %v2193
    %v2196 = vmul.f32 %v2194, 1.442695
    %v2197 = vpow.pop %v2196
    %v2198 = vmul.f32 %v2195, 1.442695
    %v2199 = vpow.pop %v2198
    %v2200 = vsel %vm143, %v2197, 0.0
    %2201 = vadd.xlane.f32.xlu0 %v2200
    %v2202 = vpop.xlane.xlu0 %2201
    %v2203 = vsel %vm143, %v2199, 0.0
    %2204 = vadd.xlane.f32.xlu0 %v2203
    %v2205 = vpop.xlane.xlu0 %2204
    %v2206 = vrcp.pop %v2202
    %v2207 = vmul.f32 %v2197, %v2206
    %v2208 = vrcp.pop %v2205
    %v2209 = vmul.f32 %v2199, %v2208
    %2210 = vrot.lane.b32.xlu0 %v2024, 64
    %v2211 = vpop.permute.xlu0 %2210
    %v2214 = vsel %vm143, %v2207, 0
    %2216 = vmatprep.subr.mxu0 0.0
    %2217 = vmatpush1.msra.mxu0 %v2211
    %2218 = vmatprep.subr.mxu0 0.0
    %2219 = vmatpush1.msra.mxu0 0.0
    %2220 = vmatprep.subr.mxu0 0.0
    %2221 = vmatpush1.msra.mxu0 0.0
    %2222 = vmatprep.subr.mxu0 0.0
    %2223 = vmatpush1.msra.mxu0 0.0
    %2224 = vmatprep.subr.mxu0 0.0
    %2225 = vmatpush1.msra.mxu0 0.0
    %2226 = vmatprep.subr.mxu0 0.0
    %2227 = vmatpush1.msra.mxu0 0.0
    %2228 = vmatprep.subr.mxu0 0.0
    %2229 = vmatpush1.msra.mxu0 0.0
    %2230 = vmatprep.subr.mxu0 0.0
    %2231 = vmatpush1.msra.mxu0 0.0
    %2232 = vmatprep.subr.mxu0 0.0
    %2233 = vmatpush1.msra.mxu0 0.0
    %2234 = vmatprep.subr.mxu0 0.0
    %2235 = vmatpush1.msra.mxu0 0.0
    %2236 = vmatprep.subr.mxu0 0.0
    %2237 = vmatpush1.msra.mxu0 0.0
    %2238 = vmatprep.subr.mxu0 0.0
    %2239 = vmatpush1.msra.mxu0 0.0
    %2240 = vmatprep.subr.mxu0 0.0
    %2241 = vmatpush1.msra.mxu0 0.0
    %2242 = vmatprep.subr.mxu0 0.0
    %2243 = vmatpush1.msra.mxu0 0.0
    %2244 = vmatprep.subr.mxu0 0.0
    %2245 = vmatpush1.msra.mxu0 0.0
    %2246 = vmatprep.subr.mxu0 0.0
    %2247 = vmatpush1.msra.mxu0 0.0
    %2248 = vmatprep.subr.mxu0 0.0
    %2249 = vmatpush1.msra.mxu0 0.0
    %2250 = vmatprep.subr.mxu0 0.0
    %2251 = vmatpush1.msra.mxu0 0.0
    %2252 = vmatprep.subr.mxu0 0.0
    %2253 = vmatpush1.msra.mxu0 0.0
    %2254 = vmatprep.subr.mxu0 0.0
    %2255 = vmatpush1.msra.mxu0 0.0
    %2256 = vmatprep.subr.mxu0 0.0
    %2257 = vmatpush1.msra.mxu0 0.0
    %2258 = vmatprep.subr.mxu0 0.0
    %2259 = vmatpush1.msra.mxu0 0.0
    %2260 = vmatprep.subr.mxu0 0.0
    %2261 = vmatpush1.msra.mxu0 0.0
    %2262 = vmatprep.subr.mxu0 0.0
    %2263 = vmatpush1.msra.mxu0 0.0
    %2264 = vmatprep.subr.mxu0 0.0
    %2265 = vmatpush1.msra.mxu0 0.0
    %2266 = vmatprep.subr.mxu0 0.0
    %2267 = vmatpush1.msra.mxu0 0.0
    %2268 = vmatprep.subr.mxu0 0.0
    %2269 = vmatpush1.msra.mxu0 0.0
    %2270 = vmatprep.subr.mxu0 0.0
    %2271 = vmatpush1.msra.mxu0 0.0
    %2272 = vmatprep.subr.mxu0 0.0
    %2273 = vmatpush1.msra.mxu0 0.0
    %2274 = vmatprep.subr.mxu0 0.0
    %2275 = vmatpush1.msra.mxu0 0.0
    %2276 = vmatprep.subr.mxu0 0.0
    %2277 = vmatpush1.msra.mxu0 0.0
    %2278 = vmatprep.subr.mxu0 0.0
    %2279 = vmatpush1.msra.mxu0 0.0
    %2280 = vmatprep.mubr.f32.mxu0 0.0
    %2281 = vmatmul.mubr.f32.gmra.mrb[0].mxu0 %v2214
    %v2282 = vpop.f32.mrb[0].mxu0
    %v2283 = vadd.f32 0.0, %v2282
    %v2284 = vpop.f32.mrb[0].mxu0
    %2285 = vdwg.mxu0
    %2286 = vrot.lane.b32.xlu0 %v2029, 64
    %v2287 = vpop.permute.xlu0 %2286
    %v2290 = vsel %vm143, %v2209, 0
    %2292 = vmatprep.subr.mxu0 0.0
    %2293 = vmatpush1.msra.mxu0 %v2287
    %2294 = vmatprep.subr.mxu0 0.0
    %2295 = vmatpush1.msra.mxu0 0.0
    %2296 = vmatprep.subr.mxu0 0.0
    %2297 = vmatpush1.msra.mxu0 0.0
    %2298 = vmatprep.subr.mxu0 0.0
    %2299 = vmatpush1.msra.mxu0 0.0
    %2300 = vmatprep.subr.mxu0 0.0
    %2301 = vmatpush1.msra.mxu0 0.0
    %2302 = vmatprep.subr.mxu0 0.0
    %2303 = vmatpush1.msra.mxu0 0.0
    %2304 = vmatprep.subr.mxu0 0.0
    %2305 = vmatpush1.msra.mxu0 0.0
    %2306 = vmatprep.subr.mxu0 0.0
    %2307 = vmatpush1.msra.mxu0 0.0
    %2308 = vmatprep.subr.mxu0 0.0
    %2309 = vmatpush1.msra.mxu0 0.0
    %2310 = vmatprep.subr.mxu0 0.0
    %2311 = vmatpush1.msra.mxu0 0.0
    %2312 = vmatprep.subr.mxu0 0.0
    %2313 = vmatpush1.msra.mxu0 0.0
    %2314 = vmatprep.subr.mxu0 0.0
    %2315 = vmatpush1.msra.mxu0 0.0
    %2316 = vmatprep.subr.mxu0 0.0
    %2317 = vmatpush1.msra.mxu0 0.0
    %2318 = vmatprep.subr.mxu0 0.0
    %2319 = vmatpush1.msra.mxu0 0.0
    %2320 = vmatprep.subr.mxu0 0.0
    %2321 = vmatpush1.msra.mxu0 0.0
    %2322 = vmatprep.subr.mxu0 0.0
    %2323 = vmatpush1.msra.mxu0 0.0
    %2324 = vmatprep.subr.mxu0 0.0
    %2325 = vmatpush1.msra.mxu0 0.0
    %2326 = vmatprep.subr.mxu0 0.0
    %2327 = vmatpush1.msra.mxu0 0.0
    %2328 = vmatprep.subr.mxu0 0.0
    %2329 = vmatpush1.msra.mxu0 0.0
    %2330 = vmatprep.subr.mxu0 0.0
    %2331 = vmatpush1.msra.mxu0 0.0
    %2332 = vmatprep.subr.mxu0 0.0
    %2333 = vmatpush1.msra.mxu0 0.0
    %2334 = vmatprep.subr.mxu0 0.0
    %2335 = vmatpush1.msra.mxu0 0.0
    %2336 = vmatprep.subr.mxu0 0.0
    %2337 = vmatpush1.msra.mxu0 0.0
    %2338 = vmatprep.subr.mxu0 0.0
    %2339 = vmatpush1.msra.mxu0 0.0
    %2340 = vmatprep.subr.mxu0 0.0
    %2341 = vmatpush1.msra.mxu0 0.0
    %2342 = vmatprep.subr.mxu0 0.0
    %2343 = vmatpush1.msra.mxu0 0.0
    %2344 = vmatprep.subr.mxu0 0.0
    %2345 = vmatpush1.msra.mxu0 0.0
    %2346 = vmatprep.subr.mxu0 0.0
    %2347 = vmatpush1.msra.mxu0 0.0
    %2348 = vmatprep.subr.mxu0 0.0
    %2349 = vmatpush1.msra.mxu0 0.0
    %2350 = vmatprep.subr.mxu0 0.0
    %2351 = vmatpush1.msra.mxu0 0.0
    %2352 = vmatprep.subr.mxu0 0.0
    %2353 = vmatpush1.msra.mxu0 0.0
    %2354 = vmatprep.subr.mxu0 0.0
    %2355 = vmatpush1.msra.mxu0 0.0
    %2356 = vmatprep.mubr.f32.mxu0 0.0
    %2357 = vmatmul.mubr.f32.gmra.mrb[0].mxu0 %v2290
    %v2358 = vpop.f32.mrb[0].mxu0
    %v2359 = vadd.f32 0.0, %v2358
    %v2360 = vpop.f32.mrb[0].mxu0
    %2361 = vdwg.mxu0
    %2362 = vrot.lane.b32.xlu0 %v2024, 120
    %v2363 = vpop.permute.xlu0 %2362
    %2364 = vrot.lane.b32.xlu0 %v2024, 88
    %v2365 = vpop.permute.xlu0 %2364
    %v2366 = vsel %vm143, %v2363, 0
    %v2368 = vsel %vm143, %v2365, 0
    %2370 = vmatprep.subr.mxu0 0.0
    %2371 = vmatpush1.xpose.msra.mxu0 %v2368
    %2372 = vmatprep.subr.mxu0 0.0
    %2373 = vmatpush1.xpose.msra.mxu0 0.0
    %2374 = vmatprep.subr.mxu0 0.0
    %2375 = vmatpush1.xpose.msra.mxu0 0.0
    %2376 = vmatprep.subr.mxu0 0.0
    %2377 = vmatpush1.xpose.msra.mxu0 0.0
    %2378 = vmatprep.subr.mxu0 0.0
    %2379 = vmatpush1.xpose.msra.mxu0 0.0
    %2380 = vmatprep.subr.mxu0 0.0
    %2381 = vmatpush1.xpose.msra.mxu0 0.0
    %2382 = vmatprep.subr.mxu0 0.0
    %2383 = vmatpush1.xpose.msra.mxu0 0.0
    %2384 = vmatprep.subr.mxu0 0.0
    %2385 = vmatpush1.xpose.msra.mxu0 0.0
    %2386 = vmatprep.subr.mxu0 0.0
    %2387 = vmatpush1.xpose.msra.mxu0 0.0
    %2388 = vmatprep.subr.mxu0 0.0
    %2389 = vmatpush1.xpose.msra.mxu0 0.0
    %2390 = vmatprep.subr.mxu0 0.0
    %2391 = vmatpush1.xpose.msra.mxu0 0.0
    %2392 = vmatprep.subr.mxu0 0.0
    %2393 = vmatpush1.xpose.msra.mxu0 0.0
    %2394 = vmatprep.subr.mxu0 0.0
    %2395 = vmatpush1.xpose.msra.mxu0 0.0
    %2396 = vmatprep.subr.mxu0 0.0
    %2397 = vmatpush1.xpose.msra.mxu0 0.0
    %2398 = vmatprep.subr.mxu0 0.0
    %2399 = vmatpush1.xpose.msra.mxu0 0.0
    %2400 = vmatprep.subr.mxu0 0.0
    %2401 = vmatpush1.xpose.msra.mxu0 0.0
    %2402 = vmatprep.subr.mxu0 0.0
    %2403 = vmatpush1.xpose.msra.mxu0 0.0
    %2404 = vmatprep.subr.mxu0 0.0
    %2405 = vmatpush1.xpose.msra.mxu0 0.0
    %2406 = vmatprep.subr.mxu0 0.0
    %2407 = vmatpush1.xpose.msra.mxu0 0.0
    %2408 = vmatprep.subr.mxu0 0.0
    %2409 = vmatpush1.xpose.msra.mxu0 0.0
    %2410 = vmatprep.subr.mxu0 0.0
    %2411 = vmatpush1.xpose.msra.mxu0 0.0
    %2412 = vmatprep.subr.mxu0 0.0
    %2413 = vmatpush1.xpose.msra.mxu0 0.0
    %2414 = vmatprep.subr.mxu0 0.0
    %2415 = vmatpush1.xpose.msra.mxu0 0.0
    %2416 = vmatprep.subr.mxu0 0.0
    %2417 = vmatpush1.xpose.msra.mxu0 0.0
    %2418 = vmatprep.subr.mxu0 0.0
    %2419 = vmatpush1.xpose.msra.mxu0 0.0
    %2420 = vmatprep.subr.mxu0 0.0
    %2421 = vmatpush1.xpose.msra.mxu0 0.0
    %2422 = vmatprep.subr.mxu0 0.0
    %2423 = vmatpush1.xpose.msra.mxu0 0.0
    %2424 = vmatprep.subr.mxu0 0.0
    %2425 = vmatpush1.xpose.msra.mxu0 0.0
    %2426 = vmatprep.subr.mxu0 0.0
    %2427 = vmatpush1.xpose.msra.mxu0 0.0
    %2428 = vmatprep.subr.mxu0 0.0
    %2429 = vmatpush1.xpose.msra.mxu0 0.0
    %2430 = vmatprep.subr.mxu0 0.0
    %2431 = vmatpush1.xpose.msra.mxu0 0.0
    %2432 = vmatprep.subr.mxu0 0.0
    %2433 = vmatpush1.xpose.msra.mxu0 0.0
    %2434 = vmatprep.mubr.f32.mxu0 0.0
    %2435 = vmatmul.mubr.f32.gmra.mrb[0].mxu0 %v2366
    %v2436 = vpop.f32.mrb[0].mxu0
    %v2437 = vadd.f32 0.0, %v2436
    %v2438 = vpop.f32.mrb[0].mxu0
    %2439 = vdwg.mxu0
    %2440 = vrot.lane.b32.xlu0 %v2029, 120
    %v2441 = vpop.permute.xlu0 %2440
    %2442 = vrot.lane.b32.xlu0 %v2029, 88
    %v2443 = vpop.permute.xlu0 %2442
    %v2444 = vsel %vm143, %v2441, 0
    %v2446 = vsel %vm143, %v2443, 0
    %2448 = vmatprep.subr.mxu0 0.0
    %2449 = vmatpush1.xpose.msra.mxu0 %v2446
    %2450 = vmatprep.subr.mxu0 0.0
    %2451 = vmatpush1.xpose.msra.mxu0 0.0
    %2452 = vmatprep.subr.mxu0 0.0
    %2453 = vmatpush1.xpose.msra.mxu0 0.0
    %2454 = vmatprep.subr.mxu0 0.0
    %2455 = vmatpush1.xpose.msra.mxu0 0.0
    %2456 = vmatprep.subr.mxu0 0.0
    %2457 = vmatpush1.xpose.msra.mxu0 0.0
    %2458 = vmatprep.subr.mxu0 0.0
    %2459 = vmatpush1.xpose.msra.mxu0 0.0
    %2460 = vmatprep.subr.mxu0 0.0
    %2461 = vmatpush1.xpose.msra.mxu0 0.0
    %2462 = vmatprep.subr.mxu0 0.0
    %2463 = vmatpush1.xpose.msra.mxu0 0.0
    %2464 = vmatprep.subr.mxu0 0.0
    %2465 = vmatpush1.xpose.msra.mxu0 0.0
    %2466 = vmatprep.subr.mxu0 0.0
    %2467 = vmatpush1.xpose.msra.mxu0 0.0
    %2468 = vmatprep.subr.mxu0 0.0
    %2469 = vmatpush1.xpose.msra.mxu0 0.0
    %2470 = vmatprep.subr.mxu0 0.0
    %2471 = vmatpush1.xpose.msra.mxu0 0.0
    %2472 = vmatprep.subr.mxu0 0.0
    %2473 = vmatpush1.xpose.msra.mxu0 0.0
    %2474 = vmatprep.subr.mxu0 0.0
    %2475 = vmatpush1.xpose.msra.mxu0 0.0
    %2476 = vmatprep.subr.mxu0 0.0
    %2477 = vmatpush1.xpose.msra.mxu0 0.0
    %2478 = vmatprep.subr.mxu0 0.0
    %2479 = vmatpush1.xpose.msra.mxu0 0.0
    %2480 = vmatprep.subr.mxu0 0.0
    %2481 = vmatpush1.xpose.msra.mxu0 0.0
    %2482 = vmatprep.subr.mxu0 0.0
    %2483 = vmatpush1.xpose.msra.mxu0 0.0
    %2484 = vmatprep.subr.mxu0 0.0
    %2485 = vmatpush1.xpose.msra.mxu0 0.0
    %2486 = vmatprep.subr.mxu0 0.0
    %2487 = vmatpush1.xpose.msra.mxu0 0.0
    %2488 = vmatprep.subr.mxu0 0.0
    %2489 = vmatpush1.xpose.msra.mxu0 0.0
    %2490 = vmatprep.subr.mxu0 0.0
    %2491 = vmatpush1.xpose.msra.mxu0 0.0
    %2492 = vmatprep.subr.mxu0 0.0
    %2493 = vmatpush1.xpose.msra.mxu0 0.0
    %2494 = vmatprep.subr.mxu0 0.0
    %2495 = vmatpush1.xpose.msra.mxu0 0.0
    %2496 = vmatprep.subr.mxu0 0.0
    %2497 = vmatpush1.xpose.msra.mxu0 0.0
    %2498 = vmatprep.subr.mxu0 0.0
    %2499 = vmatpush1.xpose.msra.mxu0 0.0
    %2500 = vmatprep.subr.mxu0 0.0
    %2501 = vmatpush1.xpose.msra.mxu0 0.0
    %2502 = vmatprep.subr.mxu0 0.0
    %2503 = vmatpush1.xpose.msra.mxu0 0.0
    %2504 = vmatprep.subr.mxu0 0.0
    %2505 = vmatpush1.xpose.msra.mxu0 0.0
    %2506 = vmatprep.subr.mxu0 0.0
    %2507 = vmatpush1.xpose.msra.mxu0 0.0
    %2508 = vmatprep.subr.mxu0 0.0
    %2509 = vmatpush1.xpose.msra.mxu0 0.0
    %2510 = vmatprep.subr.mxu0 0.0
    %2511 = vmatpush1.xpose.msra.mxu0 0.0
    %2512 = vmatprep.mubr.f32.mxu0 0.0
    %2513 = vmatmul.mubr.f32.gmra.mrb[0].mxu0 %v2444
    %v2514 = vpop.f32.mrb[0].mxu0
    %v2515 = vadd.f32 0.0, %v2514
    %v2516 = vpop.f32.mrb[0].mxu0
    %2517 = vdwg.mxu0
    %v2518 = vmul.f32 %v2437, 0.35355338
    %v2519 = vmul.f32 %v2515, 0.35355338
    %v2520 = vsel %vm143, %v2518, -inf
    %2521 = vmax.xlane.f32.xlu0 %v2520
    %v2522 = vpop.xlane.xlu0 %2521
    %v2523 = vsel %vm143, %v2519, -inf
    %2524 = vmax.xlane.f32.xlu0 %v2523
    %v2525 = vpop.xlane.xlu0 %2524
    %v2526 = vsub.f32 %v2518, %v2522
    %v2527 = vsub.f32 %v2519, %v2525
    %v2528 = vmul.f32 %v2526, 1.442695
    %v2529 = vpow.pop %v2528
    %v2530 = vmul.f32 %v2527, 1.442695
    %v2531 = vpow.pop %v2530
    %v2532 = vsel %vm143, %v2529, 0.0
    %2533 = vadd.xlane.f32.xlu0 %v2532
    %v2534 = vpop.xlane.xlu0 %2533
    %v2535 = vsel %vm143, %v2531, 0.0
    %2536 = vadd.xlane.f32.xlu0 %v2535
    %v2537 = vpop.xlane.xlu0 %2536
    %v2538 = vrcp.pop %v2534
    %v2539 = vmul.f32 %v2529, %v2538
    %v2540 = vrcp.pop %v2537
    %v2541 = vmul.f32 %v2531, %v2540
    %2542 = vrot.lane.b32.xlu0 %v2024, 56
    %v2543 = vpop.permute.xlu0 %2542
    %v2546 = vsel %vm143, %v2539, 0
    %2548 = vmatprep.subr.mxu0 0.0
    %2549 = vmatpush1.msra.mxu0 %v2543
    %2550 = vmatprep.subr.mxu0 0.0
    %2551 = vmatpush1.msra.mxu0 0.0
    %2552 = vmatprep.subr.mxu0 0.0
    %2553 = vmatpush1.msra.mxu0 0.0
    %2554 = vmatprep.subr.mxu0 0.0
    %2555 = vmatpush1.msra.mxu0 0.0
    %2556 = vmatprep.subr.mxu0 0.0
    %2557 = vmatpush1.msra.mxu0 0.0
    %2558 = vmatprep.subr.mxu0 0.0
    %2559 = vmatpush1.msra.mxu0 0.0
    %2560 = vmatprep.subr.mxu0 0.0
    %2561 = vmatpush1.msra.mxu0 0.0
    %2562 = vmatprep.subr.mxu0 0.0
    %2563 = vmatpush1.msra.mxu0 0.0
    %2564 = vmatprep.subr.mxu0 0.0
    %2565 = vmatpush1.msra.mxu0 0.0
    %2566 = vmatprep.subr.mxu0 0.0
    %2567 = vmatpush1.msra.mxu0 0.0
    %2568 = vmatprep.subr.mxu0 0.0
    %2569 = vmatpush1.msra.mxu0 0.0
    %2570 = vmatprep.subr.mxu0 0.0
    %2571 = vmatpush1.msra.mxu0 0.0
    %2572 = vmatprep.subr.mxu0 0.0
    %2573 = vmatpush1.msra.mxu0 0.0
    %2574 = vmatprep.subr.mxu0 0.0
    %2575 = vmatpush1.msra.mxu0 0.0
    %2576 = vmatprep.subr.mxu0 0.0
    %2577 = vmatpush1.msra.mxu0 0.0
    %2578 = vmatprep.subr.mxu0 0.0
    %2579 = vmatpush1.msra.mxu0 0.0
    %2580 = vmatprep.subr.mxu0 0.0
    %2581 = vmatpush1.msra.mxu0 0.0
    %2582 = vmatprep.subr.mxu0 0.0
    %2583 = vmatpush1.msra.mxu0 0.0
    %2584 = vmatprep.subr.mxu0 0.0
    %2585 = vmatpush1.msra.mxu0 0.0
    %2586 = vmatprep.subr.mxu0 0.0
    %2587 = vmatpush1.msra.mxu0 0.0
    %2588 = vmatprep.subr.mxu0 0.0
    %2589 = vmatpush1.msra.mxu0 0.0
    %2590 = vmatprep.subr.mxu0 0.0
    %2591 = vmatpush1.msra.mxu0 0.0
    %2592 = vmatprep.subr.mxu0 0.0
    %2593 = vmatpush1.msra.mxu0 0.0
    %2594 = vmatprep.subr.mxu0 0.0
    %2595 = vmatpush1.msra.mxu0 0.0
    %2596 = vmatprep.subr.mxu0 0.0
    %2597 = vmatpush1.msra.mxu0 0.0
    %2598 = vmatprep.subr.mxu0 0.0
    %2599 = vmatpush1.msra.mxu0 0.0
    %2600 = vmatprep.subr.mxu0 0.0
    %2601 = vmatpush1.msra.mxu0 0.0
    %2602 = vmatprep.subr.mxu0 0.0
    %2603 = vmatpush1.msra.mxu0 0.0
    %2604 = vmatprep.subr.mxu0 0.0
    %2605 = vmatpush1.msra.mxu0 0.0
    %2606 = vmatprep.subr.mxu0 0.0
    %2607 = vmatpush1.msra.mxu0 0.0
    %2608 = vmatprep.subr.mxu0 0.0
    %2609 = vmatpush1.msra.mxu0 0.0
    %2610 = vmatprep.subr.mxu0 0.0
    %2611 = vmatpush1.msra.mxu0 0.0
    %2612 = vmatprep.mubr.f32.mxu0 0.0
    %2613 = vmatmul.mubr.f32.gmra.mrb[0].mxu0 %v2546
    %v2614 = vpop.f32.mrb[0].mxu0
    %v2615 = vadd.f32 0.0, %v2614
    %v2616 = vpop.f32.mrb[0].mxu0
    %2617 = vdwg.mxu0
    %2618 = vrot.lane.b32.xlu0 %v2029, 56
    %v2619 = vpop.permute.xlu0 %2618
    %v2622 = vsel %vm143, %v2541, 0
    %2624 = vmatprep.subr.mxu0 0.0
    %2625 = vmatpush1.msra.mxu0 %v2619
    %2626 = vmatprep.subr.mxu0 0.0
    %2627 = vmatpush1.msra.mxu0 0.0
    %2628 = vmatprep.subr.mxu0 0.0
    %2629 = vmatpush1.msra.mxu0 0.0
    %2630 = vmatprep.subr.mxu0 0.0
    %2631 = vmatpush1.msra.mxu0 0.0
    %2632 = vmatprep.subr.mxu0 0.0
    %2633 = vmatpush1.msra.mxu0 0.0
    %2634 = vmatprep.subr.mxu0 0.0
    %2635 = vmatpush1.msra.mxu0 0.0
    %2636 = vmatprep.subr.mxu0 0.0
    %2637 = vmatpush1.msra.mxu0 0.0
    %2638 = vmatprep.subr.mxu0 0.0
    %2639 = vmatpush1.msra.mxu0 0.0
    %2640 = vmatprep.subr.mxu0 0.0
    %2641 = vmatpush1.msra.mxu0 0.0
    %2642 = vmatprep.subr.mxu0 0.0
    %2643 = vmatpush1.msra.mxu0 0.0
    %2644 = vmatprep.subr.mxu0 0.0
    %2645 = vmatpush1.msra.mxu0 0.0
    %2646 = vmatprep.subr.mxu0 0.0
    %2647 = vmatpush1.msra.mxu0 0.0
    %2648 = vmatprep.subr.mxu0 0.0
    %2649 = vmatpush1.msra.mxu0 0.0
    %2650 = vmatprep.subr.mxu0 0.0
    %2651 = vmatpush1.msra.mxu0 0.0
    %2652 = vmatprep.subr.mxu0 0.0
    %2653 = vmatpush1.msra.mxu0 0.0
    %2654 = vmatprep.subr.mxu0 0.0
    %2655 = vmatpush1.msra.mxu0 0.0
    %2656 = vmatprep.subr.mxu0 0.0
    %2657 = vmatpush1.msra.mxu0 0.0
    %2658 = vmatprep.subr.mxu0 0.0
    %2659 = vmatpush1.msra.mxu0 0.0
    %2660 = vmatprep.subr.mxu0 0.0
    %2661 = vmatpush1.msra.mxu0 0.0
    %2662 = vmatprep.subr.mxu0 0.0
    %2663 = vmatpush1.msra.mxu0 0.0
    %2664 = vmatprep.subr.mxu0 0.0
    %2665 = vmatpush1.msra.mxu0 0.0
    %2666 = vmatprep.subr.mxu0 0.0
    %2667 = vmatpush1.msra.mxu0 0.0
    %2668 = vmatprep.subr.mxu0 0.0
    %2669 = vmatpush1.msra.mxu0 0.0
    %2670 = vmatprep.subr.mxu0 0.0
    %2671 = vmatpush1.msra.mxu0 0.0
    %2672 = vmatprep.subr.mxu0 0.0
    %2673 = vmatpush1.msra.mxu0 0.0
    %2674 = vmatprep.subr.mxu0 0.0
    %2675 = vmatpush1.msra.mxu0 0.0
    %2676 = vmatprep.subr.mxu0 0.0
    %2677 = vmatpush1.msra.mxu0 0.0
    %2678 = vmatprep.subr.mxu0 0.0
    %2679 = vmatpush1.msra.mxu0 0.0
    %2680 = vmatprep.subr.mxu0 0.0
    %2681 = vmatpush1.msra.mxu0 0.0
    %2682 = vmatprep.subr.mxu0 0.0
    %2683 = vmatpush1.msra.mxu0 0.0
    %2684 = vmatprep.subr.mxu0 0.0
    %2685 = vmatpush1.msra.mxu0 0.0
    %2686 = vmatprep.subr.mxu0 0.0
    %2687 = vmatpush1.msra.mxu0 0.0
    %2688 = vmatprep.mubr.f32.mxu0 0.0
    %2689 = vmatmul.mubr.f32.gmra.mrb[0].mxu0 %v2622
    %v2690 = vpop.f32.mrb[0].mxu0
    %v2691 = vadd.f32 0.0, %v2690
    %v2692 = vpop.f32.mrb[0].mxu0
    %2693 = vdwg.mxu0
    %2694 = vrot.lane.b32.xlu0 %v2024, 112
    %v2695 = vpop.permute.xlu0 %2694
    %2696 = vrot.lane.b32.xlu0 %v2024, 80
    %v2697 = vpop.permute.xlu0 %2696
    %v2698 = vsel %vm143, %v2695, 0
    %v2700 = vsel %vm143, %v2697, 0
    %2702 = vmatprep.subr.mxu0 0.0
    %2703 = vmatpush1.xpose.msra.mxu0 %v2700
    %2704 = vmatprep.subr.mxu0 0.0
    %2705 = vmatpush1.xpose.msra.mxu0 0.0
    %2706 = vmatprep.subr.mxu0 0.0
    %2707 = vmatpush1.xpose.msra.mxu0 0.0
    %2708 = vmatprep.subr.mxu0 0.0
    %2709 = vmatpush1.xpose.msra.mxu0 0.0
    %2710 = vmatprep.subr.mxu0 0.0
    %2711 = vmatpush1.xpose.msra.mxu0 0.0
    %2712 = vmatprep.subr.mxu0 0.0
    %2713 = vmatpush1.xpose.msra.mxu0 0.0
    %2714 = vmatprep.subr.mxu0 0.0
    %2715 = vmatpush1.xpose.msra.mxu0 0.0
    %2716 = vmatprep.subr.mxu0 0.0
    %2717 = vmatpush1.xpose.msra.mxu0 0.0
    %2718 = vmatprep.subr.mxu0 0.0
    %2719 = vmatpush1.xpose.msra.mxu0 0.0
    %2720 = vmatprep.subr.mxu0 0.0
    %2721 = vmatpush1.xpose.msra.mxu0 0.0
    %2722 = vmatprep.subr.mxu0 0.0
    %2723 = vmatpush1.xpose.msra.mxu0 0.0
    %2724 = vmatprep.subr.mxu0 0.0
    %2725 = vmatpush1.xpose.msra.mxu0 0.0
    %2726 = vmatprep.subr.mxu0 0.0
    %2727 = vmatpush1.xpose.msra.mxu0 0.0
    %2728 = vmatprep.subr.mxu0 0.0
    %2729 = vmatpush1.xpose.msra.mxu0 0.0
    %2730 = vmatprep.subr.mxu0 0.0
    %2731 = vmatpush1.xpose.msra.mxu0 0.0
    %2732 = vmatprep.subr.mxu0 0.0
    %2733 = vmatpush1.xpose.msra.mxu0 0.0
    %2734 = vmatprep.subr.mxu0 0.0
    %2735 = vmatpush1.xpose.msra.mxu0 0.0
    %2736 = vmatprep.subr.mxu0 0.0
    %2737 = vmatpush1.xpose.msra.mxu0 0.0
    %2738 = vmatprep.subr.mxu0 0.0
    %2739 = vmatpush1.xpose.msra.mxu0 0.0
    %2740 = vmatprep.subr.mxu0 0.0
    %2741 = vmatpush1.xpose.msra.mxu0 0.0
    %2742 = vmatprep.subr.mxu0 0.0
    %2743 = vmatpush1.xpose.msra.mxu0 0.0
    %2744 = vmatprep.subr.mxu0 0.0
    %2745 = vmatpush1.xpose.msra.mxu0 0.0
    %2746 = vmatprep.subr.mxu0 0.0
    %2747 = vmatpush1.xpose.msra.mxu0 0.0
    %2748 = vmatprep.subr.mxu0 0.0
    %2749 = vmatpush1.xpose.msra.mxu0 0.0
    %2750 = vmatprep.subr.mxu0 0.0
    %2751 = vmatpush1.xpose.msra.mxu0 0.0
    %2752 = vmatprep.subr.mxu0 0.0
    %2753 = vmatpush1.xpose.msra.mxu0 0.0
    %2754 = vmatprep.subr.mxu0 0.0
    %2755 = vmatpush1.xpose.msra.mxu0 0.0
    %2756 = vmatprep.subr.mxu0 0.0
    %2757 = vmatpush1.xpose.msra.mxu0 0.0
    %2758 = vmatprep.subr.mxu0 0.0
    %2759 = vmatpush1.xpose.msra.mxu0 0.0
    %2760 = vmatprep.subr.mxu0 0.0
    %2761 = vmatpush1.xpose.msra.mxu0 0.0
    %2762 = vmatprep.subr.mxu0 0.0
    %2763 = vmatpush1.xpose.msra.mxu0 0.0
    %2764 = vmatprep.subr.mxu0 0.0
    %2765 = vmatpush1.xpose.msra.mxu0 0.0
    %2766 = vmatprep.mubr.f32.mxu0 0.0
    %2767 = vmatmul.mubr.f32.gmra.mrb[0].mxu0 %v2698
    %v2768 = vpop.f32.mrb[0].mxu0
    %v2769 = vadd.f32 0.0, %v2768
    %v2770 = vpop.f32.mrb[0].mxu0
    %2771 = vdwg.mxu0
    %2772 = vrot.lane.b32.xlu0 %v2029, 112
    %v2773 = vpop.permute.xlu0 %2772
    %2774 = vrot.lane.b32.xlu0 %v2029, 80
    %v2775 = vpop.permute.xlu0 %2774
    %v2776 = vsel %vm143, %v2773, 0
    %v2778 = vsel %vm143, %v2775, 0
    %2780 = vmatprep.subr.mxu0 0.0
    %2781 = vmatpush1.xpose.msra.mxu0 %v2778
    %2782 = vmatprep.subr.mxu0 0.0
    %2783 = vmatpush1.xpose.msra.mxu0 0.0
    %2784 = vmatprep.subr.mxu0 0.0
    %2785 = vmatpush1.xpose.msra.mxu0 0.0
    %2786 = vmatprep.subr.mxu0 0.0
    %2787 = vmatpush1.xpose.msra.mxu0 0.0
    %2788 = vmatprep.subr.mxu0 0.0
    %2789 = vmatpush1.xpose.msra.mxu0 0.0
    %2790 = vmatprep.subr.mxu0 0.0
    %2791 = vmatpush1.xpose.msra.mxu0 0.0
    %2792 = vmatprep.subr.mxu0 0.0
    %2793 = vmatpush1.xpose.msra.mxu0 0.0
    %2794 = vmatprep.subr.mxu0 0.0
    %2795 = vmatpush1.xpose.msra.mxu0 0.0
    %2796 = vmatprep.subr.mxu0 0.0
    %2797 = vmatpush1.xpose.msra.mxu0 0.0
    %2798 = vmatprep.subr.mxu0 0.0
    %2799 = vmatpush1.xpose.msra.mxu0 0.0
    %2800 = vmatprep.subr.mxu0 0.0
    %2801 = vmatpush1.xpose.msra.mxu0 0.0
    %2802 = vmatprep.subr.mxu0 0.0
    %2803 = vmatpush1.xpose.msra.mxu0 0.0
    %2804 = vmatprep.subr.mxu0 0.0
    %2805 = vmatpush1.xpose.msra.mxu0 0.0
    %2806 = vmatprep.subr.mxu0 0.0
    %2807 = vmatpush1.xpose.msra.mxu0 0.0
    %2808 = vmatprep.subr.mxu0 0.0
    %2809 = vmatpush1.xpose.msra.mxu0 0.0
    %2810 = vmatprep.subr.mxu0 0.0
    %2811 = vmatpush1.xpose.msra.mxu0 0.0
    %2812 = vmatprep.subr.mxu0 0.0
    %2813 = vmatpush1.xpose.msra.mxu0 0.0
    %2814 = vmatprep.subr.mxu0 0.0
    %2815 = vmatpush1.xpose.msra.mxu0 0.0
    %2816 = vmatprep.subr.mxu0 0.0
    %2817 = vmatpush1.xpose.msra.mxu0 0.0
    %2818 = vmatprep.subr.mxu0 0.0
    %2819 = vmatpush1.xpose.msra.mxu0 0.0
    %2820 = vmatprep.subr.mxu0 0.0
    %2821 = vmatpush1.xpose.msra.mxu0 0.0
    %2822 = vmatprep.subr.mxu0 0.0
    %2823 = vmatpush1.xpose.msra.mxu0 0.0
    %2824 = vmatprep.subr.mxu0 0.0
    %2825 = vmatpush1.xpose.msra.mxu0 0.0
    %2826 = vmatprep.subr.mxu0 0.0
    %2827 = vmatpush1.xpose.msra.mxu0 0.0
    %2828 = vmatprep.subr.mxu0 0.0
    %2829 = vmatpush1.xpose.msra.mxu0 0.0
    %2830 = vmatprep.subr.mxu0 0.0
    %2831 = vmatpush1.xpose.msra.mxu0 0.0
    %2832 = vmatprep.subr.mxu0 0.0
    %2833 = vmatpush1.xpose.msra.mxu0 0.0
    %2834 = vmatprep.subr.mxu0 0.0
    %2835 = vmatpush1.xpose.msra.mxu0 0.0
    %2836 = vmatprep.subr.mxu0 0.0
    %2837 = vmatpush1.xpose.msra.mxu0 0.0
    %2838 = vmatprep.subr.mxu0 0.0
    %2839 = vmatpush1.xpose.msra.mxu0 0.0
    %2840 = vmatprep.subr.mxu0 0.0
    %2841 = vmatpush1.xpose.msra.mxu0 0.0
    %2842 = vmatprep.subr.mxu0 0.0
    %2843 = vmatpush1.xpose.msra.mxu0 0.0
    %2844 = vmatprep.mubr.f32.mxu0 0.0
    %2845 = vmatmul.mubr.f32.gmra.mrb[0].mxu0 %v2776
    %v2846 = vpop.f32.mrb[0].mxu0
    %v2847 = vadd.f32 0.0, %v2846
    %v2848 = vpop.f32.mrb[0].mxu0
    %2849 = vdwg.mxu0
    %v2850 = vmul.f32 %v2769, 0.35355338
    %v2851 = vmul.f32 %v2847, 0.35355338
    %v2852 = vsel %vm143, %v2850, -inf
    %2853 = vmax.xlane.f32.xlu0 %v2852
    %v2854 = vpop.xlane.xlu0 %2853
    %v2855 = vsel %vm143, %v2851, -inf
    %2856 = vmax.xlane.f32.xlu0 %v2855
    %v2857 = vpop.xlane.xlu0 %2856
    %v2858 = vsub.f32 %v2850, %v2854
    %v2859 = vsub.f32 %v2851, %v2857
    %v2860 = vmul.f32 %v2858, 1.442695
    %v2861 = vpow.pop %v2860
    %v2862 = vmul.f32 %v2859, 1.442695
    %v2863 = vpow.pop %v2862
    %v2864 = vsel %vm143, %v2861, 0.0
    %2865 = vadd.xlane.f32.xlu0 %v2864
    %v2866 = vpop.xlane.xlu0 %2865
    %v2867 = vsel %vm143, %v2863, 0.0
    %2868 = vadd.xlane.f32.xlu0 %v2867
    %v2869 = vpop.xlane.xlu0 %2868
    %v2870 = vrcp.pop %v2866
    %v2871 = vmul.f32 %v2861, %v2870
    %v2872 = vrcp.pop %v2869
    %v2873 = vmul.f32 %v2863, %v2872
    %2874 = vrot.lane.b32.xlu0 %v2024, 48
    %v2875 = vpop.permute.xlu0 %2874
    %v2878 = vsel %vm143, %v2871, 0
    %2880 = vmatprep.subr.mxu0 0.0
    %2881 = vmatpush1.msra.mxu0 %v2875
    %2882 = vmatprep.subr.mxu0 0.0
    %2883 = vmatpush1.msra.mxu0 0.0
    %2884 = vmatprep.subr.mxu0 0.0
    %2885 = vmatpush1.msra.mxu0 0.0
    %2886 = vmatprep.subr.mxu0 0.0
    %2887 = vmatpush1.msra.mxu0 0.0
    %2888 = vmatprep.subr.mxu0 0.0
    %2889 = vmatpush1.msra.mxu0 0.0
    %2890 = vmatprep.subr.mxu0 0.0
    %2891 = vmatpush1.msra.mxu0 0.0
    %2892 = vmatprep.subr.mxu0 0.0
    %2893 = vmatpush1.msra.mxu0 0.0
    %2894 = vmatprep.subr.mxu0 0.0
    %2895 = vmatpush1.msra.mxu0 0.0
    %2896 = vmatprep.subr.mxu0 0.0
    %2897 = vmatpush1.msra.mxu0 0.0
    %2898 = vmatprep.subr.mxu0 0.0
    %2899 = vmatpush1.msra.mxu0 0.0
    %2900 = vmatprep.subr.mxu0 0.0
    %2901 = vmatpush1.msra.mxu0 0.0
    %2902 = vmatprep.subr.mxu0 0.0
    %2903 = vmatpush1.msra.mxu0 0.0
    %2904 = vmatprep.subr.mxu0 0.0
    %2905 = vmatpush1.msra.mxu0 0.0
    %2906 = vmatprep.subr.mxu0 0.0
    %2907 = vmatpush1.msra.mxu0 0.0
    %2908 = vmatprep.subr.mxu0 0.0
    %2909 = vmatpush1.msra.mxu0 0.0
    %2910 = vmatprep.subr.mxu0 0.0
    %2911 = vmatpush1.msra.mxu0 0.0
    %2912 = vmatprep.subr.mxu0 0.0
    %2913 = vmatpush1.msra.mxu0 0.0
    %2914 = vmatprep.subr.mxu0 0.0
    %2915 = vmatpush1.msra.mxu0 0.0
    %2916 = vmatprep.subr.mxu0 0.0
    %2917 = vmatpush1.msra.mxu0 0.0
    %2918 = vmatprep.subr.mxu0 0.0
    %2919 = vmatpush1.msra.mxu0 0.0
    %2920 = vmatprep.subr.mxu0 0.0
    %2921 = vmatpush1.msra.mxu0 0.0
    %2922 = vmatprep.subr.mxu0 0.0
    %2923 = vmatpush1.msra.mxu0 0.0
    %2924 = vmatprep.subr.mxu0 0.0
    %2925 = vmatpush1.msra.mxu0 0.0
    %2926 = vmatprep.subr.mxu0 0.0
    %2927 = vmatpush1.msra.mxu0 0.0
    %2928 = vmatprep.subr.mxu0 0.0
    %2929 = vmatpush1.msra.mxu0 0.0
    %2930 = vmatprep.subr.mxu0 0.0
    %2931 = vmatpush1.msra.mxu0 0.0
    %2932 = vmatprep.subr.mxu0 0.0
    %2933 = vmatpush1.msra.mxu0 0.0
    %2934 = vmatprep.subr.mxu0 0.0
    %2935 = vmatpush1.msra.mxu0 0.0
    %2936 = vmatprep.subr.mxu0 0.0
    %2937 = vmatpush1.msra.mxu0 0.0
    %2938 = vmatprep.subr.mxu0 0.0
    %2939 = vmatpush1.msra.mxu0 0.0
    %2940 = vmatprep.subr.mxu0 0.0
    %2941 = vmatpush1.msra.mxu0 0.0
    %2942 = vmatprep.subr.mxu0 0.0
    %2943 = vmatpush1.msra.mxu0 0.0
    %2944 = vmatprep.mubr.f32.mxu0 0.0
    %2945 = vmatmul.mubr.f32.gmra.mrb[0].mxu0 %v2878
    %v2946 = vpop.f32.mrb[0].mxu0
    %v2947 = vadd.f32 0.0, %v2946
    %v2948 = vpop.f32.mrb[0].mxu0
    %2949 = vdwg.mxu0
    %2950 = vrot.lane.b32.xlu0 %v2029, 48
    %v2951 = vpop.permute.xlu0 %2950
    %v2954 = vsel %vm143, %v2873, 0
    %2956 = vmatprep.subr.mxu0 0.0
    %2957 = vmatpush1.msra.mxu0 %v2951
    %2958 = vmatprep.subr.mxu0 0.0
    %2959 = vmatpush1.msra.mxu0 0.0
    %2960 = vmatprep.subr.mxu0 0.0
    %2961 = vmatpush1.msra.mxu0 0.0
    %2962 = vmatprep.subr.mxu0 0.0
    %2963 = vmatpush1.msra.mxu0 0.0
    %2964 = vmatprep.subr.mxu0 0.0
    %2965 = vmatpush1.msra.mxu0 0.0
    %2966 = vmatprep.subr.mxu0 0.0
    %2967 = vmatpush1.msra.mxu0 0.0
    %2968 = vmatprep.subr.mxu0 0.0
    %2969 = vmatpush1.msra.mxu0 0.0
    %2970 = vmatprep.subr.mxu0 0.0
    %2971 = vmatpush1.msra.mxu0 0.0
    %2972 = vmatprep.subr.mxu0 0.0
    %2973 = vmatpush1.msra.mxu0 0.0
    %2974 = vmatprep.subr.mxu0 0.0
    %2975 = vmatpush1.msra.mxu0 0.0
    %2976 = vmatprep.subr.mxu0 0.0
    %2977 = vmatpush1.msra.mxu0 0.0
    %2978 = vmatprep.subr.mxu0 0.0
    %2979 = vmatpush1.msra.mxu0 0.0
    %2980 = vmatprep.subr.mxu0 0.0
    %2981 = vmatpush1.msra.mxu0 0.0
    %2982 = vmatprep.subr.mxu0 0.0
    %2983 = vmatpush1.msra.mxu0 0.0
    %2984 = vmatprep.subr.mxu0 0.0
    %2985 = vmatpush1.msra.mxu0 0.0
    %2986 = vmatprep.subr.mxu0 0.0
    %2987 = vmatpush1.msra.mxu0 0.0
    %2988 = vmatprep.subr.mxu0 0.0
    %2989 = vmatpush1.msra.mxu0 0.0
    %2990 = vmatprep.subr.mxu0 0.0
    %2991 = vmatpush1.msra.mxu0 0.0
    %2992 = vmatprep.subr.mxu0 0.0
    %2993 = vmatpush1.msra.mxu0 0.0
    %2994 = vmatprep.subr.mxu0 0.0
    %2995 = vmatpush1.msra.mxu0 0.0
    %2996 = vmatprep.subr.mxu0 0.0
    %2997 = vmatpush1.msra.mxu0 0.0
    %2998 = vmatprep.subr.mxu0 0.0
    %2999 = vmatpush1.msra.mxu0 0.0
    %3000 = vmatprep.subr.mxu0 0.0
    %3001 = vmatpush1.msra.mxu0 0.0
    %3002 = vmatprep.subr.mxu0 0.0
    %3003 = vmatpush1.msra.mxu0 0.0
    %3004 = vmatprep.subr.mxu0 0.0
    %3005 = vmatpush1.msra.mxu0 0.0
    %3006 = vmatprep.subr.mxu0 0.0
    %3007 = vmatpush1.msra.mxu0 0.0
    %3008 = vmatprep.subr.mxu0 0.0
    %3009 = vmatpush1.msra.mxu0 0.0
    %3010 = vmatprep.subr.mxu0 0.0
    %3011 = vmatpush1.msra.mxu0 0.0
    %3012 = vmatprep.subr.mxu0 0.0
    %3013 = vmatpush1.msra.mxu0 0.0
    %3014 = vmatprep.subr.mxu0 0.0
    %3015 = vmatpush1.msra.mxu0 0.0
    %3016 = vmatprep.subr.mxu0 0.0
    %3017 = vmatpush1.msra.mxu0 0.0
    %3018 = vmatprep.subr.mxu0 0.0
    %3019 = vmatpush1.msra.mxu0 0.0
    %3020 = vmatprep.mubr.f32.mxu0 0.0
    %3021 = vmatmul.mubr.f32.gmra.mrb[0].mxu0 %v2954
    %v3022 = vpop.f32.mrb[0].mxu0
    %v3023 = vadd.f32 0.0, %v3022
    %v3024 = vpop.f32.mrb[0].mxu0
    %3025 = vdwg.mxu0
    %3026 = vrot.lane.b32.xlu0 %v2024, 104
    %v3027 = vpop.permute.xlu0 %3026
    %3028 = vrot.lane.b32.xlu0 %v2024, 72
    %v3029 = vpop.permute.xlu0 %3028
    %v3030 = vsel %vm143, %v3027, 0
    %v3032 = vsel %vm143, %v3029, 0
    %3034 = vmatprep.subr.mxu0 0.0
    %3035 = vmatpush1.xpose.msra.mxu0 %v3032
    %3036 = vmatprep.subr.mxu0 0.0
    %3037 = vmatpush1.xpose.msra.mxu0 0.0
    %3038 = vmatprep.subr.mxu0 0.0
    %3039 = vmatpush1.xpose.msra.mxu0 0.0
    %3040 = vmatprep.subr.mxu0 0.0
    %3041 = vmatpush1.xpose.msra.mxu0 0.0
    %3042 = vmatprep.subr.mxu0 0.0
    %3043 = vmatpush1.xpose.msra.mxu0 0.0
    %3044 = vmatprep.subr.mxu0 0.0
    %3045 = vmatpush1.xpose.msra.mxu0 0.0
    %3046 = vmatprep.subr.mxu0 0.0
    %3047 = vmatpush1.xpose.msra.mxu0 0.0
    %3048 = vmatprep.subr.mxu0 0.0
    %3049 = vmatpush1.xpose.msra.mxu0 0.0
    %3050 = vmatprep.subr.mxu0 0.0
    %3051 = vmatpush1.xpose.msra.mxu0 0.0
    %3052 = vmatprep.subr.mxu0 0.0
    %3053 = vmatpush1.xpose.msra.mxu0 0.0
    %3054 = vmatprep.subr.mxu0 0.0
    %3055 = vmatpush1.xpose.msra.mxu0 0.0
    %3056 = vmatprep.subr.mxu0 0.0
    %3057 = vmatpush1.xpose.msra.mxu0 0.0
    %3058 = vmatprep.subr.mxu0 0.0
    %3059 = vmatpush1.xpose.msra.mxu0 0.0
    %3060 = vmatprep.subr.mxu0 0.0
    %3061 = vmatpush1.xpose.msra.mxu0 0.0
    %3062 = vmatprep.subr.mxu0 0.0
    %3063 = vmatpush1.xpose.msra.mxu0 0.0
    %3064 = vmatprep.subr.mxu0 0.0
    %3065 = vmatpush1.xpose.msra.mxu0 0.0
    %3066 = vmatprep.subr.mxu0 0.0
    %3067 = vmatpush1.xpose.msra.mxu0 0.0
    %3068 = vmatprep.subr.mxu0 0.0
    %3069 = vmatpush1.xpose.msra.mxu0 0.0
    %3070 = vmatprep.subr.mxu0 0.0
    %3071 = vmatpush1.xpose.msra.mxu0 0.0
    %3072 = vmatprep.subr.mxu0 0.0
    %3073 = vmatpush1.xpose.msra.mxu0 0.0
    %3074 = vmatprep.subr.mxu0 0.0
    %3075 = vmatpush1.xpose.msra.mxu0 0.0
    %3076 = vmatprep.subr.mxu0 0.0
    %3077 = vmatpush1.xpose.msra.mxu0 0.0
    %3078 = vmatprep.subr.mxu0 0.0
    %3079 = vmatpush1.xpose.msra.mxu0 0.0
    %3080 = vmatprep.subr.mxu0 0.0
    %3081 = vmatpush1.xpose.msra.mxu0 0.0
    %3082 = vmatprep.subr.mxu0 0.0
    %3083 = vmatpush1.xpose.msra.mxu0 0.0
    %3084 = vmatprep.subr.mxu0 0.0
    %3085 = vmatpush1.xpose.msra.mxu0 0.0
    %3086 = vmatprep.subr.mxu0 0.0
    %3087 = vmatpush1.xpose.msra.mxu0 0.0
    %3088 = vmatprep.subr.mxu0 0.0
    %3089 = vmatpush1.xpose.msra.mxu0 0.0
    %3090 = vmatprep.subr.mxu0 0.0
    %3091 = vmatpush1.xpose.msra.mxu0 0.0
    %3092 = vmatprep.subr.mxu0 0.0
    %3093 = vmatpush1.xpose.msra.mxu0 0.0
    %3094 = vmatprep.subr.mxu0 0.0
    %3095 = vmatpush1.xpose.msra.mxu0 0.0
    %3096 = vmatprep.subr.mxu0 0.0
    %3097 = vmatpush1.xpose.msra.mxu0 0.0
    %3098 = vmatprep.mubr.f32.mxu0 0.0
    %3099 = vmatmul.mubr.f32.gmra.mrb[0].mxu0 %v3030
    %v3100 = vpop.f32.mrb[0].mxu0
    %v3101 = vadd.f32 0.0, %v3100
    %v3102 = vpop.f32.mrb[0].mxu0
    %3103 = vdwg.mxu0
    %3104 = vrot.lane.b32.xlu0 %v2029, 104
    %v3105 = vpop.permute.xlu0 %3104
    %3106 = vrot.lane.b32.xlu0 %v2029, 72
    %v3107 = vpop.permute.xlu0 %3106
    %v3108 = vsel %vm143, %v3105, 0
    %v3110 = vsel %vm143, %v3107, 0
    %3112 = vmatprep.subr.mxu0 0.0
    %3113 = vmatpush1.xpose.msra.mxu0 %v3110
    %3114 = vmatprep.subr.mxu0 0.0
    %3115 = vmatpush1.xpose.msra.mxu0 0.0
    %3116 = vmatprep.subr.mxu0 0.0
    %3117 = vmatpush1.xpose.msra.mxu0 0.0
    %3118 = vmatprep.subr.mxu0 0.0
    %3119 = vmatpush1.xpose.msra.mxu0 0.0
    %3120 = vmatprep.subr.mxu0 0.0
    %3121 = vmatpush1.xpose.msra.mxu0 0.0
    %3122 = vmatprep.subr.mxu0 0.0
    %3123 = vmatpush1.xpose.msra.mxu0 0.0
    %3124 = vmatprep.subr.mxu0 0.0
    %3125 = vmatpush1.xpose.msra.mxu0 0.0
    %3126 = vmatprep.subr.mxu0 0.0
    %3127 = vmatpush1.xpose.msra.mxu0 0.0
    %3128 = vmatprep.subr.mxu0 0.0
    %3129 = vmatpush1.xpose.msra.mxu0 0.0
    %3130 = vmatprep.subr.mxu0 0.0
    %3131 = vmatpush1.xpose.msra.mxu0 0.0
    %3132 = vmatprep.subr.mxu0 0.0
    %3133 = vmatpush1.xpose.msra.mxu0 0.0
    %3134 = vmatprep.subr.mxu0 0.0
    %3135 = vmatpush1.xpose.msra.mxu0 0.0
    %3136 = vmatprep.subr.mxu0 0.0
    %3137 = vmatpush1.xpose.msra.mxu0 0.0
    %3138 = vmatprep.subr.mxu0 0.0
    %3139 = vmatpush1.xpose.msra.mxu0 0.0
    %3140 = vmatprep.subr.mxu0 0.0
    %3141 = vmatpush1.xpose.msra.mxu0 0.0
    %3142 = vmatprep.subr.mxu0 0.0
    %3143 = vmatpush1.xpose.msra.mxu0 0.0
    %3144 = vmatprep.subr.mxu0 0.0
    %3145 = vmatpush1.xpose.msra.mxu0 0.0
    %3146 = vmatprep.subr.mxu0 0.0
    %3147 = vmatpush1.xpose.msra.mxu0 0.0
    %3148 = vmatprep.subr.mxu0 0.0
    %3149 = vmatpush1.xpose.msra.mxu0 0.0
    %3150 = vmatprep.subr.mxu0 0.0
    %3151 = vmatpush1.xpose.msra.mxu0 0.0
    %3152 = vmatprep.subr.mxu0 0.0
    %3153 = vmatpush1.xpose.msra.mxu0 0.0
    %3154 = vmatprep.subr.mxu0 0.0
    %3155 = vmatpush1.xpose.msra.mxu0 0.0
    %3156 = vmatprep.subr.mxu0 0.0
    %3157 = vmatpush1.xpose.msra.mxu0 0.0
    %3158 = vmatprep.subr.mxu0 0.0
    %3159 = vmatpush1.xpose.msra.mxu0 0.0
    %3160 = vmatprep.subr.mxu0 0.0
    %3161 = vmatpush1.xpose.msra.mxu0 0.0
    %3162 = vmatprep.subr.mxu0 0.0
    %3163 = vmatpush1.xpose.msra.mxu0 0.0
    %3164 = vmatprep.subr.mxu0 0.0
    %3165 = vmatpush1.xpose.msra.mxu0 0.0
    %3166 = vmatprep.subr.mxu0 0.0
    %3167 = vmatpush1.xpose.msra.mxu0 0.0
    %3168 = vmatprep.subr.mxu0 0.0
    %3169 = vmatpush1.xpose.msra.mxu0 0.0
    %3170 = vmatprep.subr.mxu0 0.0
    %3171 = vmatpush1.xpose.msra.mxu0 0.0
    %3172 = vmatprep.subr.mxu0 0.0
    %3173 = vmatpush1.xpose.msra.mxu0 0.0
    %3174 = vmatprep.subr.mxu0 0.0
    %3175 = vmatpush1.xpose.msra.mxu0 0.0
    %3176 = vmatprep.mubr.f32.mxu0 0.0
    %3177 = vmatmul.mubr.f32.gmra.mrb[0].mxu0 %v3108
    %v3178 = vpop.f32.mrb[0].mxu0
    %v3179 = vadd.f32 0.0, %v3178
    %v3180 = vpop.f32.mrb[0].mxu0
    %3181 = vdwg.mxu0
    %v3182 = vmul.f32 %v3101, 0.35355338
    %v3183 = vmul.f32 %v3179, 0.35355338
    %v3184 = vsel %vm143, %v3182, -inf
    %3185 = vmax.xlane.f32.xlu0 %v3184
    %v3186 = vpop.xlane.xlu0 %3185
    %v3187 = vsel %vm143, %v3183, -inf
    %3188 = vmax.xlane.f32.xlu0 %v3187
    %v3189 = vpop.xlane.xlu0 %3188
    %v3190 = vsub.f32 %v3182, %v3186
    %v3191 = vsub.f32 %v3183, %v3189
    %v3192 = vmul.f32 %v3190, 1.442695
    %v3193 = vpow.pop %v3192
    %v3194 = vmul.f32 %v3191, 1.442695
    %v3195 = vpow.pop %v3194
    %v3196 = vsel %vm143, %v3193, 0.0
    %3197 = vadd.xlane.f32.xlu0 %v3196
    %v3198 = vpop.xlane.xlu0 %3197
    %v3199 = vsel %vm143, %v3195, 0.0
    %3200 = vadd.xlane.f32.xlu0 %v3199
    %v3201 = vpop.xlane.xlu0 %3200
    %v3202 = vrcp.pop %v3198
    %v3203 = vmul.f32 %v3193, %v3202
    %v3204 = vrcp.pop %v3201
    %v3205 = vmul.f32 %v3195, %v3204
    %3206 = vrot.lane.b32.xlu0 %v2024, 40
    %v3207 = vpop.permute.xlu0 %3206
    %v3210 = vsel %vm143, %v3203, 0
    %3212 = vmatprep.subr.mxu0 0.0
    %3213 = vmatpush1.msra.mxu0 %v3207
    %3214 = vmatprep.subr.mxu0 0.0
    %3215 = vmatpush1.msra.mxu0 0.0
    %3216 = vmatprep.subr.mxu0 0.0
    %3217 = vmatpush1.msra.mxu0 0.0
    %3218 = vmatprep.subr.mxu0 0.0
    %3219 = vmatpush1.msra.mxu0 0.0
    %3220 = vmatprep.subr.mxu0 0.0
    %3221 = vmatpush1.msra.mxu0 0.0
    %3222 = vmatprep.subr.mxu0 0.0
    %3223 = vmatpush1.msra.mxu0 0.0
    %3224 = vmatprep.subr.mxu0 0.0
    %3225 = vmatpush1.msra.mxu0 0.0
    %3226 = vmatprep.subr.mxu0 0.0
    %3227 = vmatpush1.msra.mxu0 0.0
    %3228 = vmatprep.subr.mxu0 0.0
    %3229 = vmatpush1.msra.mxu0 0.0
    %3230 = vmatprep.subr.mxu0 0.0
    %3231 = vmatpush1.msra.mxu0 0.0
    %3232 = vmatprep.subr.mxu0 0.0
    %3233 = vmatpush1.msra.mxu0 0.0
    %3234 = vmatprep.subr.mxu0 0.0
    %3235 = vmatpush1.msra.mxu0 0.0
    %3236 = vmatprep.subr.mxu0 0.0
    %3237 = vmatpush1.msra.mxu0 0.0
    %3238 = vmatprep.subr.mxu0 0.0
    %3239 = vmatpush1.msra.mxu0 0.0
    %3240 = vmatprep.subr.mxu0 0.0
    %3241 = vmatpush1.msra.mxu0 0.0
    %3242 = vmatprep.subr.mxu0 0.0
    %3243 = vmatpush1.msra.mxu0 0.0
    %3244 = vmatprep.subr.mxu0 0.0
    %3245 = vmatpush1.msra.mxu0 0.0
    %3246 = vmatprep.subr.mxu0 0.0
    %3247 = vmatpush1.msra.mxu0 0.0
    %3248 = vmatprep.subr.mxu0 0.0
    %3249 = vmatpush1.msra.mxu0 0.0
    %3250 = vmatprep.subr.mxu0 0.0
    %3251 = vmatpush1.msra.mxu0 0.0
    %3252 = vmatprep.subr.mxu0 0.0
    %3253 = vmatpush1.msra.mxu0 0.0
    %3254 = vmatprep.subr.mxu0 0.0
    %3255 = vmatpush1.msra.mxu0 0.0
    %3256 = vmatprep.subr.mxu0 0.0
    %3257 = vmatpush1.msra.mxu0 0.0
    %3258 = vmatprep.subr.mxu0 0.0
    %3259 = vmatpush1.msra.mxu0 0.0
    %3260 = vmatprep.subr.mxu0 0.0
    %3261 = vmatpush1.msra.mxu0 0.0
    %3262 = vmatprep.subr.mxu0 0.0
    %3263 = vmatpush1.msra.mxu0 0.0
    %3264 = vmatprep.subr.mxu0 0.0
    %3265 = vmatpush1.msra.mxu0 0.0
    %3266 = vmatprep.subr.mxu0 0.0
    %3267 = vmatpush1.msra.mxu0 0.0
    %3268 = vmatprep.subr.mxu0 0.0
    %3269 = vmatpush1.msra.mxu0 0.0
    %3270 = vmatprep.subr.mxu0 0.0
    %3271 = vmatpush1.msra.mxu0 0.0
    %3272 = vmatprep.subr.mxu0 0.0
    %3273 = vmatpush1.msra.mxu0 0.0
    %3274 = vmatprep.subr.mxu0 0.0
    %3275 = vmatpush1.msra.mxu0 0.0
    %3276 = vmatprep.mubr.f32.mxu0 0.0
    %3277 = vmatmul.mubr.f32.gmra.mrb[0].mxu0 %v3210
    %v3278 = vpop.f32.mrb[0].mxu0
    %v3279 = vadd.f32 0.0, %v3278
    %v3280 = vpop.f32.mrb[0].mxu0
    %3281 = vdwg.mxu0
    %3282 = vrot.lane.b32.xlu0 %v2029, 40
    %v3283 = vpop.permute.xlu0 %3282
    %v3286 = vsel %vm143, %v3205, 0
    %3288 = vmatprep.subr.mxu0 0.0
    %3289 = vmatpush1.msra.mxu0 %v3283
    %3290 = vmatprep.subr.mxu0 0.0
    %3291 = vmatpush1.msra.mxu0 0.0
    %3292 = vmatprep.subr.mxu0 0.0
    %3293 = vmatpush1.msra.mxu0 0.0
    %3294 = vmatprep.subr.mxu0 0.0
    %3295 = vmatpush1.msra.mxu0 0.0
    %3296 = vmatprep.subr.mxu0 0.0
    %3297 = vmatpush1.msra.mxu0 0.0
    %3298 = vmatprep.subr.mxu0 0.0
    %3299 = vmatpush1.msra.mxu0 0.0
    %3300 = vmatprep.subr.mxu0 0.0
    %3301 = vmatpush1.msra.mxu0 0.0
    %3302 = vmatprep.subr.mxu0 0.0
    %3303 = vmatpush1.msra.mxu0 0.0
    %3304 = vmatprep.subr.mxu0 0.0
    %3305 = vmatpush1.msra.mxu0 0.0
    %3306 = vmatprep.subr.mxu0 0.0
    %3307 = vmatpush1.msra.mxu0 0.0
    %3308 = vmatprep.subr.mxu0 0.0
    %3309 = vmatpush1.msra.mxu0 0.0
    %3310 = vmatprep.subr.mxu0 0.0
    %3311 = vmatpush1.msra.mxu0 0.0
    %3312 = vmatprep.subr.mxu0 0.0
    %3313 = vmatpush1.msra.mxu0 0.0
    %3314 = vmatprep.subr.mxu0 0.0
    %3315 = vmatpush1.msra.mxu0 0.0
    %3316 = vmatprep.subr.mxu0 0.0
    %3317 = vmatpush1.msra.mxu0 0.0
    %3318 = vmatprep.subr.mxu0 0.0
    %3319 = vmatpush1.msra.mxu0 0.0
    %3320 = vmatprep.subr.mxu0 0.0
    %3321 = vmatpush1.msra.mxu0 0.0
    %3322 = vmatprep.subr.mxu0 0.0
    %3323 = vmatpush1.msra.mxu0 0.0
    %3324 = vmatprep.subr.mxu0 0.0
    %3325 = vmatpush1.msra.mxu0 0.0
    %3326 = vmatprep.subr.mxu0 0.0
    %3327 = vmatpush1.msra.mxu0 0.0
    %3328 = vmatprep.subr.mxu0 0.0
    %3329 = vmatpush1.msra.mxu0 0.0
    %3330 = vmatprep.subr.mxu0 0.0
    %3331 = vmatpush1.msra.mxu0 0.0
    %3332 = vmatprep.subr.mxu0 0.0
    %3333 = vmatpush1.msra.mxu0 0.0
    %3334 = vmatprep.subr.mxu0 0.0
    %3335 = vmatpush1.msra.mxu0 0.0
    %3336 = vmatprep.subr.mxu0 0.0
    %3337 = vmatpush1.msra.mxu0 0.0
    %3338 = vmatprep.subr.mxu0 0.0
    %3339 = vmatpush1.msra.mxu0 0.0
    %3340 = vmatprep.subr.mxu0 0.0
    %3341 = vmatpush1.msra.mxu0 0.0
    %3342 = vmatprep.subr.mxu0 0.0
    %3343 = vmatpush1.msra.mxu0 0.0
    %3344 = vmatprep.subr.mxu0 0.0
    %3345 = vmatpush1.msra.mxu0 0.0
    %3346 = vmatprep.subr.mxu0 0.0
    %3347 = vmatpush1.msra.mxu0 0.0
    %3348 = vmatprep.subr.mxu0 0.0
    %3349 = vmatpush1.msra.mxu0 0.0
    %3350 = vmatprep.subr.mxu0 0.0
    %3351 = vmatpush1.msra.mxu0 0.0
    %3352 = vmatprep.mubr.f32.mxu0 0.0
    %3353 = vmatmul.mubr.f32.gmra.mrb[0].mxu0 %v3286
    %v3354 = vpop.f32.mrb[0].mxu0
    %v3355 = vadd.f32 0.0, %v3354
    %v3356 = vpop.f32.mrb[0].mxu0
    %3357 = vdwg.mxu0
    %3360 = vrot.lane.b32.xlu0 %v2615, 8
    %v3361 = vpop.permute.xlu0 %3360
    %3362 = vrot.lane.b32.xlu0 %v2691, 8
    %v3363 = vpop.permute.xlu0 %3362
    %3368 = vrot.lane.b32.xlu0 %v2947, 16
    %v3369 = vpop.permute.xlu0 %3368
    %3370 = vrot.lane.b32.xlu0 %v3023, 16
    %v3371 = vpop.permute.xlu0 %3370
    %3376 = vrot.lane.b32.xlu0 %v3279, 24
    %v3377 = vpop.permute.xlu0 %3376
    %3378 = vrot.lane.b32.xlu0 %v3355, 24
    %v3379 = vpop.permute.xlu0 %3378
    %v3382 = vsel %vm143, %v2283, %v3361
    %v3383 = vsel %vm143, %v2359, %v3363
    %v3384 = vsel %vm1493, %v3382, %v3369
    %v3385 = vsel %vm1493, %v3383, %v3371
    %v3386 = vsel %vm1496, %v3384, %v3377
    %v3387 = vsel %vm1496, %v3385, %v3379
    %v3388 = vld [vmem:[%s3] sm:$0xff]
    %v3389 = vld [vmem:[%s3 + $0x8] sm:$0xff]
    %v3390 = vld [vmem:[%s3 + $0x10] sm:$0xff]
    %v3391 = vld [vmem:[%s3 + $0x18] sm:$0xff]
    %v3392 = vld [vmem:[%s4] sm:$0x1]
    %v3394 = vlaneseq
    %v3395 = vshrl.u32 %v3394, 7
    %v3396 = vsub.s32 0, %v3395
    %v3397 = vrot.slane %v3392, %v3396
    %v3400 = vsel %vm58, %v3386, 0
    %v3403 = vsel %vm58, %v3387, 0
    %3405 = vmatprep.subr.mxu0 0.0
    %3406 = vmatpush1.msra.mxu0 %v3388
    %3407 = vmatprep.subr.mxu0 0.0
    %3408 = vmatpush1.msra.mxu0 %v3389
    %3409 = vmatprep.subr.mxu0 0.0
    %3410 = vmatpush1.msra.mxu0 %v3390
    %3411 = vmatprep.subr.mxu0 0.0
    %3412 = vmatpush1.msra.mxu0 %v3391
    %3413 = vmatprep.subr.mxu0 0.0
    %3414 = vmatpush1.msra.mxu0 0.0
    %3415 = vmatprep.subr.mxu0 0.0
    %3416 = vmatpush1.msra.mxu0 0.0
    %3417 = vmatprep.subr.mxu0 0.0
    %3418 = vmatpush1.msra.mxu0 0.0
    %3419 = vmatprep.subr.mxu0 0.0
    %3420 = vmatpush1.msra.mxu0 0.0
    %3421 = vmatprep.subr.mxu0 0.0
    %3422 = vmatpush1.msra.mxu0 0.0
    %3423 = vmatprep.subr.mxu0 0.0
    %3424 = vmatpush1.msra.mxu0 0.0
    %3425 = vmatprep.subr.mxu0 0.0
    %3426 = vmatpush1.msra.mxu0 0.0
    %3427 = vmatprep.subr.mxu0 0.0
    %3428 = vmatpush1.msra.mxu0 0.0
    %3429 = vmatprep.subr.mxu0 0.0
    %3430 = vmatpush1.msra.mxu0 0.0
    %3431 = vmatprep.subr.mxu0 0.0
    %3432 = vmatpush1.msra.mxu0 0.0
    %3433 = vmatprep.subr.mxu0 0.0
    %3434 = vmatpush1.msra.mxu0 0.0
    %3435 = vmatprep.subr.mxu0 0.0
    %3436 = vmatpush1.msra.mxu0 0.0
    %3437 = vmatprep.subr.mxu0 0.0
    %3438 = vmatpush1.msra.mxu0 0.0
    %3439 = vmatprep.subr.mxu0 0.0
    %3440 = vmatpush1.msra.mxu0 0.0
    %3441 = vmatprep.subr.mxu0 0.0
    %3442 = vmatpush1.msra.mxu0 0.0
    %3443 = vmatprep.subr.mxu0 0.0
    %3444 = vmatpush1.msra.mxu0 0.0
    %3445 = vmatprep.subr.mxu0 0.0
    %3446 = vmatpush1.msra.mxu0 0.0
    %3447 = vmatprep.subr.mxu0 0.0
    %3448 = vmatpush1.msra.mxu0 0.0
    %3449 = vmatprep.subr.mxu0 0.0
    %3450 = vmatpush1.msra.mxu0 0.0
    %3451 = vmatprep.subr.mxu0 0.0
    %3452 = vmatpush1.msra.mxu0 0.0
    %3453 = vmatprep.subr.mxu0 0.0
    %3454 = vmatpush1.msra.mxu0 0.0
    %3455 = vmatprep.subr.mxu0 0.0
    %3456 = vmatpush1.msra.mxu0 0.0
    %3457 = vmatprep.subr.mxu0 0.0
    %3458 = vmatpush1.msra.mxu0 0.0
    %3459 = vmatprep.subr.mxu0 0.0
    %3460 = vmatpush1.msra.mxu0 0.0
    %3461 = vmatprep.subr.mxu0 0.0
    %3462 = vmatpush1.msra.mxu0 0.0
    %3463 = vmatprep.subr.mxu0 0.0
    %3464 = vmatpush1.msra.mxu0 0.0
    %3465 = vmatprep.subr.mxu0 0.0
    %3466 = vmatpush1.msra.mxu0 0.0
    %3467 = vmatprep.subr.mxu0 0.0
    %3468 = vmatpush1.msra.mxu0 0.0
    %3469 = vmatprep.mubr.f32.mxu0 0.0
    %3470 = vmatmul.mubr.f32.gmra.mrb[0].mxu0 %v3400
    %v3471 = vpop.f32.mrb[0].mxu0
    %v3472 = vadd.f32 %v3397, %v3471
    %v3473 = vpop.f32.mrb[0].mxu0
    %3474 = vmatprep.mubr.f32.mxu0 0.0
    %3475 = vmatmul.mubr.f32.gmra.mrb[0].mxu0 %v3403
    %v3476 = vpop.f32.mrb[0].mxu0
    %v3477 = vadd.f32 %v3397, %v3476
    %v3478 = vpop.f32.mrb[0].mxu0
    %3479 = vdwg.mxu0
    %v3480 = vadd.f32 %v1938, %v3472
    %v3481 = vadd.f32 %v1939, %v3477
    %v3482 = vld [vmem:[%s7] sm:$0x1]
    %v3483 = vld [vmem:[%s8] sm:$0x1]
    %v3484 = vsel %vm58, %v3480, 0.0
    %3485 = vadd.xlane.f32.xlu0 %v3484
    %v3486 = vpop.xlane.xlu0 %3485
    %v3487 = vsel %vm58, %v3481, 0.0
    %3488 = vadd.xlane.f32.xlu0 %v3487
    %v3489 = vpop.xlane.xlu0 %3488
    %v3490 = vmul.f32 %v3486, %v1601
    %v3491 = vmul.f32 %v3489, %v1601
    %v3492 = vsub.f32 %v3480, %v3490
    %v3493 = vsub.f32 %v3481, %v3491
    %v3494 = vmul.f32 %v3492, %v3492
    %v3495 = vmul.f32 %v3493, %v3493
    %v3496 = vsel %vm58, %v3494, 0.0
    %3497 = vadd.xlane.f32.xlu0 %v3496
    %v3498 = vpop.xlane.xlu0 %3497
    %v3499 = vsel %vm58, %v3495, 0.0
    %3500 = vadd.xlane.f32.xlu0 %v3499
    %v3501 = vpop.xlane.xlu0 %3500
    %v3502 = vmul.f32 %v3498, 0.032258064
    %v3503 = vmul.f32 %v3501, 0.032258064
    %v3505 = vlaneseq
    %v3506 = vshrl.u32 %v3505, 7
    %v3507 = vsub.s32 0, %v3506
    %v3508 = vrot.slane %v3482, %v3507
    %v3510 = vmul.f32 %v3508, %v3492
    %v3511 = vmul.f32 %v3508, %v3493
    %v3512 = vrsqrt.pop %v3502
    %v3513 = vmul.f32 %v3502, %v3512
    %vm3514 = vcmp.eq.f32.partialorder %v3502, inf
    %v3515 = vsel %vm3514, %v3502, %v3513
    %vm3516 = vcmp.eq.f32.partialorder %v3502, 0.0
    %v3517 = vand.u32 %v3502, 2147483648
    %v3518 = vsel %vm3516, %v3517, %v3515
    %v3519 = vrsqrt.pop %v3503
    %v3520 = vmul.f32 %v3503, %v3519
    %vm3521 = vcmp.eq.f32.partialorder %v3503, inf
    %v3522 = vsel %vm3521, %v3503, %v3520
    %vm3523 = vcmp.eq.f32.partialorder %v3503, 0.0
    %v3524 = vand.u32 %v3503, 2147483648
    %v3525 = vsel %vm3523, %v3524, %v3522
    %v3526 = vadd.f32 %v3518, 1e-06
    %v3527 = vadd.f32 %v3525, 1e-06
    %v3528 = vrcp.pop %v3526
    %v3529 = vmul.f32 %v3510, %v3528
    %v3530 = vrcp.pop %v3527
    %v3531 = vmul.f32 %v3511, %v3530
    %v3533 = vlaneseq
    %v3534 = vshrl.u32 %v3533, 7
    %v3535 = vsub.s32 0, %v3534
    %v3536 = vrot.slane %v3483, %v3535
    %v3538 = vadd.f32 %v3529, %v3536
    %v3539 = vadd.f32 %v3531, %v3536
    %v3540 = vld [vmem:[%s5] sm:$0xff]
    %v3541 = vld [vmem:[%s5 + $0x8] sm:$0xff]
    %v3542 = vld [vmem:[%s5 + $0x10] sm:$0xff]
    %v3543 = vld [vmem:[%s5 + $0x18] sm:$0xff]
    %v3544 = vld [vmem:[%s6] sm:$0x1]
    %v3546 = vlaneseq
    %v3547 = vshrl.u32 %v3546, 7
    %v3548 = vsub.s32 0, %v3547
    %v3549 = vrot.slane %v3544, %v3548
    %v3552 = vsel %vm58, %v3538, 0
    %v3555 = vsel %vm58, %v3539, 0
    %3557 = vmatprep.subr.mxu0 0.0
    %3558 = vmatpush1.msra.mxu0 %v3540
    %3559 = vmatprep.subr.mxu0 0.0
    %3560 = vmatpush1.msra.mxu0 %v3541
    %3561 = vmatprep.subr.mxu0 0.0
    %3562 = vmatpush1.msra.mxu0 %v3542
    %3563 = vmatprep.subr.mxu0 0.0
    %3564 = vmatpush1.msra.mxu0 %v3543
    %3565 = vmatprep.subr.mxu0 0.0
    %3566 = vmatpush1.msra.mxu0 0.0
    %3567 = vmatprep.subr.mxu0 0.0
    %3568 = vmatpush1.msra.mxu0 0.0
    %3569 = vmatprep.subr.mxu0 0.0
    %3570 = vmatpush1.msra.mxu0 0.0
    %3571 = vmatprep.subr.mxu0 0.0
    %3572 = vmatpush1.msra.mxu0 0.0
    %3573 = vmatprep.subr.mxu0 0.0
    %3574 = vmatpush1.msra.mxu0 0.0
    %3575 = vmatprep.subr.mxu0 0.0
    %3576 = vmatpush1.msra.mxu0 0.0
    %3577 = vmatprep.subr.mxu0 0.0
    %3578 = vmatpush1.msra.mxu0 0.0
    %3579 = vmatprep.subr.mxu0 0.0
    %3580 = vmatpush1.msra.mxu0 0.0
    %3581 = vmatprep.subr.mxu0 0.0
    %3582 = vmatpush1.msra.mxu0 0.0
    %3583 = vmatprep.subr.mxu0 0.0
    %3584 = vmatpush1.msra.mxu0 0.0
    %3585 = vmatprep.subr.mxu0 0.0
    %3586 = vmatpush1.msra.mxu0 0.0
    %3587 = vmatprep.subr.mxu0 0.0
    %3588 = vmatpush1.msra.mxu0 0.0
    %3589 = vmatprep.subr.mxu0 0.0
    %3590 = vmatpush1.msra.mxu0 0.0
    %3591 = vmatprep.subr.mxu0 0.0
    %3592 = vmatpush1.msra.mxu0 0.0
    %3593 = vmatprep.subr.mxu0 0.0
    %3594 = vmatpush1.msra.mxu0 0.0
    %3595 = vmatprep.subr.mxu0 0.0
    %3596 = vmatpush1.msra.mxu0 0.0
    %3597 = vmatprep.subr.mxu0 0.0
    %3598 = vmatpush1.msra.mxu0 0.0
    %3599 = vmatprep.subr.mxu0 0.0
    %3600 = vmatpush1.msra.mxu0 0.0
    %3601 = vmatprep.subr.mxu0 0.0
    %3602 = vmatpush1.msra.mxu0 0.0
    %3603 = vmatprep.subr.mxu0 0.0
    %3604 = vmatpush1.msra.mxu0 0.0
    %3605 = vmatprep.subr.mxu0 0.0
    %3606 = vmatpush1.msra.mxu0 0.0
    %3607 = vmatprep.subr.mxu0 0.0
    %3608 = vmatpush1.msra.mxu0 0.0
    %3609 = vmatprep.subr.mxu0 0.0
    %3610 = vmatpush1.msra.mxu0 0.0
    %3611 = vmatprep.subr.mxu0 0.0
    %3612 = vmatpush1.msra.mxu0 0.0
    %3613 = vmatprep.subr.mxu0 0.0
    %3614 = vmatpush1.msra.mxu0 0.0
    %3615 = vmatprep.subr.mxu0 0.0
    %3616 = vmatpush1.msra.mxu0 0.0
    %3617 = vmatprep.subr.mxu0 0.0
    %3618 = vmatpush1.msra.mxu0 0.0
    %3619 = vmatprep.subr.mxu0 0.0
    %3620 = vmatpush1.msra.mxu0 0.0
    %3621 = vmatprep.mubr.f32.mxu0 0.0
    %3622 = vmatmul.mubr.f32.gmra.mrb[0].mxu0 %v3552
    %v3623 = vpop.f32.mrb[0].mxu0
    %v3624 = vadd.f32 %v3549, %v3623
    %v3625 = vpop.f32.mrb[0].mxu0
    %3626 = vmatprep.mubr.f32.mxu0 0.0
    %3627 = vmatmul.mubr.f32.gmra.mrb[0].mxu0 %v3555
    %v3628 = vpop.f32.mrb[0].mxu0
    %v3629 = vadd.f32 %v3549, %v3628
    %v3630 = vpop.f32.mrb[0].mxu0
    %3631 = vdwg.mxu0
    %v3632 = vadd.f32 %v3624, %v3538
    %v3633 = vadd.f32 %v3629, %v3539
    %v3634 = vsel %vm58, %v3632, 0.0
    %3635 = vadd.xlane.f32.xlu0 %v3634
    %v3636 = vpop.xlane.xlu0 %3635
    %v3637 = vsel %vm58, %v3633, 0.0
    %3638 = vadd.xlane.f32.xlu0 %v3637
    %v3639 = vpop.xlane.xlu0 %3638
    %v3640 = vmul.f32 %v3636, %v1601
    %v3641 = vmul.f32 %v3639, %v1601
    %v3642 = vsub.f32 %v3632, %v3640
    %v3643 = vsub.f32 %v3633, %v3641
    %v3644 = vmul.f32 %v3642, %v3642
    %v3645 = vmul.f32 %v3643, %v3643
    %v3646 = vsel %vm58, %v3644, 0.0
    %3647 = vadd.xlane.f32.xlu0 %v3646
    %v3648 = vpop.xlane.xlu0 %3647
    %v3649 = vsel %vm58, %v3645, 0.0
    %3650 = vadd.xlane.f32.xlu0 %v3649
    %v3651 = vpop.xlane.xlu0 %3650
    %v3652 = vmul.f32 %v3648, 0.032258064
    %v3653 = vmul.f32 %v3651, 0.032258064
    %v3654 = vmul.f32 %v3508, %v3642
    %v3655 = vmul.f32 %v3508, %v3643
    %v3656 = vrsqrt.pop %v3652
    %v3657 = vmul.f32 %v3652, %v3656
    %vm3658 = vcmp.eq.f32.partialorder %v3652, inf
    %v3659 = vsel %vm3658, %v3652, %v3657
    %vm3660 = vcmp.eq.f32.partialorder %v3652, 0.0
    %v3661 = vand.u32 %v3652, 2147483648
    %v3662 = vsel %vm3660, %v3661, %v3659
    %v3663 = vrsqrt.pop %v3653
    %v3664 = vmul.f32 %v3653, %v3663
    %vm3665 = vcmp.eq.f32.partialorder %v3653, inf
    %v3666 = vsel %vm3665, %v3653, %v3664
    %vm3667 = vcmp.eq.f32.partialorder %v3653, 0.0
    %v3668 = vand.u32 %v3653, 2147483648
    %v3669 = vsel %vm3667, %v3668, %v3666
    %v3670 = vadd.f32 %v3662, 1e-06
    %v3671 = vadd.f32 %v3669, 1e-06
    %v3672 = vrcp.pop %v3670
    %v3673 = vmul.f32 %v3654, %v3672
    %v3674 = vrcp.pop %v3671
    %v3675 = vmul.f32 %v3655, %v3674
    %v3676 = vadd.f32 %v3673, %v3536
    %v3677 = vadd.f32 %v3675, %v3536
    %v3678 = vld [vmem:[%s9] sm:$0xff]
    %v3679 = vld [vmem:[%s9 + $0x8] sm:$0xff]
    %v3680 = vld [vmem:[%s9 + $0x10] sm:$0xff]
    %v3681 = vld [vmem:[%s9 + $0x18] sm:$0xff]
    %v3682 = vld [vmem:[%s10] sm:$0x1]
    %v3684 = vlaneseq
    %v3685 = vshrl.u32 %v3684, 7
    %v3686 = vsub.s32 0, %v3685
    %v3687 = vrot.slane %v3682, %v3686
    %v3690 = vsel %vm58, %v3676, 0
    %v3693 = vsel %vm58, %v3677, 0
    %3695 = vmatprep.subr.mxu0 0.0
    %3696 = vmatpush1.msra.mxu0 %v3678
    %3697 = vmatprep.subr.mxu0 0.0
    %3698 = vmatpush1.msra.mxu0 %v3679
    %3699 = vmatprep.subr.mxu0 0.0
    %3700 = vmatpush1.msra.mxu0 %v3680
    %3701 = vmatprep.subr.mxu0 0.0
    %3702 = vmatpush1.msra.mxu0 %v3681
    %3703 = vmatprep.subr.mxu0 0.0
    %3704 = vmatpush1.msra.mxu0 0.0
    %3705 = vmatprep.subr.mxu0 0.0
    %3706 = vmatpush1.msra.mxu0 0.0
    %3707 = vmatprep.subr.mxu0 0.0
    %3708 = vmatpush1.msra.mxu0 0.0
    %3709 = vmatprep.subr.mxu0 0.0
    %3710 = vmatpush1.msra.mxu0 0.0
    %3711 = vmatprep.subr.mxu0 0.0
    %3712 = vmatpush1.msra.mxu0 0.0
    %3713 = vmatprep.subr.mxu0 0.0
    %3714 = vmatpush1.msra.mxu0 0.0
    %3715 = vmatprep.subr.mxu0 0.0
    %3716 = vmatpush1.msra.mxu0 0.0
    %3717 = vmatprep.subr.mxu0 0.0
    %3718 = vmatpush1.msra.mxu0 0.0
    %3719 = vmatprep.subr.mxu0 0.0
    %3720 = vmatpush1.msra.mxu0 0.0
    %3721 = vmatprep.subr.mxu0 0.0
    %3722 = vmatpush1.msra.mxu0 0.0
    %3723 = vmatprep.subr.mxu0 0.0
    %3724 = vmatpush1.msra.mxu0 0.0
    %3725 = vmatprep.subr.mxu0 0.0
    %3726 = vmatpush1.msra.mxu0 0.0
    %3727 = vmatprep.subr.mxu0 0.0
    %3728 = vmatpush1.msra.mxu0 0.0
    %3729 = vmatprep.subr.mxu0 0.0
    %3730 = vmatpush1.msra.mxu0 0.0
    %3731 = vmatprep.subr.mxu0 0.0
    %3732 = vmatpush1.msra.mxu0 0.0
    %3733 = vmatprep.subr.mxu0 0.0
    %3734 = vmatpush1.msra.mxu0 0.0
    %3735 = vmatprep.subr.mxu0 0.0
    %3736 = vmatpush1.msra.mxu0 0.0
    %3737 = vmatprep.subr.mxu0 0.0
    %3738 = vmatpush1.msra.mxu0 0.0
    %3739 = vmatprep.subr.mxu0 0.0
    %3740 = vmatpush1.msra.mxu0 0.0
    %3741 = vmatprep.subr.mxu0 0.0
    %3742 = vmatpush1.msra.mxu0 0.0
    %3743 = vmatprep.subr.mxu0 0.0
    %3744 = vmatpush1.msra.mxu0 0.0
    %3745 = vmatprep.subr.mxu0 0.0
    %3746 = vmatpush1.msra.mxu0 0.0
    %3747 = vmatprep.subr.mxu0 0.0
    %3748 = vmatpush1.msra.mxu0 0.0
    %3749 = vmatprep.subr.mxu0 0.0
    %3750 = vmatpush1.msra.mxu0 0.0
    %3751 = vmatprep.subr.mxu0 0.0
    %3752 = vmatpush1.msra.mxu0 0.0
    %3753 = vmatprep.subr.mxu0 0.0
    %3754 = vmatpush1.msra.mxu0 0.0
    %3755 = vmatprep.subr.mxu0 0.0
    %3756 = vmatpush1.msra.mxu0 0.0
    %3757 = vmatprep.subr.mxu0 0.0
    %3758 = vmatpush1.msra.mxu0 0.0
    %3759 = vmatprep.mubr.f32.mxu0 0.0
    %3760 = vmatmul.mubr.f32.gmra.mrb[0].mxu0 %v3690
    %v3761 = vpop.f32.mrb[0].mxu0
    %v3762 = vadd.f32 %v3687, %v3761
    %v3763 = vpop.f32.mrb[0].mxu0
    %3764 = vmatprep.mubr.f32.mxu0 0.0
    %3765 = vmatmul.mubr.f32.gmra.mrb[0].mxu0 %v3693
    %v3766 = vpop.f32.mrb[0].mxu0
    %v3767 = vadd.f32 %v3687, %v3766
    %v3768 = vpop.f32.mrb[0].mxu0
    %3769 = vdwg.mxu0
    %v3770 = vld [vmem:[%s11] sm:$0x1]
    %v3771 = vld [vmem:[%s12] sm:$0x1]
    %v3772 = vsel %vm58, %v3762, 0.0
    %3773 = vadd.xlane.f32.xlu0 %v3772
    %v3774 = vpop.xlane.xlu0 %3773
    %v3775 = vsel %vm58, %v3767, 0.0
    %3776 = vadd.xlane.f32.xlu0 %v3775
    %v3777 = vpop.xlane.xlu0 %3776
    %v3778 = vmul.f32 %v3774, %v1601
    %v3779 = vmul.f32 %v3777, %v1601
    %v3780 = vsub.f32 %v3762, %v3778
    %v3781 = vsub.f32 %v3767, %v3779
    %v3782 = vmul.f32 %v3780, %v3780
    %v3783 = vmul.f32 %v3781, %v3781
    %v3784 = vsel %vm58, %v3782, 0.0
    %3785 = vadd.xlane.f32.xlu0 %v3784
    %v3786 = vpop.xlane.xlu0 %3785
    %v3787 = vsel %vm58, %v3783, 0.0
    %3788 = vadd.xlane.f32.xlu0 %v3787
    %v3789 = vpop.xlane.xlu0 %3788
    %v3790 = vmul.f32 %v3786, 0.032258064
    %v3791 = vmul.f32 %v3789, 0.032258064
    %v3793 = vlaneseq
    %v3794 = vshrl.u32 %v3793, 7
    %v3795 = vsub.s32 0, %v3794
    %v3796 = vrot.slane %v3770, %v3795
    %v3798 = vmul.f32 %v3796, %v3780
    %v3799 = vmul.f32 %v3796, %v3781
    %v3800 = vrsqrt.pop %v3790
    %v3801 = vmul.f32 %v3790, %v3800
    %vm3802 = vcmp.eq.f32.partialorder %v3790, inf
    %v3803 = vsel %vm3802, %v3790, %v3801
    %vm3804 = vcmp.eq.f32.partialorder %v3790, 0.0
    %v3805 = vand.u32 %v3790, 2147483648
    %v3806 = vsel %vm3804, %v3805, %v3803
    %v3807 = vrsqrt.pop %v3791
    %v3808 = vmul.f32 %v3791, %v3807
    %vm3809 = vcmp.eq.f32.partialorder %v3791, inf
    %v3810 = vsel %vm3809, %v3791, %v3808
    %vm3811 = vcmp.eq.f32.partialorder %v3791, 0.0
    %v3812 = vand.u32 %v3791, 2147483648
    %v3813 = vsel %vm3811, %v3812, %v3810
    %v3814 = vadd.f32 %v3806, 1e-06
    %v3815 = vadd.f32 %v3813, 1e-06
    %v3816 = vrcp.pop %v3814
    %v3817 = vmul.f32 %v3798, %v3816
    %v3818 = vrcp.pop %v3815
    %v3819 = vmul.f32 %v3799, %v3818
    %v3821 = vlaneseq
    %v3822 = vshrl.u32 %v3821, 7
    %v3823 = vsub.s32 0, %v3822
    %v3824 = vrot.slane %v3771, %v3823
    %v3826 = vadd.f32 %v3817, %v3824
    %v3827 = vadd.f32 %v3819, %v3824
    %3828 = vst.msk [vmem:[#allocation2] sm:$0xff] %vm58, %v3826
    %3829 = vst.msk [vmem:[#allocation2 + $0x8] sm:$0xff] %vm58, %v3827
    // Predicated region
    $region54: #{encoder_forward.1} parent=1 // pred_check
      _
    $region55: #{encoder_forward.1} parent=1 // pred_check_branch
      %3831 = sbr.rel (0) target = $region57
    $region56: #{encoder_forward.1} parent=1 // pred_region
      %s3833 = ssub.s32 256, 256
      %3834 = vsyncadd [#allocation3], %s3833
      %s3835 = sshll.u32 [#allocation2], 4
      %s3836 = int_to_ptr.vmem [resolvable:$true] %s3835
      %3841 = dma.vmem_to_hbm [thread:$0]  %s3836, 256, %s13, [#allocation3], 128, 128, 8
    $region57: #{encoder_forward.1} parent=1 // pred_fallthru
      _
    // Predicated region
    $region58: #{encoder_forward.1} parent=1 // pred_check
      _
    $region59: #{encoder_forward.1} parent=1 // pred_check_branch
      %3843 = sbr.rel (0) target = $region61
    $region60: #{encoder_forward.1} parent=1 // pred_region
      %3844 = dma.done [#allocation3], 256
    $region61: #{encoder_forward.1} parent=1 // pred_fallthru
      _
    %3845 = vsyncpa [#allocation3], 1

</llo_original>
